<compile_context>
chip_gen: v6e
topology: v6e:2x2x1
jax: 0.10.0
libtpu: 0.0.40
codegen_flags: <defaults>
</compile_context>

<pallas_src>
import functools
import numpy as np
import jax
import jax.numpy as jnp
from jax import lax
from jax.experimental import pallas as pl
from jax.experimental.pallas import tpu as pltpu

# ----------------------------- configuration --------------------------------
SEQ = 8          # sequence length (n_positions)
BATCH = 2        # batch size
VOCAB = 16       # input_dim (embedding vocab)
HIDDEN = 32      # hidden_dim
D_FF = 64        # d_ff
N_LAYERS = 2     # n_layers
NUM_HEADS = 4    # num_heads
OUT_DIM = 10     # output_dim
DK = HIDDEN // NUM_HEADS


# --------------------------- positional encoding ----------------------------
def get_positional_encoding(n_positions, n_dimensions):
    pos = np.arange(n_positions)[:, None].astype(np.float64)
    i = np.arange(n_dimensions)[None, :]
    angle_rates = 1.0 / np.power(10000, 2 * (i // 2) / np.float32(n_dimensions))
    angle_rads = pos * angle_rates
    angle_rads[:, 0::2] = np.sin(angle_rads[:, 0::2])
    angle_rads[:, 1::2] = np.cos(angle_rads[:, 1::2])
    return jnp.asarray(angle_rads, dtype=jnp.float32)


# ------------------------------ fused Pallas kernel -------------------------
def fused_encoder_kernel(tok_ref,                      # (B*S, 1) int32, batch-major rows
                         emb_ref, pe_ref, bd_ref,      # (V,H), (B*S,H), (NH*S, NH*S)
                         wqkv_ref, bqkv_ref,           # (L,H,3H), (L,1,3H)  [Wq pre-scaled]
                         wo_ref, bo_ref,               # (L,H,H), (L,1,H)
                         wup_ref, bup_ref,             # (L,H,F), (L,1,F)
                         wdn_ref, bdn_ref,             # (L,F,H), (L,1,H)
                         wout_ref, bout_ref,           # (H,O), (1,O)
                         o_ref,                        # (S, B*O)
                         *, n_layers, num_heads, dk, seq, batch, vocab):
    """Entire EncoderModel forward (all batch elements) in one program.

    Row layout is batch-major: row r = b*SEQ + s.  All weights are
    (in_features, out_features) and stacked over layers on the leading axis.
    """
    hidden = num_heads * dk
    rows = batch * seq

    # ---- embedding gather as a one-hot MXU matmul + positional encoding ----
    tok = tok_ref[...]                                            # (B*S, 1) i32
    onehot = (lax.broadcasted_iota(jnp.int32, (rows, vocab), 1) == tok
              ).astype(jnp.float32)                               # (B*S, V)
    x = (jnp.dot(onehot, emb_ref[...], preferred_element_type=jnp.float32)
         + pe_ref[...])                                           # (B*S, H)

    for l in range(n_layers):                                     # static unroll
        # ---- fused QKV projection (Wq already carries the 1/sqrt(dk) scale) --
        qkv = (jnp.dot(x, wqkv_ref[l], preferred_element_type=jnp.float32)
               + bqkv_ref[l])                                     # (B*S, 3H)
        q = qkv[:, 0:hidden]
        k = qkv[:, hidden:2 * hidden]
        v = qkv[:, 2 * hidden:3 * hidden]

        attn_rows = []
        for b in range(batch):                                    # static unroll
            rs = slice(b * seq, (b + 1) * seq)
            qb, kb, vb = q[rs], k[rs], v[rs]

            # per-head scores, lane-packed into one (S, NH*S) tile
            scores = jnp.concatenate(
                [lax.dot_general(qb[:, h * dk:(h + 1) * dk],
                                 kb[:, h * dk:(h + 1) * dk],
                                 (((1,), (1,)), ((), ())),
                                 preferred_element_type=jnp.float32)
                 for h in range(num_heads)], axis=-1)             # (S, NH*S)

            # softmax: row-global max shift is exact for every head's group,
            # per-head sums come from one matmul vs a block-diagonal ones mask.
            scores = scores - jnp.max(scores, axis=-1, keepdims=True)
            e = jnp.exp(scores)
            denom = jnp.dot(e, bd_ref[...],
                            preferred_element_type=jnp.float32)   # (S, NH*S)
            p = e / denom                                         # exact softmax

            # per-head PV, lane-concatenated back to (S, H)
            attn_rows.append(jnp.concatenate(
                [jnp.dot(p[:, h * seq:(h + 1) * seq],
                         vb[:, h * dk:(h + 1) * dk],
                         preferred_element_type=jnp.float32)
                 for h in range(num_heads)], axis=-1))
        attn = jnp.concatenate(attn_rows, axis=0)                 # (B*S, H)

        y = (jnp.dot(attn, wo_ref[l], preferred_element_type=jnp.float32)
             + bo_ref[l])

        # feed-forward (no residual / layernorm in the reference module)
        up = jnp.maximum(
            jnp.dot(y, wup_ref[l], preferred_element_type=jnp.float32)
            + bup_ref[l], 0.0)
        x = (jnp.dot(up, wdn_ref[l], preferred_element_type=jnp.float32)
             + bdn_ref[l])

    # ---- output linear, stored lane-dense as (S, B*O) -----------------------
    out = (jnp.dot(x, wout_ref[...], preferred_element_type=jnp.float32)
           + bout_ref[...])                                       # (B*S, O)
    o_ref[...] = jnp.concatenate(
        [out[b * seq:(b + 1) * seq, :] for b in range(batch)], axis=-1)


# ------------------------------ parameter packing ----------------------------
def prepare_params(params):
    """One-time packing of model parameters into the kernel layout.

    Run once outside the hot path; the jitted forward then only executes the
    fused pallas_call (plus a tiny token flatten / free output reshape)."""
    layers = params["layers"]
    scale = np.float32(1.0 / np.sqrt(DK))

    def stk(fn):
        return jnp.stack([fn(layers[i]) for i in range(N_LAYERS)])

    # block-diagonal ones mask: per-head softmax denominators via one matmul
    idx = np.arange(NUM_HEADS * SEQ)
    bd = (idx[:, None] // SEQ == idx[None, :] // SEQ).astype(np.float32)

    return dict(
        emb=params["embedding"],                                        # (V, H)
        pe=jnp.tile(get_positional_encoding(SEQ, HIDDEN), (BATCH, 1)),  # (B*S, H)
        bd=jnp.asarray(bd),                                             # (NH*S, NH*S)
        # fused QKV, (out,in)->(in,out); 1/sqrt(dk) folded into Wq / bq
        wqkv=stk(lambda l: jnp.concatenate(
            [l["wq"].T * scale, l["wk"].T, l["wv"].T], axis=1)),        # (L, H, 3H)
        bqkv=stk(lambda l: jnp.concatenate(
            [l["bq"] * scale, l["bk"], l["bv"]], axis=1)),              # (L, 1, 3H)
        wo=stk(lambda l: l["wo"].T), bo=stk(lambda l: l["bo"]),
        wup=stk(lambda l: l["wup"].T), bup=stk(lambda l: l["bup"]),
        wdn=stk(lambda l: l["wdn"].T), bdn=stk(lambda l: l["bdn"]),
        wout=params["w_out"].T,                                         # (H, O)
        bout=params["b_out"],                                           # (1, O)
    )


# ------------------------------ wrapper ---------------------------------------
def encoder_model_forward(tokens_sb, packed):
    """Full EncoderModel forward.  tokens_sb: (SEQ, BATCH) int32; `packed` from
    prepare_params().  Returns (SEQ, BATCH, OUT_DIM) float32."""
    # batch-major flatten: row r = b*SEQ + s
    tok_flat = tokens_sb.T.reshape(BATCH * SEQ, 1).astype(jnp.int32)

    tensor_args = [tok_flat, packed["emb"], packed["pe"], packed["bd"],
                   packed["wqkv"], packed["bqkv"], packed["wo"], packed["bo"],
                   packed["wup"], packed["bup"], packed["wdn"], packed["bdn"],
                   packed["wout"], packed["bout"]]

    kernel = functools.partial(fused_encoder_kernel, n_layers=N_LAYERS,
                               num_heads=NUM_HEADS, dk=DK, seq=SEQ,
                               batch=BATCH, vocab=VOCAB)

    out = pl.pallas_call(
        kernel,
        out_shape=jax.ShapeDtypeStruct((SEQ, BATCH * OUT_DIM), jnp.float32),
        grid=(1,),
        in_specs=[pl.BlockSpec(a.shape, lambda i, _nd=a.ndim: (0,) * _nd)
                  for a in tensor_args],
        out_specs=pl.BlockSpec((SEQ, BATCH * OUT_DIM), lambda i: (0, 0)),
        compiler_params=pltpu.CompilerParams(dimension_semantics=("arbitrary",)),
    )(*tensor_args)

    # contiguous row-major reshape: out[s, b*O+o] -> (s, b, o); no transpose.
    return out.reshape(SEQ, BATCH, OUT_DIM)


# ------------------------- deterministic parameters ---------------------------
def linear_params(key, out_f, in_f):
    k1, k2 = jax.random.split(key)
    bound = 1.0 / np.sqrt(in_f)
    w = jax.random.uniform(k1, (out_f, in_f), jnp.float32, -bound, bound)
    b = jax.random.uniform(k2, (1, out_f), jnp.float32, -bound, bound)
    return w, b


def make_params(key):
    keys = jax.random.split(key, 2 + N_LAYERS)
    params = {"embedding": jax.random.normal(keys[0], (VOCAB, HIDDEN), jnp.float32)}
    layers = []
    for li in range(N_LAYERS):
        lk = jax.random.split(keys[2 + li], 6)
        wq, bq = linear_params(lk[0], HIDDEN, HIDDEN)   # per-head rows stacked
        wk, bk = linear_params(lk[1], HIDDEN, HIDDEN)
        wv, bv = linear_params(lk[2], HIDDEN, HIDDEN)
        wo, bo = linear_params(lk[3], HIDDEN, HIDDEN)
        wup, bup = linear_params(lk[4], D_FF, HIDDEN)
        wdn, bdn = linear_params(lk[5], HIDDEN, D_FF)
        layers.append(dict(wq=wq, bq=bq, wk=wk, bk=bk, wv=wv, bv=bv,
                           wo=wo, bo=bo, wup=wup, bup=bup, wdn=wdn, bdn=bdn))
    params["layers"] = layers
    w_out, b_out = linear_params(keys[1], OUT_DIM, HIDDEN)
    params["w_out"], params["b_out"] = w_out, b_out
    return params


# ----------------------------- pure-JAX reference -----------------------------
def reference_forward(tokens_sb, params):
    hidden = params["embedding"][tokens_sb]                       # (S, B, H)
    pe = get_positional_encoding(SEQ, HIDDEN).reshape(SEQ, 1, HIDDEN)
    hidden = hidden + pe
    for lp in params["layers"]:
        q = jnp.einsum("sbh,oh->sbo", hidden, lp["wq"]) + lp["bq"][0]
        k = jnp.einsum("sbh,oh->sbo", hidden, lp["wk"]) + lp["bk"][0]
        v = jnp.einsum("sbh,oh->sbo", hidden, lp["wv"]) + lp["bv"][0]
        outs = []
        for h in range(NUM_HEADS):
            qh = q[..., h * DK:(h + 1) * DK]
            kh = k[..., h * DK:(h + 1) * DK]
            vh = v[..., h * DK:(h + 1) * DK]
            scores = jnp.einsum("ibk,jbk->bij", qh, kh) / np.sqrt(DK)
            p = jax.nn.softmax(scores, axis=2)
            outs.append(jnp.einsum("bik,kbj->ibj", p, vh))
        attn = jnp.concatenate(outs, axis=2)
        y = jnp.einsum("sbh,oh->sbo", attn, lp["wo"]) + lp["bo"][0]
        ff = jax.nn.relu(jnp.einsum("sbh,fh->sbf", y, lp["wup"]) + lp["bup"][0])
        hidden = jnp.einsum("sbf,hf->sbh", ff, lp["wdn"]) + lp["bdn"][0]
    return jnp.einsum("sbh,oh->sbo", hidden, params["w_out"]) + params["b_out"][0]


# ----------------------------------- main -------------------------------------
if __name__ == "__main__":
    key = jax.random.PRNGKey(0)
    k_tok, k_par = jax.random.split(key)
    tokens = jax.random.randint(k_tok, (SEQ, BATCH), 0, VOCAB, dtype=jnp.int32)
    params = make_params(k_par)

    packed = jax.tree_util.tree_map(jax.block_until_ready, prepare_params(params))

    fwd = jax.jit(encoder_model_forward)
    out = jax.block_until_ready(fwd(tokens, packed))

    ref = jax.block_until_ready(reference_forward(tokens, params))
    # exact softmax divide now; remaining slack only covers matmul-order /
    # MXU precision differences vs the XLA einsum reference.
    np.testing.assert_allclose(np.asarray(out), np.asarray(ref), rtol=1e-3, atol=1e-3)
    assert out.shape == (SEQ, BATCH, OUT_DIM)

    print("KERNEL_OK")
</pallas_src>

<mosaic_0001>
module attributes {stable_mosaic.version = 11 : i64} {
  func.func @fused_encoder_kernel(%arg0: i32, %arg1: memref<16x1xi32, #tpu.memory_space<vmem>>, %arg2: memref<16x32xf32, #tpu.memory_space<vmem>>, %arg3: memref<16x32xf32, #tpu.memory_space<vmem>>, %arg4: memref<32x32xf32, #tpu.memory_space<vmem>>, %arg5: memref<2x32x96xf32, #tpu.memory_space<vmem>>, %arg6: memref<2x1x96xf32, #tpu.memory_space<vmem>>, %arg7: memref<2x32x32xf32, #tpu.memory_space<vmem>>, %arg8: memref<2x1x32xf32, #tpu.memory_space<vmem>>, %arg9: memref<2x32x64xf32, #tpu.memory_space<vmem>>, %arg10: memref<2x1x64xf32, #tpu.memory_space<vmem>>, %arg11: memref<2x64x32xf32, #tpu.memory_space<vmem>>, %arg12: memref<2x1x32xf32, #tpu.memory_space<vmem>>, %arg13: memref<32x10xf32, #tpu.memory_space<vmem>>, %arg14: memref<1x10xf32, #tpu.memory_space<vmem>>, %arg15: memref<8x20xf32, #tpu.memory_space<vmem>>) attributes {dimension_semantics = [#tpu.dimension_semantics<arbitrary>], iteration_bounds = array<i64: 1>, scalar_prefetch = 0 : i64, scratch_operands = 0 : i64, tpu.core_type = #tpu.core_type<tc>, window_params = [{pipeline_mode = #tpu.pipeline_mode<synchronous>, transform_indices = @transform_0, window_bounds = array<i64: 16, 1>}, {pipeline_mode = #tpu.pipeline_mode<synchronous>, transform_indices = @transform_1, window_bounds = array<i64: 16, 32>}, {pipeline_mode = #tpu.pipeline_mode<synchronous>, transform_indices = @transform_2, window_bounds = array<i64: 16, 32>}, {pipeline_mode = #tpu.pipeline_mode<synchronous>, transform_indices = @transform_3, window_bounds = array<i64: 32, 32>}, {pipeline_mode = #tpu.pipeline_mode<synchronous>, transform_indices = @transform_4, window_bounds = array<i64: 2, 32, 96>}, {pipeline_mode = #tpu.pipeline_mode<synchronous>, transform_indices = @transform_5, window_bounds = array<i64: 2, 1, 96>}, {pipeline_mode = #tpu.pipeline_mode<synchronous>, transform_indices = @transform_6, window_bounds = array<i64: 2, 32, 32>}, {pipeline_mode = #tpu.pipeline_mode<synchronous>, transform_indices = @transform_7, window_bounds = array<i64: 2, 1, 32>}, {pipeline_mode = #tpu.pipeline_mode<synchronous>, transform_indices = @transform_8, window_bounds = array<i64: 2, 32, 64>}, {pipeline_mode = #tpu.pipeline_mode<synchronous>, transform_indices = @transform_9, window_bounds = array<i64: 2, 1, 64>}, {pipeline_mode = #tpu.pipeline_mode<synchronous>, transform_indices = @transform_10, window_bounds = array<i64: 2, 64, 32>}, {pipeline_mode = #tpu.pipeline_mode<synchronous>, transform_indices = @transform_11, window_bounds = array<i64: 2, 1, 32>}, {pipeline_mode = #tpu.pipeline_mode<synchronous>, transform_indices = @transform_12, window_bounds = array<i64: 32, 10>}, {pipeline_mode = #tpu.pipeline_mode<synchronous>, transform_indices = @transform_13, window_bounds = array<i64: 1, 10>}, {pipeline_mode = #tpu.pipeline_mode<synchronous>, transform_indices = @transform_14, window_bounds = array<i64: 8, 20>}]} {
    %c0 = arith.constant 0 : index
    %c0_0 = arith.constant 0 : index
    %0 = vector.load %arg1[%c0, %c0_0] : memref<16x1xi32, #tpu.memory_space<vmem>>, vector<16x1xi32>
    %1 = tpu.iota {dimensions = array<i32: 1>} : vector<16x16xi32>
    %2 = vector.broadcast %0 : vector<16x1xi32> to vector<16x16xi32>
    %3 = arith.cmpi eq, %1, %2 : vector<16x16xi32>
    %4 = arith.extui %3 : vector<16x16xi1> to vector<16x16xi32>
    %5 = arith.sitofp %4 : vector<16x16xi32> to vector<16x16xf32>
    %c0_1 = arith.constant 0 : index
    %c0_2 = arith.constant 0 : index
    %6 = vector.load %arg2[%c0_1, %c0_2] : memref<16x32xf32, #tpu.memory_space<vmem>>, vector<16x32xf32>
    %cst = arith.constant dense<0.000000e+00> : vector<16x32xf32>
    %7 = tpu.matmul %5, %6, %cst {dimension_numbers = #tpu.dot_dimension_numbers<[1], [0], [0], [1], [0, 0, 1, 1], [], []>} : vector<16x16xf32>, vector<16x32xf32>, vector<16x32xf32> -> vector<16x32xf32>
    %c0_3 = arith.constant 0 : index
    %c0_4 = arith.constant 0 : index
    %8 = vector.load %arg3[%c0_3, %c0_4] : memref<16x32xf32, #tpu.memory_space<vmem>>, vector<16x32xf32>
    %9 = arith.addf %7, %8 : vector<16x32xf32>
    %c0_5 = arith.constant 0 : index
    %c0_6 = arith.constant 0 : index
    %c0_7 = arith.constant 0 : index
    %10 = vector.load %arg5[%c0_5, %c0_6, %c0_7] : memref<2x32x96xf32, #tpu.memory_space<vmem>>, vector<1x32x96xf32>
    %11 = vector.shape_cast %10 : vector<1x32x96xf32> to vector<32x96xf32>
    %cst_8 = arith.constant dense<0.000000e+00> : vector<16x96xf32>
    %12 = tpu.matmul %9, %11, %cst_8 {dimension_numbers = #tpu.dot_dimension_numbers<[1], [0], [0], [1], [0, 0, 1, 1], [], []>} : vector<16x32xf32>, vector<32x96xf32>, vector<16x96xf32> -> vector<16x96xf32>
    %c0_9 = arith.constant 0 : index
    %c0_10 = arith.constant 0 : index
    %c0_11 = arith.constant 0 : index
    %13 = vector.load %arg6[%c0_9, %c0_10, %c0_11] : memref<2x1x96xf32, #tpu.memory_space<vmem>>, vector<1x1x96xf32>
    %14 = vector.shape_cast %13 : vector<1x1x96xf32> to vector<1x96xf32>
    %15 = vector.broadcast %14 : vector<1x96xf32> to vector<16x96xf32>
    %16 = arith.addf %12, %15 : vector<16x96xf32>
    %17 = vector.extract_strided_slice %16 {offsets = [0, 0], sizes = [16, 32], strides = [1, 1]} : vector<16x96xf32> to vector<16x32xf32>
    %18 = vector.extract_strided_slice %16 {offsets = [0, 32], sizes = [16, 32], strides = [1, 1]} : vector<16x96xf32> to vector<16x32xf32>
    %19 = vector.extract_strided_slice %16 {offsets = [0, 64], sizes = [16, 32], strides = [1, 1]} : vector<16x96xf32> to vector<16x32xf32>
    %20 = vector.extract_strided_slice %17 {offsets = [0, 0], sizes = [8, 32], strides = [1, 1]} : vector<16x32xf32> to vector<8x32xf32>
    %21 = vector.extract_strided_slice %18 {offsets = [0, 0], sizes = [8, 32], strides = [1, 1]} : vector<16x32xf32> to vector<8x32xf32>
    %22 = vector.extract_strided_slice %19 {offsets = [0, 0], sizes = [8, 32], strides = [1, 1]} : vector<16x32xf32> to vector<8x32xf32>
    %23 = vector.extract_strided_slice %20 {offsets = [0, 0], sizes = [8, 8], strides = [1, 1]} : vector<8x32xf32> to vector<8x8xf32>
    %24 = vector.extract_strided_slice %21 {offsets = [0, 0], sizes = [8, 8], strides = [1, 1]} : vector<8x32xf32> to vector<8x8xf32>
    %cst_12 = arith.constant dense<0.000000e+00> : vector<8x8xf32>
    %25 = tpu.matmul %23, %24, %cst_12 {dimension_numbers = #tpu.dot_dimension_numbers<[1], [1], [0], [0], [0, 0, 1, 0], [], []>} : vector<8x8xf32>, vector<8x8xf32>, vector<8x8xf32> -> vector<8x8xf32>
    %26 = vector.extract_strided_slice %20 {offsets = [0, 8], sizes = [8, 8], strides = [1, 1]} : vector<8x32xf32> to vector<8x8xf32>
    %27 = vector.extract_strided_slice %21 {offsets = [0, 8], sizes = [8, 8], strides = [1, 1]} : vector<8x32xf32> to vector<8x8xf32>
    %cst_13 = arith.constant dense<0.000000e+00> : vector<8x8xf32>
    %28 = tpu.matmul %26, %27, %cst_13 {dimension_numbers = #tpu.dot_dimension_numbers<[1], [1], [0], [0], [0, 0, 1, 0], [], []>} : vector<8x8xf32>, vector<8x8xf32>, vector<8x8xf32> -> vector<8x8xf32>
    %29 = vector.extract_strided_slice %20 {offsets = [0, 16], sizes = [8, 8], strides = [1, 1]} : vector<8x32xf32> to vector<8x8xf32>
    %30 = vector.extract_strided_slice %21 {offsets = [0, 16], sizes = [8, 8], strides = [1, 1]} : vector<8x32xf32> to vector<8x8xf32>
    %cst_14 = arith.constant dense<0.000000e+00> : vector<8x8xf32>
    %31 = tpu.matmul %29, %30, %cst_14 {dimension_numbers = #tpu.dot_dimension_numbers<[1], [1], [0], [0], [0, 0, 1, 0], [], []>} : vector<8x8xf32>, vector<8x8xf32>, vector<8x8xf32> -> vector<8x8xf32>
    %32 = vector.extract_strided_slice %20 {offsets = [0, 24], sizes = [8, 8], strides = [1, 1]} : vector<8x32xf32> to vector<8x8xf32>
    %33 = vector.extract_strided_slice %21 {offsets = [0, 24], sizes = [8, 8], strides = [1, 1]} : vector<8x32xf32> to vector<8x8xf32>
    %cst_15 = arith.constant dense<0.000000e+00> : vector<8x8xf32>
    %34 = tpu.matmul %32, %33, %cst_15 {dimension_numbers = #tpu.dot_dimension_numbers<[1], [1], [0], [0], [0, 0, 1, 0], [], []>} : vector<8x8xf32>, vector<8x8xf32>, vector<8x8xf32> -> vector<8x8xf32>
    %35 = tpu.concatenate %25, %28, %31, %34 in 1 : vector<8x8xf32>, vector<8x8xf32>, vector<8x8xf32>, vector<8x8xf32> -> vector<8x32xf32>
    %cst_16 = arith.constant dense<0xFF800000> : vector<8xf32>
    %36 = vector.multi_reduction <maximumf>, %35, %cst_16 [1] : vector<8x32xf32> to vector<8xf32>
    %37 = vector.shape_cast %36 : vector<8xf32> to vector<8x1xf32>
    %38 = vector.broadcast %37 : vector<8x1xf32> to vector<8x32xf32>
    %39 = arith.subf %35, %38 : vector<8x32xf32>
    %40 = math.exp %39 : vector<8x32xf32>
    %c0_17 = arith.constant 0 : index
    %c0_18 = arith.constant 0 : index
    %41 = vector.load %arg4[%c0_17, %c0_18] : memref<32x32xf32, #tpu.memory_space<vmem>>, vector<32x32xf32>
    %cst_19 = arith.constant dense<0.000000e+00> : vector<8x32xf32>
    %42 = tpu.matmul %40, %41, %cst_19 {dimension_numbers = #tpu.dot_dimension_numbers<[1], [0], [0], [1], [0, 0, 1, 1], [], []>} : vector<8x32xf32>, vector<32x32xf32>, vector<8x32xf32> -> vector<8x32xf32>
    %43 = arith.divf %40, %42 : vector<8x32xf32>
    %44 = vector.extract_strided_slice %43 {offsets = [0, 0], sizes = [8, 8], strides = [1, 1]} : vector<8x32xf32> to vector<8x8xf32>
    %45 = vector.extract_strided_slice %22 {offsets = [0, 0], sizes = [8, 8], strides = [1, 1]} : vector<8x32xf32> to vector<8x8xf32>
    %cst_20 = arith.constant dense<0.000000e+00> : vector<8x8xf32>
    %46 = tpu.matmul %44, %45, %cst_20 {dimension_numbers = #tpu.dot_dimension_numbers<[1], [0], [0], [1], [0, 0, 1, 1], [], []>} : vector<8x8xf32>, vector<8x8xf32>, vector<8x8xf32> -> vector<8x8xf32>
    %47 = vector.extract_strided_slice %43 {offsets = [0, 8], sizes = [8, 8], strides = [1, 1]} : vector<8x32xf32> to vector<8x8xf32>
    %48 = vector.extract_strided_slice %22 {offsets = [0, 8], sizes = [8, 8], strides = [1, 1]} : vector<8x32xf32> to vector<8x8xf32>
    %cst_21 = arith.constant dense<0.000000e+00> : vector<8x8xf32>
    %49 = tpu.matmul %47, %48, %cst_21 {dimension_numbers = #tpu.dot_dimension_numbers<[1], [0], [0], [1], [0, 0, 1, 1], [], []>} : vector<8x8xf32>, vector<8x8xf32>, vector<8x8xf32> -> vector<8x8xf32>
    %50 = vector.extract_strided_slice %43 {offsets = [0, 16], sizes = [8, 8], strides = [1, 1]} : vector<8x32xf32> to vector<8x8xf32>
    %51 = vector.extract_strided_slice %22 {offsets = [0, 16], sizes = [8, 8], strides = [1, 1]} : vector<8x32xf32> to vector<8x8xf32>
    %cst_22 = arith.constant dense<0.000000e+00> : vector<8x8xf32>
    %52 = tpu.matmul %50, %51, %cst_22 {dimension_numbers = #tpu.dot_dimension_numbers<[1], [0], [0], [1], [0, 0, 1, 1], [], []>} : vector<8x8xf32>, vector<8x8xf32>, vector<8x8xf32> -> vector<8x8xf32>
    %53 = vector.extract_strided_slice %43 {offsets = [0, 24], sizes = [8, 8], strides = [1, 1]} : vector<8x32xf32> to vector<8x8xf32>
    %54 = vector.extract_strided_slice %22 {offsets = [0, 24], sizes = [8, 8], strides = [1, 1]} : vector<8x32xf32> to vector<8x8xf32>
    %cst_23 = arith.constant dense<0.000000e+00> : vector<8x8xf32>
    %55 = tpu.matmul %53, %54, %cst_23 {dimension_numbers = #tpu.dot_dimension_numbers<[1], [0], [0], [1], [0, 0, 1, 1], [], []>} : vector<8x8xf32>, vector<8x8xf32>, vector<8x8xf32> -> vector<8x8xf32>
    %56 = tpu.concatenate %46, %49, %52, %55 in 1 : vector<8x8xf32>, vector<8x8xf32>, vector<8x8xf32>, vector<8x8xf32> -> vector<8x32xf32>
    %57 = vector.extract_strided_slice %17 {offsets = [8, 0], sizes = [8, 32], strides = [1, 1]} : vector<16x32xf32> to vector<8x32xf32>
    %58 = vector.extract_strided_slice %18 {offsets = [8, 0], sizes = [8, 32], strides = [1, 1]} : vector<16x32xf32> to vector<8x32xf32>
    %59 = vector.extract_strided_slice %19 {offsets = [8, 0], sizes = [8, 32], strides = [1, 1]} : vector<16x32xf32> to vector<8x32xf32>
    %60 = vector.extract_strided_slice %57 {offsets = [0, 0], sizes = [8, 8], strides = [1, 1]} : vector<8x32xf32> to vector<8x8xf32>
    %61 = vector.extract_strided_slice %58 {offsets = [0, 0], sizes = [8, 8], strides = [1, 1]} : vector<8x32xf32> to vector<8x8xf32>
    %cst_24 = arith.constant dense<0.000000e+00> : vector<8x8xf32>
    %62 = tpu.matmul %60, %61, %cst_24 {dimension_numbers = #tpu.dot_dimension_numbers<[1], [1], [0], [0], [0, 0, 1, 0], [], []>} : vector<8x8xf32>, vector<8x8xf32>, vector<8x8xf32> -> vector<8x8xf32>
    %63 = vector.extract_strided_slice %57 {offsets = [0, 8], sizes = [8, 8], strides = [1, 1]} : vector<8x32xf32> to vector<8x8xf32>
    %64 = vector.extract_strided_slice %58 {offsets = [0, 8], sizes = [8, 8], strides = [1, 1]} : vector<8x32xf32> to vector<8x8xf32>
    %cst_25 = arith.constant dense<0.000000e+00> : vector<8x8xf32>
    %65 = tpu.matmul %63, %64, %cst_25 {dimension_numbers = #tpu.dot_dimension_numbers<[1], [1], [0], [0], [0, 0, 1, 0], [], []>} : vector<8x8xf32>, vector<8x8xf32>, vector<8x8xf32> -> vector<8x8xf32>
    %66 = vector.extract_strided_slice %57 {offsets = [0, 16], sizes = [8, 8], strides = [1, 1]} : vector<8x32xf32> to vector<8x8xf32>
    %67 = vector.extract_strided_slice %58 {offsets = [0, 16], sizes = [8, 8], strides = [1, 1]} : vector<8x32xf32> to vector<8x8xf32>
    %cst_26 = arith.constant dense<0.000000e+00> : vector<8x8xf32>
    %68 = tpu.matmul %66, %67, %cst_26 {dimension_numbers = #tpu.dot_dimension_numbers<[1], [1], [0], [0], [0, 0, 1, 0], [], []>} : vector<8x8xf32>, vector<8x8xf32>, vector<8x8xf32> -> vector<8x8xf32>
    %69 = vector.extract_strided_slice %57 {offsets = [0, 24], sizes = [8, 8], strides = [1, 1]} : vector<8x32xf32> to vector<8x8xf32>
    %70 = vector.extract_strided_slice %58 {offsets = [0, 24], sizes = [8, 8], strides = [1, 1]} : vector<8x32xf32> to vector<8x8xf32>
    %cst_27 = arith.constant dense<0.000000e+00> : vector<8x8xf32>
    %71 = tpu.matmul %69, %70, %cst_27 {dimension_numbers = #tpu.dot_dimension_numbers<[1], [1], [0], [0], [0, 0, 1, 0], [], []>} : vector<8x8xf32>, vector<8x8xf32>, vector<8x8xf32> -> vector<8x8xf32>
    %72 = tpu.concatenate %62, %65, %68, %71 in 1 : vector<8x8xf32>, vector<8x8xf32>, vector<8x8xf32>, vector<8x8xf32> -> vector<8x32xf32>
    %cst_28 = arith.constant dense<0xFF800000> : vector<8xf32>
    %73 = vector.multi_reduction <maximumf>, %72, %cst_28 [1] : vector<8x32xf32> to vector<8xf32>
    %74 = vector.shape_cast %73 : vector<8xf32> to vector<8x1xf32>
    %75 = vector.broadcast %74 : vector<8x1xf32> to vector<8x32xf32>
    %76 = arith.subf %72, %75 : vector<8x32xf32>
    %77 = math.exp %76 : vector<8x32xf32>
    %c0_29 = arith.constant 0 : index
    %c0_30 = arith.constant 0 : index
    %78 = vector.load %arg4[%c0_29, %c0_30] : memref<32x32xf32, #tpu.memory_space<vmem>>, vector<32x32xf32>
    %cst_31 = arith.constant dense<0.000000e+00> : vector<8x32xf32>
    %79 = tpu.matmul %77, %78, %cst_31 {dimension_numbers = #tpu.dot_dimension_numbers<[1], [0], [0], [1], [0, 0, 1, 1], [], []>} : vector<8x32xf32>, vector<32x32xf32>, vector<8x32xf32> -> vector<8x32xf32>
    %80 = arith.divf %77, %79 : vector<8x32xf32>
    %81 = vector.extract_strided_slice %80 {offsets = [0, 0], sizes = [8, 8], strides = [1, 1]} : vector<8x32xf32> to vector<8x8xf32>
    %82 = vector.extract_strided_slice %59 {offsets = [0, 0], sizes = [8, 8], strides = [1, 1]} : vector<8x32xf32> to vector<8x8xf32>
    %cst_32 = arith.constant dense<0.000000e+00> : vector<8x8xf32>
    %83 = tpu.matmul %81, %82, %cst_32 {dimension_numbers = #tpu.dot_dimension_numbers<[1], [0], [0], [1], [0, 0, 1, 1], [], []>} : vector<8x8xf32>, vector<8x8xf32>, vector<8x8xf32> -> vector<8x8xf32>
    %84 = vector.extract_strided_slice %80 {offsets = [0, 8], sizes = [8, 8], strides = [1, 1]} : vector<8x32xf32> to vector<8x8xf32>
    %85 = vector.extract_strided_slice %59 {offsets = [0, 8], sizes = [8, 8], strides = [1, 1]} : vector<8x32xf32> to vector<8x8xf32>
    %cst_33 = arith.constant dense<0.000000e+00> : vector<8x8xf32>
    %86 = tpu.matmul %84, %85, %cst_33 {dimension_numbers = #tpu.dot_dimension_numbers<[1], [0], [0], [1], [0, 0, 1, 1], [], []>} : vector<8x8xf32>, vector<8x8xf32>, vector<8x8xf32> -> vector<8x8xf32>
    %87 = vector.extract_strided_slice %80 {offsets = [0, 16], sizes = [8, 8], strides = [1, 1]} : vector<8x32xf32> to vector<8x8xf32>
    %88 = vector.extract_strided_slice %59 {offsets = [0, 16], sizes = [8, 8], strides = [1, 1]} : vector<8x32xf32> to vector<8x8xf32>
    %cst_34 = arith.constant dense<0.000000e+00> : vector<8x8xf32>
    %89 = tpu.matmul %87, %88, %cst_34 {dimension_numbers = #tpu.dot_dimension_numbers<[1], [0], [0], [1], [0, 0, 1, 1], [], []>} : vector<8x8xf32>, vector<8x8xf32>, vector<8x8xf32> -> vector<8x8xf32>
    %90 = vector.extract_strided_slice %80 {offsets = [0, 24], sizes = [8, 8], strides = [1, 1]} : vector<8x32xf32> to vector<8x8xf32>
    %91 = vector.extract_strided_slice %59 {offsets = [0, 24], sizes = [8, 8], strides = [1, 1]} : vector<8x32xf32> to vector<8x8xf32>
    %cst_35 = arith.constant dense<0.000000e+00> : vector<8x8xf32>
    %92 = tpu.matmul %90, %91, %cst_35 {dimension_numbers = #tpu.dot_dimension_numbers<[1], [0], [0], [1], [0, 0, 1, 1], [], []>} : vector<8x8xf32>, vector<8x8xf32>, vector<8x8xf32> -> vector<8x8xf32>
    %93 = tpu.concatenate %83, %86, %89, %92 in 1 : vector<8x8xf32>, vector<8x8xf32>, vector<8x8xf32>, vector<8x8xf32> -> vector<8x32xf32>
    %94 = tpu.concatenate %56, %93 in 0 : vector<8x32xf32>, vector<8x32xf32> -> vector<16x32xf32>
    %c0_36 = arith.constant 0 : index
    %c0_37 = arith.constant 0 : index
    %c0_38 = arith.constant 0 : index
    %95 = vector.load %arg7[%c0_36, %c0_37, %c0_38] : memref<2x32x32xf32, #tpu.memory_space<vmem>>, vector<1x32x32xf32>
    %96 = vector.shape_cast %95 : vector<1x32x32xf32> to vector<32x32xf32>
    %cst_39 = arith.constant dense<0.000000e+00> : vector<16x32xf32>
    %97 = tpu.matmul %94, %96, %cst_39 {dimension_numbers = #tpu.dot_dimension_numbers<[1], [0], [0], [1], [0, 0, 1, 1], [], []>} : vector<16x32xf32>, vector<32x32xf32>, vector<16x32xf32> -> vector<16x32xf32>
    %c0_40 = arith.constant 0 : index
    %c0_41 = arith.constant 0 : index
    %c0_42 = arith.constant 0 : index
    %98 = vector.load %arg8[%c0_40, %c0_41, %c0_42] : memref<2x1x32xf32, #tpu.memory_space<vmem>>, vector<1x1x32xf32>
    %99 = vector.shape_cast %98 : vector<1x1x32xf32> to vector<1x32xf32>
    %100 = vector.broadcast %99 : vector<1x32xf32> to vector<16x32xf32>
    %101 = arith.addf %97, %100 : vector<16x32xf32>
    %c0_43 = arith.constant 0 : index
    %c0_44 = arith.constant 0 : index
    %c0_45 = arith.constant 0 : index
    %102 = vector.load %arg9[%c0_43, %c0_44, %c0_45] : memref<2x32x64xf32, #tpu.memory_space<vmem>>, vector<1x32x64xf32>
    %103 = vector.shape_cast %102 : vector<1x32x64xf32> to vector<32x64xf32>
    %cst_46 = arith.constant dense<0.000000e+00> : vector<16x64xf32>
    %104 = tpu.matmul %101, %103, %cst_46 {dimension_numbers = #tpu.dot_dimension_numbers<[1], [0], [0], [1], [0, 0, 1, 1], [], []>} : vector<16x32xf32>, vector<32x64xf32>, vector<16x64xf32> -> vector<16x64xf32>
    %c0_47 = arith.constant 0 : index
    %c0_48 = arith.constant 0 : index
    %c0_49 = arith.constant 0 : index
    %105 = vector.load %arg10[%c0_47, %c0_48, %c0_49] : memref<2x1x64xf32, #tpu.memory_space<vmem>>, vector<1x1x64xf32>
    %106 = vector.shape_cast %105 : vector<1x1x64xf32> to vector<1x64xf32>
    %107 = vector.broadcast %106 : vector<1x64xf32> to vector<16x64xf32>
    %108 = arith.addf %104, %107 : vector<16x64xf32>
    %cst_50 = arith.constant 0.000000e+00 : f32
    %109 = vector.broadcast %cst_50 : f32 to vector<16x64xf32>
    %110 = arith.maximumf %108, %109 : vector<16x64xf32>
    %c0_51 = arith.constant 0 : index
    %c0_52 = arith.constant 0 : index
    %c0_53 = arith.constant 0 : index
    %111 = vector.load %arg11[%c0_51, %c0_52, %c0_53] : memref<2x64x32xf32, #tpu.memory_space<vmem>>, vector<1x64x32xf32>
    %112 = vector.shape_cast %111 : vector<1x64x32xf32> to vector<64x32xf32>
    %cst_54 = arith.constant dense<0.000000e+00> : vector<16x32xf32>
    %113 = tpu.matmul %110, %112, %cst_54 {dimension_numbers = #tpu.dot_dimension_numbers<[1], [0], [0], [1], [0, 0, 1, 1], [], []>} : vector<16x64xf32>, vector<64x32xf32>, vector<16x32xf32> -> vector<16x32xf32>
    %c0_55 = arith.constant 0 : index
    %c0_56 = arith.constant 0 : index
    %c0_57 = arith.constant 0 : index
    %114 = vector.load %arg12[%c0_55, %c0_56, %c0_57] : memref<2x1x32xf32, #tpu.memory_space<vmem>>, vector<1x1x32xf32>
    %115 = vector.shape_cast %114 : vector<1x1x32xf32> to vector<1x32xf32>
    %116 = vector.broadcast %115 : vector<1x32xf32> to vector<16x32xf32>
    %117 = arith.addf %113, %116 : vector<16x32xf32>
    %c1 = arith.constant 1 : index
    %c0_58 = arith.constant 0 : index
    %c0_59 = arith.constant 0 : index
    %118 = vector.load %arg5[%c1, %c0_58, %c0_59] : memref<2x32x96xf32, #tpu.memory_space<vmem>>, vector<1x32x96xf32>
    %119 = vector.shape_cast %118 : vector<1x32x96xf32> to vector<32x96xf32>
    %cst_60 = arith.constant dense<0.000000e+00> : vector<16x96xf32>
    %120 = tpu.matmul %117, %119, %cst_60 {dimension_numbers = #tpu.dot_dimension_numbers<[1], [0], [0], [1], [0, 0, 1, 1], [], []>} : vector<16x32xf32>, vector<32x96xf32>, vector<16x96xf32> -> vector<16x96xf32>
    %c1_61 = arith.constant 1 : index
    %c0_62 = arith.constant 0 : index
    %c0_63 = arith.constant 0 : index
    %121 = vector.load %arg6[%c1_61, %c0_62, %c0_63] : memref<2x1x96xf32, #tpu.memory_space<vmem>>, vector<1x1x96xf32>
    %122 = vector.shape_cast %121 : vector<1x1x96xf32> to vector<1x96xf32>
    %123 = vector.broadcast %122 : vector<1x96xf32> to vector<16x96xf32>
    %124 = arith.addf %120, %123 : vector<16x96xf32>
    %125 = vector.extract_strided_slice %124 {offsets = [0, 0], sizes = [16, 32], strides = [1, 1]} : vector<16x96xf32> to vector<16x32xf32>
    %126 = vector.extract_strided_slice %124 {offsets = [0, 32], sizes = [16, 32], strides = [1, 1]} : vector<16x96xf32> to vector<16x32xf32>
    %127 = vector.extract_strided_slice %124 {offsets = [0, 64], sizes = [16, 32], strides = [1, 1]} : vector<16x96xf32> to vector<16x32xf32>
    %128 = vector.extract_strided_slice %125 {offsets = [0, 0], sizes = [8, 32], strides = [1, 1]} : vector<16x32xf32> to vector<8x32xf32>
    %129 = vector.extract_strided_slice %126 {offsets = [0, 0], sizes = [8, 32], strides = [1, 1]} : vector<16x32xf32> to vector<8x32xf32>
    %130 = vector.extract_strided_slice %127 {offsets = [0, 0], sizes = [8, 32], strides = [1, 1]} : vector<16x32xf32> to vector<8x32xf32>
    %131 = vector.extract_strided_slice %128 {offsets = [0, 0], sizes = [8, 8], strides = [1, 1]} : vector<8x32xf32> to vector<8x8xf32>
    %132 = vector.extract_strided_slice %129 {offsets = [0, 0], sizes = [8, 8], strides = [1, 1]} : vector<8x32xf32> to vector<8x8xf32>
    %cst_64 = arith.constant dense<0.000000e+00> : vector<8x8xf32>
    %133 = tpu.matmul %131, %132, %cst_64 {dimension_numbers = #tpu.dot_dimension_numbers<[1], [1], [0], [0], [0, 0, 1, 0], [], []>} : vector<8x8xf32>, vector<8x8xf32>, vector<8x8xf32> -> vector<8x8xf32>
    %134 = vector.extract_strided_slice %128 {offsets = [0, 8], sizes = [8, 8], strides = [1, 1]} : vector<8x32xf32> to vector<8x8xf32>
    %135 = vector.extract_strided_slice %129 {offsets = [0, 8], sizes = [8, 8], strides = [1, 1]} : vector<8x32xf32> to vector<8x8xf32>
    %cst_65 = arith.constant dense<0.000000e+00> : vector<8x8xf32>
    %136 = tpu.matmul %134, %135, %cst_65 {dimension_numbers = #tpu.dot_dimension_numbers<[1], [1], [0], [0], [0, 0, 1, 0], [], []>} : vector<8x8xf32>, vector<8x8xf32>, vector<8x8xf32> -> vector<8x8xf32>
    %137 = vector.extract_strided_slice %128 {offsets = [0, 16], sizes = [8, 8], strides = [1, 1]} : vector<8x32xf32> to vector<8x8xf32>
    %138 = vector.extract_strided_slice %129 {offsets = [0, 16], sizes = [8, 8], strides = [1, 1]} : vector<8x32xf32> to vector<8x8xf32>
    %cst_66 = arith.constant dense<0.000000e+00> : vector<8x8xf32>
    %139 = tpu.matmul %137, %138, %cst_66 {dimension_numbers = #tpu.dot_dimension_numbers<[1], [1], [0], [0], [0, 0, 1, 0], [], []>} : vector<8x8xf32>, vector<8x8xf32>, vector<8x8xf32> -> vector<8x8xf32>
    %140 = vector.extract_strided_slice %128 {offsets = [0, 24], sizes = [8, 8], strides = [1, 1]} : vector<8x32xf32> to vector<8x8xf32>
    %141 = vector.extract_strided_slice %129 {offsets = [0, 24], sizes = [8, 8], strides = [1, 1]} : vector<8x32xf32> to vector<8x8xf32>
    %cst_67 = arith.constant dense<0.000000e+00> : vector<8x8xf32>
    %142 = tpu.matmul %140, %141, %cst_67 {dimension_numbers = #tpu.dot_dimension_numbers<[1], [1], [0], [0], [0, 0, 1, 0], [], []>} : vector<8x8xf32>, vector<8x8xf32>, vector<8x8xf32> -> vector<8x8xf32>
    %143 = tpu.concatenate %133, %136, %139, %142 in 1 : vector<8x8xf32>, vector<8x8xf32>, vector<8x8xf32>, vector<8x8xf32> -> vector<8x32xf32>
    %cst_68 = arith.constant dense<0xFF800000> : vector<8xf32>
    %144 = vector.multi_reduction <maximumf>, %143, %cst_68 [1] : vector<8x32xf32> to vector<8xf32>
    %145 = vector.shape_cast %144 : vector<8xf32> to vector<8x1xf32>
    %146 = vector.broadcast %145 : vector<8x1xf32> to vector<8x32xf32>
    %147 = arith.subf %143, %146 : vector<8x32xf32>
    %148 = math.exp %147 : vector<8x32xf32>
    %c0_69 = arith.constant 0 : index
    %c0_70 = arith.constant 0 : index
    %149 = vector.load %arg4[%c0_69, %c0_70] : memref<32x32xf32, #tpu.memory_space<vmem>>, vector<32x32xf32>
    %cst_71 = arith.constant dense<0.000000e+00> : vector<8x32xf32>
    %150 = tpu.matmul %148, %149, %cst_71 {dimension_numbers = #tpu.dot_dimension_numbers<[1], [0], [0], [1], [0, 0, 1, 1], [], []>} : vector<8x32xf32>, vector<32x32xf32>, vector<8x32xf32> -> vector<8x32xf32>
    %151 = arith.divf %148, %150 : vector<8x32xf32>
    %152 = vector.extract_strided_slice %151 {offsets = [0, 0], sizes = [8, 8], strides = [1, 1]} : vector<8x32xf32> to vector<8x8xf32>
    %153 = vector.extract_strided_slice %130 {offsets = [0, 0], sizes = [8, 8], strides = [1, 1]} : vector<8x32xf32> to vector<8x8xf32>
    %cst_72 = arith.constant dense<0.000000e+00> : vector<8x8xf32>
    %154 = tpu.matmul %152, %153, %cst_72 {dimension_numbers = #tpu.dot_dimension_numbers<[1], [0], [0], [1], [0, 0, 1, 1], [], []>} : vector<8x8xf32>, vector<8x8xf32>, vector<8x8xf32> -> vector<8x8xf32>
    %155 = vector.extract_strided_slice %151 {offsets = [0, 8], sizes = [8, 8], strides = [1, 1]} : vector<8x32xf32> to vector<8x8xf32>
    %156 = vector.extract_strided_slice %130 {offsets = [0, 8], sizes = [8, 8], strides = [1, 1]} : vector<8x32xf32> to vector<8x8xf32>
    %cst_73 = arith.constant dense<0.000000e+00> : vector<8x8xf32>
    %157 = tpu.matmul %155, %156, %cst_73 {dimension_numbers = #tpu.dot_dimension_numbers<[1], [0], [0], [1], [0, 0, 1, 1], [], []>} : vector<8x8xf32>, vector<8x8xf32>, vector<8x8xf32> -> vector<8x8xf32>
    %158 = vector.extract_strided_slice %151 {offsets = [0, 16], sizes = [8, 8], strides = [1, 1]} : vector<8x32xf32> to vector<8x8xf32>
    %159 = vector.extract_strided_slice %130 {offsets = [0, 16], sizes = [8, 8], strides = [1, 1]} : vector<8x32xf32> to vector<8x8xf32>
    %cst_74 = arith.constant dense<0.000000e+00> : vector<8x8xf32>
    %160 = tpu.matmul %158, %159, %cst_74 {dimension_numbers = #tpu.dot_dimension_numbers<[1], [0], [0], [1], [0, 0, 1, 1], [], []>} : vector<8x8xf32>, vector<8x8xf32>, vector<8x8xf32> -> vector<8x8xf32>
    %161 = vector.extract_strided_slice %151 {offsets = [0, 24], sizes = [8, 8], strides = [1, 1]} : vector<8x32xf32> to vector<8x8xf32>
    %162 = vector.extract_strided_slice %130 {offsets = [0, 24], sizes = [8, 8], strides = [1, 1]} : vector<8x32xf32> to vector<8x8xf32>
    %cst_75 = arith.constant dense<0.000000e+00> : vector<8x8xf32>
    %163 = tpu.matmul %161, %162, %cst_75 {dimension_numbers = #tpu.dot_dimension_numbers<[1], [0], [0], [1], [0, 0, 1, 1], [], []>} : vector<8x8xf32>, vector<8x8xf32>, vector<8x8xf32> -> vector<8x8xf32>
    %164 = tpu.concatenate %154, %157, %160, %163 in 1 : vector<8x8xf32>, vector<8x8xf32>, vector<8x8xf32>, vector<8x8xf32> -> vector<8x32xf32>
    %165 = vector.extract_strided_slice %125 {offsets = [8, 0], sizes = [8, 32], strides = [1, 1]} : vector<16x32xf32> to vector<8x32xf32>
    %166 = vector.extract_strided_slice %126 {offsets = [8, 0], sizes = [8, 32], strides = [1, 1]} : vector<16x32xf32> to vector<8x32xf32>
    %167 = vector.extract_strided_slice %127 {offsets = [8, 0], sizes = [8, 32], strides = [1, 1]} : vector<16x32xf32> to vector<8x32xf32>
    %168 = vector.extract_strided_slice %165 {offsets = [0, 0], sizes = [8, 8], strides = [1, 1]} : vector<8x32xf32> to vector<8x8xf32>
    %169 = vector.extract_strided_slice %166 {offsets = [0, 0], sizes = [8, 8], strides = [1, 1]} : vector<8x32xf32> to vector<8x8xf32>
    %cst_76 = arith.constant dense<0.000000e+00> : vector<8x8xf32>
    %170 = tpu.matmul %168, %169, %cst_76 {dimension_numbers = #tpu.dot_dimension_numbers<[1], [1], [0], [0], [0, 0, 1, 0], [], []>} : vector<8x8xf32>, vector<8x8xf32>, vector<8x8xf32> -> vector<8x8xf32>
    %171 = vector.extract_strided_slice %165 {offsets = [0, 8], sizes = [8, 8], strides = [1, 1]} : vector<8x32xf32> to vector<8x8xf32>
    %172 = vector.extract_strided_slice %166 {offsets = [0, 8], sizes = [8, 8], strides = [1, 1]} : vector<8x32xf32> to vector<8x8xf32>
    %cst_77 = arith.constant dense<0.000000e+00> : vector<8x8xf32>
    %173 = tpu.matmul %171, %172, %cst_77 {dimension_numbers = #tpu.dot_dimension_numbers<[1], [1], [0], [0], [0, 0, 1, 0], [], []>} : vector<8x8xf32>, vector<8x8xf32>, vector<8x8xf32> -> vector<8x8xf32>
    %174 = vector.extract_strided_slice %165 {offsets = [0, 16], sizes = [8, 8], strides = [1, 1]} : vector<8x32xf32> to vector<8x8xf32>
    %175 = vector.extract_strided_slice %166 {offsets = [0, 16], sizes = [8, 8], strides = [1, 1]} : vector<8x32xf32> to vector<8x8xf32>
    %cst_78 = arith.constant dense<0.000000e+00> : vector<8x8xf32>
    %176 = tpu.matmul %174, %175, %cst_78 {dimension_numbers = #tpu.dot_dimension_numbers<[1], [1], [0], [0], [0, 0, 1, 0], [], []>} : vector<8x8xf32>, vector<8x8xf32>, vector<8x8xf32> -> vector<8x8xf32>
    %177 = vector.extract_strided_slice %165 {offsets = [0, 24], sizes = [8, 8], strides = [1, 1]} : vector<8x32xf32> to vector<8x8xf32>
    %178 = vector.extract_strided_slice %166 {offsets = [0, 24], sizes = [8, 8], strides = [1, 1]} : vector<8x32xf32> to vector<8x8xf32>
    %cst_79 = arith.constant dense<0.000000e+00> : vector<8x8xf32>
    %179 = tpu.matmul %177, %178, %cst_79 {dimension_numbers = #tpu.dot_dimension_numbers<[1], [1], [0], [0], [0, 0, 1, 0], [], []>} : vector<8x8xf32>, vector<8x8xf32>, vector<8x8xf32> -> vector<8x8xf32>
    %180 = tpu.concatenate %170, %173, %176, %179 in 1 : vector<8x8xf32>, vector<8x8xf32>, vector<8x8xf32>, vector<8x8xf32> -> vector<8x32xf32>
    %cst_80 = arith.constant dense<0xFF800000> : vector<8xf32>
    %181 = vector.multi_reduction <maximumf>, %180, %cst_80 [1] : vector<8x32xf32> to vector<8xf32>
    %182 = vector.shape_cast %181 : vector<8xf32> to vector<8x1xf32>
    %183 = vector.broadcast %182 : vector<8x1xf32> to vector<8x32xf32>
    %184 = arith.subf %180, %183 : vector<8x32xf32>
    %185 = math.exp %184 : vector<8x32xf32>
    %c0_81 = arith.constant 0 : index
    %c0_82 = arith.constant 0 : index
    %186 = vector.load %arg4[%c0_81, %c0_82] : memref<32x32xf32, #tpu.memory_space<vmem>>, vector<32x32xf32>
    %cst_83 = arith.constant dense<0.000000e+00> : vector<8x32xf32>
    %187 = tpu.matmul %185, %186, %cst_83 {dimension_numbers = #tpu.dot_dimension_numbers<[1], [0], [0], [1], [0, 0, 1, 1], [], []>} : vector<8x32xf32>, vector<32x32xf32>, vector<8x32xf32> -> vector<8x32xf32>
    %188 = arith.divf %185, %187 : vector<8x32xf32>
    %189 = vector.extract_strided_slice %188 {offsets = [0, 0], sizes = [8, 8], strides = [1, 1]} : vector<8x32xf32> to vector<8x8xf32>
    %190 = vector.extract_strided_slice %167 {offsets = [0, 0], sizes = [8, 8], strides = [1, 1]} : vector<8x32xf32> to vector<8x8xf32>
    %cst_84 = arith.constant dense<0.000000e+00> : vector<8x8xf32>
    %191 = tpu.matmul %189, %190, %cst_84 {dimension_numbers = #tpu.dot_dimension_numbers<[1], [0], [0], [1], [0, 0, 1, 1], [], []>} : vector<8x8xf32>, vector<8x8xf32>, vector<8x8xf32> -> vector<8x8xf32>
    %192 = vector.extract_strided_slice %188 {offsets = [0, 8], sizes = [8, 8], strides = [1, 1]} : vector<8x32xf32> to vector<8x8xf32>
    %193 = vector.extract_strided_slice %167 {offsets = [0, 8], sizes = [8, 8], strides = [1, 1]} : vector<8x32xf32> to vector<8x8xf32>
    %cst_85 = arith.constant dense<0.000000e+00> : vector<8x8xf32>
    %194 = tpu.matmul %192, %193, %cst_85 {dimension_numbers = #tpu.dot_dimension_numbers<[1], [0], [0], [1], [0, 0, 1, 1], [], []>} : vector<8x8xf32>, vector<8x8xf32>, vector<8x8xf32> -> vector<8x8xf32>
    %195 = vector.extract_strided_slice %188 {offsets = [0, 16], sizes = [8, 8], strides = [1, 1]} : vector<8x32xf32> to vector<8x8xf32>
    %196 = vector.extract_strided_slice %167 {offsets = [0, 16], sizes = [8, 8], strides = [1, 1]} : vector<8x32xf32> to vector<8x8xf32>
    %cst_86 = arith.constant dense<0.000000e+00> : vector<8x8xf32>
    %197 = tpu.matmul %195, %196, %cst_86 {dimension_numbers = #tpu.dot_dimension_numbers<[1], [0], [0], [1], [0, 0, 1, 1], [], []>} : vector<8x8xf32>, vector<8x8xf32>, vector<8x8xf32> -> vector<8x8xf32>
    %198 = vector.extract_strided_slice %188 {offsets = [0, 24], sizes = [8, 8], strides = [1, 1]} : vector<8x32xf32> to vector<8x8xf32>
    %199 = vector.extract_strided_slice %167 {offsets = [0, 24], sizes = [8, 8], strides = [1, 1]} : vector<8x32xf32> to vector<8x8xf32>
    %cst_87 = arith.constant dense<0.000000e+00> : vector<8x8xf32>
    %200 = tpu.matmul %198, %199, %cst_87 {dimension_numbers = #tpu.dot_dimension_numbers<[1], [0], [0], [1], [0, 0, 1, 1], [], []>} : vector<8x8xf32>, vector<8x8xf32>, vector<8x8xf32> -> vector<8x8xf32>
    %201 = tpu.concatenate %191, %194, %197, %200 in 1 : vector<8x8xf32>, vector<8x8xf32>, vector<8x8xf32>, vector<8x8xf32> -> vector<8x32xf32>
    %202 = tpu.concatenate %164, %201 in 0 : vector<8x32xf32>, vector<8x32xf32> -> vector<16x32xf32>
    %c1_88 = arith.constant 1 : index
    %c0_89 = arith.constant 0 : index
    %c0_90 = arith.constant 0 : index
    %203 = vector.load %arg7[%c1_88, %c0_89, %c0_90] : memref<2x32x32xf32, #tpu.memory_space<vmem>>, vector<1x32x32xf32>
    %204 = vector.shape_cast %203 : vector<1x32x32xf32> to vector<32x32xf32>
    %cst_91 = arith.constant dense<0.000000e+00> : vector<16x32xf32>
    %205 = tpu.matmul %202, %204, %cst_91 {dimension_numbers = #tpu.dot_dimension_numbers<[1], [0], [0], [1], [0, 0, 1, 1], [], []>} : vector<16x32xf32>, vector<32x32xf32>, vector<16x32xf32> -> vector<16x32xf32>
    %c1_92 = arith.constant 1 : index
    %c0_93 = arith.constant 0 : index
    %c0_94 = arith.constant 0 : index
    %206 = vector.load %arg8[%c1_92, %c0_93, %c0_94] : memref<2x1x32xf32, #tpu.memory_space<vmem>>, vector<1x1x32xf32>
    %207 = vector.shape_cast %206 : vector<1x1x32xf32> to vector<1x32xf32>
    %208 = vector.broadcast %207 : vector<1x32xf32> to vector<16x32xf32>
    %209 = arith.addf %205, %208 : vector<16x32xf32>
    %c1_95 = arith.constant 1 : index
    %c0_96 = arith.constant 0 : index
    %c0_97 = arith.constant 0 : index
    %210 = vector.load %arg9[%c1_95, %c0_96, %c0_97] : memref<2x32x64xf32, #tpu.memory_space<vmem>>, vector<1x32x64xf32>
    %211 = vector.shape_cast %210 : vector<1x32x64xf32> to vector<32x64xf32>
    %cst_98 = arith.constant dense<0.000000e+00> : vector<16x64xf32>
    %212 = tpu.matmul %209, %211, %cst_98 {dimension_numbers = #tpu.dot_dimension_numbers<[1], [0], [0], [1], [0, 0, 1, 1], [], []>} : vector<16x32xf32>, vector<32x64xf32>, vector<16x64xf32> -> vector<16x64xf32>
    %c1_99 = arith.constant 1 : index
    %c0_100 = arith.constant 0 : index
    %c0_101 = arith.constant 0 : index
    %213 = vector.load %arg10[%c1_99, %c0_100, %c0_101] : memref<2x1x64xf32, #tpu.memory_space<vmem>>, vector<1x1x64xf32>
    %214 = vector.shape_cast %213 : vector<1x1x64xf32> to vector<1x64xf32>
    %215 = vector.broadcast %214 : vector<1x64xf32> to vector<16x64xf32>
    %216 = arith.addf %212, %215 : vector<16x64xf32>
    %cst_102 = arith.constant 0.000000e+00 : f32
    %217 = vector.broadcast %cst_102 : f32 to vector<16x64xf32>
    %218 = arith.maximumf %216, %217 : vector<16x64xf32>
    %c1_103 = arith.constant 1 : index
    %c0_104 = arith.constant 0 : index
    %c0_105 = arith.constant 0 : index
    %219 = vector.load %arg11[%c1_103, %c0_104, %c0_105] : memref<2x64x32xf32, #tpu.memory_space<vmem>>, vector<1x64x32xf32>
    %220 = vector.shape_cast %219 : vector<1x64x32xf32> to vector<64x32xf32>
    %cst_106 = arith.constant dense<0.000000e+00> : vector<16x32xf32>
    %221 = tpu.matmul %218, %220, %cst_106 {dimension_numbers = #tpu.dot_dimension_numbers<[1], [0], [0], [1], [0, 0, 1, 1], [], []>} : vector<16x64xf32>, vector<64x32xf32>, vector<16x32xf32> -> vector<16x32xf32>
    %c1_107 = arith.constant 1 : index
    %c0_108 = arith.constant 0 : index
    %c0_109 = arith.constant 0 : index
    %222 = vector.load %arg12[%c1_107, %c0_108, %c0_109] : memref<2x1x32xf32, #tpu.memory_space<vmem>>, vector<1x1x32xf32>
    %223 = vector.shape_cast %222 : vector<1x1x32xf32> to vector<1x32xf32>
    %224 = vector.broadcast %223 : vector<1x32xf32> to vector<16x32xf32>
    %225 = arith.addf %221, %224 : vector<16x32xf32>
    %c0_110 = arith.constant 0 : index
    %c0_111 = arith.constant 0 : index
    %226 = vector.load %arg13[%c0_110, %c0_111] : memref<32x10xf32, #tpu.memory_space<vmem>>, vector<32x10xf32>
    %cst_112 = arith.constant dense<0.000000e+00> : vector<16x10xf32>
    %227 = tpu.matmul %225, %226, %cst_112 {dimension_numbers = #tpu.dot_dimension_numbers<[1], [0], [0], [1], [0, 0, 1, 1], [], []>} : vector<16x32xf32>, vector<32x10xf32>, vector<16x10xf32> -> vector<16x10xf32>
    %c0_113 = arith.constant 0 : index
    %c0_114 = arith.constant 0 : index
    %228 = vector.load %arg14[%c0_113, %c0_114] : memref<1x10xf32, #tpu.memory_space<vmem>>, vector<1x10xf32>
    %229 = vector.broadcast %228 : vector<1x10xf32> to vector<16x10xf32>
    %230 = arith.addf %227, %229 : vector<16x10xf32>
    %231 = vector.extract_strided_slice %230 {offsets = [0, 0], sizes = [8, 10], strides = [1, 1]} : vector<16x10xf32> to vector<8x10xf32>
    %232 = vector.extract_strided_slice %230 {offsets = [8, 0], sizes = [8, 10], strides = [1, 1]} : vector<16x10xf32> to vector<8x10xf32>
    %233 = tpu.concatenate %231, %232 in 1 : vector<8x10xf32>, vector<8x10xf32> -> vector<8x20xf32>
    %c0_115 = arith.constant 0 : index
    %c0_116 = arith.constant 0 : index
    %234 = vector.load %arg15[%c0_115, %c0_116] : memref<8x20xf32, #tpu.memory_space<vmem>>, vector<8x20xf32>
    tpu.vector_store %arg15[%c0_115, %c0_116], %233 {strides = array<i32>} : memref<8x20xf32, #tpu.memory_space<vmem>>, vector<8x20xf32>,
    return
  }
  func.func @transform_0(%arg0: i32) -> (i32, i32) {
    %c0_i32 = arith.constant 0 : i32
    %c0_i32_0 = arith.constant 0 : i32
    %c0_i32_1 = arith.constant 0 : i32
    return %c0_i32, %c0_i32_0 : i32, i32
  }
  func.func @transform_1(%arg0: i32) -> (i32, i32) {
    %c0_i32 = arith.constant 0 : i32
    %c0_i32_0 = arith.constant 0 : i32
    %c0_i32_1 = arith.constant 0 : i32
    return %c0_i32, %c0_i32_0 : i32, i32
  }
  func.func @transform_2(%arg0: i32) -> (i32, i32) {
    %c0_i32 = arith.constant 0 : i32
    %c0_i32_0 = arith.constant 0 : i32
    %c0_i32_1 = arith.constant 0 : i32
    return %c0_i32, %c0_i32_0 : i32, i32
  }
  func.func @transform_3(%arg0: i32) -> (i32, i32) {
    %c0_i32 = arith.constant 0 : i32
    %c0_i32_0 = arith.constant 0 : i32
    %c0_i32_1 = arith.constant 0 : i32
    return %c0_i32, %c0_i32_0 : i32, i32
  }
  func.func @transform_4(%arg0: i32) -> (i32, i32, i32) {
    %c0_i32 = arith.constant 0 : i32
    %c0_i32_0 = arith.constant 0 : i32
    %c0_i32_1 = arith.constant 0 : i32
    %c0_i32_2 = arith.constant 0 : i32
    return %c0_i32, %c0_i32_0, %c0_i32_1 : i32, i32, i32
  }
  func.func @transform_5(%arg0: i32) -> (i32, i32, i32) {
    %c0_i32 = arith.constant 0 : i32
    %c0_i32_0 = arith.constant 0 : i32
    %c0_i32_1 = arith.constant 0 : i32
    %c0_i32_2 = arith.constant 0 : i32
    return %c0_i32, %c0_i32_0, %c0_i32_1 : i32, i32, i32
  }
  func.func @transform_6(%arg0: i32) -> (i32, i32, i32) {
    %c0_i32 = arith.constant 0 : i32
    %c0_i32_0 = arith.constant 0 : i32
    %c0_i32_1 = arith.constant 0 : i32
    %c0_i32_2 = arith.constant 0 : i32
    return %c0_i32, %c0_i32_0, %c0_i32_1 : i32, i32, i32
  }
  func.func @transform_7(%arg0: i32) -> (i32, i32, i32) {
    %c0_i32 = arith.constant 0 : i32
    %c0_i32_0 = arith.constant 0 : i32
    %c0_i32_1 = arith.constant 0 : i32
    %c0_i32_2 = arith.constant 0 : i32
    return %c0_i32, %c0_i32_0, %c0_i32_1 : i32, i32, i32
  }
  func.func @transform_8(%arg0: i32) -> (i32, i32, i32) {
    %c0_i32 = arith.constant 0 : i32
    %c0_i32_0 = arith.constant 0 : i32
    %c0_i32_1 = arith.constant 0 : i32
    %c0_i32_2 = arith.constant 0 : i32
    return %c0_i32, %c0_i32_0, %c0_i32_1 : i32, i32, i32
  }
  func.func @transform_9(%arg0: i32) -> (i32, i32, i32) {
    %c0_i32 = arith.constant 0 : i32
    %c0_i32_0 = arith.constant 0 : i32
    %c0_i32_1 = arith.constant 0 : i32
    %c0_i32_2 = arith.constant 0 : i32
    return %c0_i32, %c0_i32_0, %c0_i32_1 : i32, i32, i32
  }
  func.func @transform_10(%arg0: i32) -> (i32, i32, i32) {
    %c0_i32 = arith.constant 0 : i32
    %c0_i32_0 = arith.constant 0 : i32
    %c0_i32_1 = arith.constant 0 : i32
    %c0_i32_2 = arith.constant 0 : i32
    return %c0_i32, %c0_i32_0, %c0_i32_1 : i32, i32, i32
  }
  func.func @transform_11(%arg0: i32) -> (i32, i32, i32) {
    %c0_i32 = arith.constant 0 : i32
    %c0_i32_0 = arith.constant 0 : i32
    %c0_i32_1 = arith.constant 0 : i32
    %c0_i32_2 = arith.constant 0 : i32
    return %c0_i32, %c0_i32_0, %c0_i32_1 : i32, i32, i32
  }
  func.func @transform_12(%arg0: i32) -> (i32, i32) {
    %c0_i32 = arith.constant 0 : i32
    %c0_i32_0 = arith.constant 0 : i32
    %c0_i32_1 = arith.constant 0 : i32
    return %c0_i32, %c0_i32_0 : i32, i32
  }
  func.func @transform_13(%arg0: i32) -> (i32, i32) {
    %c0_i32 = arith.constant 0 : i32
    %c0_i32_0 = arith.constant 0 : i32
    %c0_i32_1 = arith.constant 0 : i32
    return %c0_i32, %c0_i32_0 : i32, i32
  }
  func.func @transform_14(%arg0: i32) -> (i32, i32) {
    %c0_i32 = arith.constant 0 : i32
    %c0_i32_0 = arith.constant 0 : i32
    %c0_i32_1 = arith.constant 0 : i32
    return %c0_i32, %c0_i32_0 : i32, i32
  }
}

</mosaic_0001>

<llo_original>
// kernel: encoder_model_forward.1
$region0: #{encoder_model_forward.1}
  #allocation0 [shape = 'u32[]', space=smem, size = 0x4, offset = 0x4, fixed_abs, tag = 'smem constant byte address 0x4 - core index']
  #allocation1 [shape = 'u32[144,128]{1,0:T(1,128)}', space=vmem, size = 0x12000, scoped, tag = 'internal scratch']
  %s0 = inlined_call_operand.vmem [shape: s32[16,1], index: 0, kind: input, shape index: {}]
  %s1 = inlined_call_operand.hbm [shape: f32[16,32], index: 1, kind: input, shape index: {}]
  %s2 = inlined_call_operand.hbm [shape: f32[16,32], index: 2, kind: input, shape index: {}]
  %s3 = inlined_call_operand.hbm [shape: f32[32,32], index: 3, kind: input, shape index: {}]
  %s4 = inlined_call_operand.vmem [shape: f32[2,32,96], index: 4, kind: input, shape index: {}]
  %s5 = inlined_call_operand.vmem [shape: f32[2,1,96], index: 5, kind: input, shape index: {}]
  %s6 = inlined_call_operand.vmem [shape: f32[2,32,32], index: 6, kind: input, shape index: {}]
  %s7 = inlined_call_operand.vmem [shape: f32[2,1,32], index: 7, kind: input, shape index: {}]
  %s8 = inlined_call_operand.vmem [shape: f32[2,32,64], index: 8, kind: input, shape index: {}]
  %s9 = inlined_call_operand.vmem [shape: f32[2,1,64], index: 9, kind: input, shape index: {}]
  %s10 = inlined_call_operand.vmem [shape: f32[2,64,32], index: 10, kind: input, shape index: {}]
  %s11 = inlined_call_operand.hbm [shape: f32[2,1,32], index: 11, kind: input, shape index: {}]
  %s12 = inlined_call_operand.vmem [shape: f32[32,10], index: 12, kind: input, shape index: {}]
  %s13 = inlined_call_operand.hbm [shape: f32[1,10], index: 13, kind: input, shape index: {}]
  %s14 = inlined_call_operand.vmem [shape: f32[8,20], index: 14, kind: output, shape index: {}]
  %s15 = sld [smem:[#allocation0]]
  $region86: #{encoder_model_forward.1} parent=0
    _
  %s17 = ssub.s32 1, %s15
  %s18 = scalar_select 0, %s17, %s15
  $region1: #{encoder_model_forward.1} parent=0
    #allocation2 [shape = 'u8[8192]{0}', space=vmem, size = 0x2000, scoped, tag = 'input window, operand 1, single buffered']
    #allocation3 [shape = 's32[1]{0}', space=sflag, size = 0x4, scoped, tag = 'scoped memory for encoder_model_forward.1']
    #allocation4 [shape = 'u8[8192]{0}', space=vmem, size = 0x2000, scoped, tag = 'input window, operand 2, single buffered']
    #allocation5 [shape = 's32[1]{0}', space=sflag, size = 0x4, scoped, tag = 'scoped memory for encoder_model_forward.1']
    #allocation6 [shape = 'u8[16384]{0}', space=vmem, size = 0x4000, scoped, tag = 'input window, operand 3, single buffered']
    #allocation7 [shape = 'u8[1024]{0}', space=vmem, size = 0x400, scoped, tag = 'input window, operand 11, single buffered']
    #allocation8 [shape = 's32[1]{0}', space=sflag, size = 0x4, scoped, tag = 'scoped memory for encoder_model_forward.1']
    #allocation9 [shape = 'u8[512]{0}', space=vmem, size = 0x400, scoped, tag = 'input window, operand 13, single buffered']
    %19 = vsyncpa [#allocation3], 0
    %20 = vsyncpa [#allocation5], 0
    %21 = vsyncpa [#allocation8], 0
    // Predicated region
    $region2: #{encoder_model_forward.1} parent=1 // pred_check
      _
    $region3: #{encoder_model_forward.1} parent=1 // pred_check_branch
      %23 = sbr.rel (0) target = $region5
    $region4: #{encoder_model_forward.1} parent=1 // pred_region
      _
    $region5: #{encoder_model_forward.1} parent=1 // pred_fallthru
      _
    // Predicated region
    $region6: #{encoder_model_forward.1} parent=1 // pred_check
      _
    $region7: #{encoder_model_forward.1} parent=1 // pred_check_branch
      %25 = sbr.rel (0) target = $region9
    $region8: #{encoder_model_forward.1} parent=1 // pred_region
      %s27 = ssub.s32 256, 256
      %28 = vsyncadd [#allocation3], %s27
      %s29 = sshll.u32 [#allocation2], 4
      %s30 = int_to_ptr.vmem [resolvable:$true] %s29
      %35 = dma.hbm_to_vmem [thread:$0]  %s1, 256, %s30, [#allocation3], 128, 128, 8
    $region9: #{encoder_model_forward.1} parent=1 // pred_fallthru
      _
    // Predicated region
    $region10: #{encoder_model_forward.1} parent=1 // pred_check
      _
    $region11: #{encoder_model_forward.1} parent=1 // pred_check_branch
      %37 = sbr.rel (0) target = $region13
    $region12: #{encoder_model_forward.1} parent=1 // pred_region
      %s39 = ssub.s32 256, 256
      %40 = vsyncadd [#allocation5], %s39
      %s41 = sshll.u32 [#allocation4], 4
      %s42 = int_to_ptr.vmem [resolvable:$true] %s41
      %47 = dma.hbm_to_vmem [thread:$0]  %s2, 256, %s42, [#allocation5], 128, 128, 8
    $region13: #{encoder_model_forward.1} parent=1 // pred_fallthru
      _
    // Predicated region
    $region14: #{encoder_model_forward.1} parent=1 // pred_check
      _
    $region15: #{encoder_model_forward.1} parent=1 // pred_check_branch
      %49 = sbr.rel (0) target = $region17
    $region16: #{encoder_model_forward.1} parent=1 // pred_region
      %s51 = ssub.s32 512, 512
      %52 = vsyncadd [#allocation5], %s51
      %s53 = sshll.u32 [#allocation6], 4
      %s54 = int_to_ptr.vmem [resolvable:$true] %s53
      %59 = dma.hbm_to_vmem [thread:$0]  %s3, 512, %s54, [#allocation5], 128, 128, 8
    $region17: #{encoder_model_forward.1} parent=1 // pred_fallthru
      _
    // Predicated region
    $region18: #{encoder_model_forward.1} parent=1 // pred_check
      _
    $region19: #{encoder_model_forward.1} parent=1 // pred_check_branch
      %61 = sbr.rel (0) target = $region21
    $region20: #{encoder_model_forward.1} parent=1 // pred_region
      _
    $region21: #{encoder_model_forward.1} parent=1 // pred_fallthru
      _
    // Predicated region
    $region22: #{encoder_model_forward.1} parent=1 // pred_check
      _
    $region23: #{encoder_model_forward.1} parent=1 // pred_check_branch
      %63 = sbr.rel (0) target = $region25
    $region24: #{encoder_model_forward.1} parent=1 // pred_region
      _
    $region25: #{encoder_model_forward.1} parent=1 // pred_fallthru
      _
    // Predicated region
    $region26: #{encoder_model_forward.1} parent=1 // pred_check
      _
    $region27: #{encoder_model_forward.1} parent=1 // pred_check_branch
      %65 = sbr.rel (0) target = $region29
    $region28: #{encoder_model_forward.1} parent=1 // pred_region
      _
    $region29: #{encoder_model_forward.1} parent=1 // pred_fallthru
      _
    // Predicated region
    $region30: #{encoder_model_forward.1} parent=1 // pred_check
      _
    $region31: #{encoder_model_forward.1} parent=1 // pred_check_branch
      %67 = sbr.rel (0) target = $region33
    $region32: #{encoder_model_forward.1} parent=1 // pred_region
      _
    $region33: #{encoder_model_forward.1} parent=1 // pred_fallthru
      _
    // Predicated region
    $region34: #{encoder_model_forward.1} parent=1 // pred_check
      _
    $region35: #{encoder_model_forward.1} parent=1 // pred_check_branch
      %69 = sbr.rel (0) target = $region37
    $region36: #{encoder_model_forward.1} parent=1 // pred_region
      _
    $region37: #{encoder_model_forward.1} parent=1 // pred_fallthru
      _
    // Predicated region
    $region38: #{encoder_model_forward.1} parent=1 // pred_check
      _
    $region39: #{encoder_model_forward.1} parent=1 // pred_check_branch
      %71 = sbr.rel (0) target = $region41
    $region40: #{encoder_model_forward.1} parent=1 // pred_region
      _
    $region41: #{encoder_model_forward.1} parent=1 // pred_fallthru
      _
    // Predicated region
    $region42: #{encoder_model_forward.1} parent=1 // pred_check
      _
    $region43: #{encoder_model_forward.1} parent=1 // pred_check_branch
      %73 = sbr.rel (0) target = $region45
    $region44: #{encoder_model_forward.1} parent=1 // pred_region
      _
    $region45: #{encoder_model_forward.1} parent=1 // pred_fallthru
      _
    // Predicated region
    $region46: #{encoder_model_forward.1} parent=1 // pred_check
      _
    $region47: #{encoder_model_forward.1} parent=1 // pred_check_branch
      %75 = sbr.rel (0) target = $region49
    $region48: #{encoder_model_forward.1} parent=1 // pred_region
      %s77 = ssub.s32 32, 32
      %78 = vsyncadd [#allocation8], %s77
      %s79 = sshll.u32 [#allocation7], 4
      %s80 = int_to_ptr.vmem [resolvable:$true] %s79
      %85 = dma.hbm_to_vmem [thread:$0]  %s11, 32, %s80, [#allocation8], 16, 16, 1
    $region49: #{encoder_model_forward.1} parent=1 // pred_fallthru
      _
    // Predicated region
    $region50: #{encoder_model_forward.1} parent=1 // pred_check
      _
    $region51: #{encoder_model_forward.1} parent=1 // pred_check_branch
      %87 = sbr.rel (0) target = $region53
    $region52: #{encoder_model_forward.1} parent=1 // pred_region
      _
    $region53: #{encoder_model_forward.1} parent=1 // pred_fallthru
      _
    // Predicated region
    $region54: #{encoder_model_forward.1} parent=1 // pred_check
      _
    $region55: #{encoder_model_forward.1} parent=1 // pred_check_branch
      %89 = sbr.rel (0) target = $region57
    $region56: #{encoder_model_forward.1} parent=1 // pred_region
      %s91 = ssub.s32 16, 16
      %92 = vsyncadd [#allocation8], %s91
      %s94 = sshll.u32 [#allocation9], 4
      %s95 = int_to_ptr.vmem [resolvable:$true] %s94
      %97 = dma.hbm_to_vmem [thread:$0]  %s13, 16, %s95, [#allocation8]
    $region57: #{encoder_model_forward.1} parent=1 // pred_fallthru
      _
    // Predicated region
    $region58: #{encoder_model_forward.1} parent=1 // pred_check
      _
    $region59: #{encoder_model_forward.1} parent=1 // pred_check_branch
      %99 = sbr.rel (0) target = $region61
    $region60: #{encoder_model_forward.1} parent=1 // pred_region
      %100 = dma.done [#allocation3], 256
    $region61: #{encoder_model_forward.1} parent=1 // pred_fallthru
      _
    // Predicated region
    $region62: #{encoder_model_forward.1} parent=1 // pred_check
      _
    $region63: #{encoder_model_forward.1} parent=1 // pred_check_branch
      %102 = sbr.rel (0) target = $region65
    $region64: #{encoder_model_forward.1} parent=1 // pred_region
      %103 = dma.done [#allocation5], 256
    $region65: #{encoder_model_forward.1} parent=1 // pred_fallthru
      _
    // Predicated region
    $region66: #{encoder_model_forward.1} parent=1 // pred_check
      _
    $region67: #{encoder_model_forward.1} parent=1 // pred_check_branch
      %105 = sbr.rel (0) target = $region69
    $region68: #{encoder_model_forward.1} parent=1 // pred_region
      %106 = dma.done [#allocation5], 512
    $region69: #{encoder_model_forward.1} parent=1 // pred_fallthru
      _
    // Predicated region
    $region70: #{encoder_model_forward.1} parent=1 // pred_check
      _
    $region71: #{encoder_model_forward.1} parent=1 // pred_check_branch
      %108 = sbr.rel (0) target = $region73
    $region72: #{encoder_model_forward.1} parent=1 // pred_region
      %109 = dma.done [#allocation8], 32
    $region73: #{encoder_model_forward.1} parent=1 // pred_fallthru
      _
    // Predicated region
    $region74: #{encoder_model_forward.1} parent=1 // pred_check
      _
    $region75: #{encoder_model_forward.1} parent=1 // pred_check_branch
      %111 = sbr.rel (0) target = $region77
    $region76: #{encoder_model_forward.1} parent=1 // pred_region
      %112 = dma.done [#allocation8], 16
    $region77: #{encoder_model_forward.1} parent=1 // pred_fallthru
      _
    %v113 = vld [vmem:[%s0] sm:$0xff]
    %v114 = vld [vmem:[%s0 + $0x8] sm:$0xff]
    %v115 = vlaneseq
    %v116 = vand.u32 %v115, 127
    %117 = vset.pattern.permute.xlu0 0
    %118 = vperm.xlu0 %117, %v113
    %v119 = vpop.permute.xlu0 %118
    %120 = vset.pattern.permute.xlu0 0
    %121 = vperm.xlu0 %120, %v114
    %v122 = vpop.permute.xlu0 %121
    %vm123 = vcmp.eq.s32.totalorder %v116, %v119
    %vm124 = vcmp.eq.s32.totalorder %v116, %v122
    %v125 = vsel %vm123, 1, 0
    %v126 = vsel %vm124, 1, 0
    %v127 = vcvt.s32.f32 %v125
    %v128 = vcvt.s32.f32 %v126
    %v129 = vld [vmem:[#allocation2] sm:$0xff]
    %v130 = vld [vmem:[#allocation2 + $0x8] sm:$0xff]
    %v131 = vld [vmem:[#allocation4] sm:$0xff]
    %v132 = vld [vmem:[#allocation4 + $0x8] sm:$0xff]
    %vm133 = vcmask 130048
    %v135 = vsel %vm133, %v127, 0
    %v138 = vsel %vm133, %v128, 0
    %140 = vmatprep.subr.mxu0 0.0
    %141 = vmatpush1.msra.mxu0 0.0
    %142 = vmatprep.subr.mxu0 0.0
    %143 = vmatpush1.msra.mxu0 0.0
    %144 = vmatprep.subr.mxu0 0.0
    %145 = vmatpush1.msra.mxu0 0.0
    %146 = vmatprep.subr.mxu0 0.0
    %147 = vmatpush1.msra.mxu0 0.0
    %148 = vmatprep.subr.mxu0 0.0
    %149 = vmatpush1.msra.mxu0 0.0
    %150 = vmatprep.subr.mxu0 0.0
    %151 = vmatpush1.msra.mxu0 0.0
    %152 = vmatprep.subr.mxu0 0.0
    %153 = vmatpush1.msra.mxu0 0.0
    %154 = vmatprep.subr.mxu0 0.0
    %155 = vmatpush1.msra.mxu0 0.0
    %156 = vmatprep.subr.mxu0 0.0
    %157 = vmatpush1.msra.mxu0 0.0
    %158 = vmatprep.subr.mxu0 0.0
    %159 = vmatpush1.msra.mxu0 0.0
    %160 = vmatprep.subr.mxu0 0.0
    %161 = vmatpush1.msra.mxu0 0.0
    %162 = vmatprep.subr.mxu0 0.0
    %163 = vmatpush1.msra.mxu0 0.0
    %164 = vmatprep.subr.mxu0 0.0
    %165 = vmatpush1.msra.mxu0 0.0
    %166 = vmatprep.subr.mxu0 0.0
    %167 = vmatpush1.msra.mxu0 0.0
    %168 = vmatprep.subr.mxu0 0.0
    %169 = vmatpush1.msra.mxu0 %v130
    %170 = vmatprep.subr.mxu0 0.0
    %171 = vmatpush1.msra.mxu0 %v129
    %172 = vmatprep.subr.mxu0 0.0
    %173 = vmatpush2.msra.mxu0 0.0
    %174 = vmatprep.subr.mxu0 0.0
    %175 = vmatpush2.msra.mxu0 0.0
    %176 = vmatprep.subr.mxu0 0.0
    %177 = vmatpush2.msra.mxu0 0.0
    %178 = vmatprep.subr.mxu0 0.0
    %179 = vmatpush2.msra.mxu0 0.0
    %180 = vmatprep.subr.mxu0 0.0
    %181 = vmatpush2.msra.mxu0 0.0
    %182 = vmatprep.subr.mxu0 0.0
    %183 = vmatpush2.msra.mxu0 0.0
    %184 = vmatprep.subr.mxu0 0.0
    %185 = vmatpush2.msra.mxu0 0.0
    %186 = vmatprep.subr.mxu0 0.0
    %187 = vmatpush2.msra.mxu0 0.0
    %188 = vmatprep.subr.mxu0 0.0
    %189 = vmatpush2.msra.mxu0 0.0
    %190 = vmatprep.subr.mxu0 0.0
    %191 = vmatpush2.msra.mxu0 0.0
    %192 = vmatprep.subr.mxu0 0.0
    %193 = vmatpush2.msra.mxu0 0.0
    %194 = vmatprep.subr.mxu0 0.0
    %195 = vmatpush2.msra.mxu0 0.0
    %196 = vmatprep.subr.mxu0 0.0
    %197 = vmatpush2.msra.mxu0 0.0
    %198 = vmatprep.subr.mxu0 0.0
    %199 = vmatpush2.msra.mxu0 0.0
    %200 = vmatprep.subr.mxu0 0.0
    %201 = vmatpush2.msra.mxu0 0.0
    %202 = vmatprep.subr.mxu0 0.0
    %203 = vmatpush2.msra.mxu0 0.0
    %204 = vmatprep.mubr.f32.mxu0 0.0
    %205 = vmatmul.mubr.f32.gmra.mxu0 %v135
    %v206 = vpop.f32.mrf.mxu0
    %v207 = vadd.f32 %v131, %v206
    %v208 = vpop.f32.mrf.mxu0
    %209 = vmatprep.mubr.f32.mxu0 0.0
    %210 = vmatmul.mubr.f32.gmra.mxu0 %v138
    %v211 = vpop.f32.mrf.mxu0
    %v212 = vadd.f32 %v132, %v211
    %v213 = vpop.f32.mrf.mxu0
    %214 = vdwg.mxu0
    %v215 = vld [vmem:[%s4] sm:$0xff]
    %v216 = vld [vmem:[%s4 + $0x8] sm:$0xff]
    %v217 = vld [vmem:[%s4 + $0x10] sm:$0xff]
    %v218 = vld [vmem:[%s4 + $0x18] sm:$0xff]
    %v219 = vld [vmem:[%s5] sm:$0x1]
    %v221 = vlaneseq
    %v222 = vshrl.u32 %v221, 7
    %v223 = vsub.s32 0, %v222
    %v224 = vrot.slane %v219, %v223
    %vm226 = vcmask 261120
    %v228 = vsel %vm226, %v207, 0
    %v231 = vsel %vm226, %v212, 0
    %233 = vmatprep.subr.mxu0 0.0
    %234 = vmatpush1.msra.mxu0 0.0
    %235 = vmatprep.subr.mxu0 0.0
    %236 = vmatpush1.msra.mxu0 0.0
    %237 = vmatprep.subr.mxu0 0.0
    %238 = vmatpush1.msra.mxu0 0.0
    %239 = vmatprep.subr.mxu0 0.0
    %240 = vmatpush1.msra.mxu0 0.0
    %241 = vmatprep.subr.mxu0 0.0
    %242 = vmatpush1.msra.mxu0 0.0
    %243 = vmatprep.subr.mxu0 0.0
    %244 = vmatpush1.msra.mxu0 0.0
    %245 = vmatprep.subr.mxu0 0.0
    %246 = vmatpush1.msra.mxu0 0.0
    %247 = vmatprep.subr.mxu0 0.0
    %248 = vmatpush1.msra.mxu0 0.0
    %249 = vmatprep.subr.mxu0 0.0
    %250 = vmatpush1.msra.mxu0 0.0
    %251 = vmatprep.subr.mxu0 0.0
    %252 = vmatpush1.msra.mxu0 0.0
    %253 = vmatprep.subr.mxu0 0.0
    %254 = vmatpush1.msra.mxu0 0.0
    %255 = vmatprep.subr.mxu0 0.0
    %256 = vmatpush1.msra.mxu0 0.0
    %257 = vmatprep.subr.mxu0 0.0
    %258 = vmatpush1.msra.mxu0 %v218
    %259 = vmatprep.subr.mxu0 0.0
    %260 = vmatpush1.msra.mxu0 %v217
    %261 = vmatprep.subr.mxu0 0.0
    %262 = vmatpush1.msra.mxu0 %v216
    %263 = vmatprep.subr.mxu0 0.0
    %264 = vmatpush1.msra.mxu0 %v215
    %265 = vmatprep.subr.mxu0 0.0
    %266 = vmatpush2.msra.mxu0 0.0
    %267 = vmatprep.subr.mxu0 0.0
    %268 = vmatpush2.msra.mxu0 0.0
    %269 = vmatprep.subr.mxu0 0.0
    %270 = vmatpush2.msra.mxu0 0.0
    %271 = vmatprep.subr.mxu0 0.0
    %272 = vmatpush2.msra.mxu0 0.0
    %273 = vmatprep.subr.mxu0 0.0
    %274 = vmatpush2.msra.mxu0 0.0
    %275 = vmatprep.subr.mxu0 0.0
    %276 = vmatpush2.msra.mxu0 0.0
    %277 = vmatprep.subr.mxu0 0.0
    %278 = vmatpush2.msra.mxu0 0.0
    %279 = vmatprep.subr.mxu0 0.0
    %280 = vmatpush2.msra.mxu0 0.0
    %281 = vmatprep.subr.mxu0 0.0
    %282 = vmatpush2.msra.mxu0 0.0
    %283 = vmatprep.subr.mxu0 0.0
    %284 = vmatpush2.msra.mxu0 0.0
    %285 = vmatprep.subr.mxu0 0.0
    %286 = vmatpush2.msra.mxu0 0.0
    %287 = vmatprep.subr.mxu0 0.0
    %288 = vmatpush2.msra.mxu0 0.0
    %289 = vmatprep.subr.mxu0 0.0
    %290 = vmatpush2.msra.mxu0 0.0
    %291 = vmatprep.subr.mxu0 0.0
    %292 = vmatpush2.msra.mxu0 0.0
    %293 = vmatprep.subr.mxu0 0.0
    %294 = vmatpush2.msra.mxu0 0.0
    %295 = vmatprep.subr.mxu0 0.0
    %296 = vmatpush2.msra.mxu0 0.0
    %297 = vmatprep.mubr.f32.mxu0 0.0
    %298 = vmatmul.mubr.f32.gmra.mxu0 %v228
    %v299 = vpop.f32.mrf.mxu0
    %v300 = vadd.f32 %v224, %v299
    %v301 = vpop.f32.mrf.mxu0
    %302 = vmatprep.mubr.f32.mxu0 0.0
    %303 = vmatmul.mubr.f32.gmra.mxu0 %v231
    %v304 = vpop.f32.mrf.mxu0
    %v305 = vadd.f32 %v224, %v304
    %v306 = vpop.f32.mrf.mxu0
    %307 = vdwg.mxu0
    %309 = vrot.lane.b32.xlu0 %v300, 96
    %v310 = vpop.permute.xlu0 %309
    %vm311 = vcmask 64512
    %v312 = vsel %vm311, %v300, 0
    %v314 = vsel %vm311, %v310, 0
    %316 = vmatprep.subr.mxu0 0.0
    %317 = vmatpush1.xpose.msra.mxu0 0.0
    %318 = vmatprep.subr.mxu0 0.0
    %319 = vmatpush1.xpose.msra.mxu0 0.0
    %320 = vmatprep.subr.mxu0 0.0
    %321 = vmatpush1.xpose.msra.mxu0 0.0
    %322 = vmatprep.subr.mxu0 0.0
    %323 = vmatpush1.xpose.msra.mxu0 0.0
    %324 = vmatprep.subr.mxu0 0.0
    %325 = vmatpush1.xpose.msra.mxu0 0.0
    %326 = vmatprep.subr.mxu0 0.0
    %327 = vmatpush1.xpose.msra.mxu0 0.0
    %328 = vmatprep.subr.mxu0 0.0
    %329 = vmatpush1.xpose.msra.mxu0 0.0
    %330 = vmatprep.subr.mxu0 0.0
    %331 = vmatpush1.xpose.msra.mxu0 0.0
    %332 = vmatprep.subr.mxu0 0.0
    %333 = vmatpush1.xpose.msra.mxu0 0.0
    %334 = vmatprep.subr.mxu0 0.0
    %335 = vmatpush1.xpose.msra.mxu0 0.0
    %336 = vmatprep.subr.mxu0 0.0
    %337 = vmatpush1.xpose.msra.mxu0 0.0
    %338 = vmatprep.subr.mxu0 0.0
    %339 = vmatpush1.xpose.msra.mxu0 0.0
    %340 = vmatprep.subr.mxu0 0.0
    %341 = vmatpush1.xpose.msra.mxu0 0.0
    %342 = vmatprep.subr.mxu0 0.0
    %343 = vmatpush1.xpose.msra.mxu0 0.0
    %344 = vmatprep.subr.mxu0 0.0
    %345 = vmatpush1.xpose.msra.mxu0 0.0
    %346 = vmatprep.subr.mxu0 0.0
    %347 = vmatpush1.xpose.msra.mxu0 %v314
    %348 = vmatprep.subr.mxu0 0.0
    %349 = vmatpush2.xpose.msra.mxu0 0.0
    %350 = vmatprep.subr.mxu0 0.0
    %351 = vmatpush2.xpose.msra.mxu0 0.0
    %352 = vmatprep.subr.mxu0 0.0
    %353 = vmatpush2.xpose.msra.mxu0 0.0
    %354 = vmatprep.subr.mxu0 0.0
    %355 = vmatpush2.xpose.msra.mxu0 0.0
    %356 = vmatprep.subr.mxu0 0.0
    %357 = vmatpush2.xpose.msra.mxu0 0.0
    %358 = vmatprep.subr.mxu0 0.0
    %359 = vmatpush2.xpose.msra.mxu0 0.0
    %360 = vmatprep.subr.mxu0 0.0
    %361 = vmatpush2.xpose.msra.mxu0 0.0
    %362 = vmatprep.subr.mxu0 0.0
    %363 = vmatpush2.xpose.msra.mxu0 0.0
    %364 = vmatprep.subr.mxu0 0.0
    %365 = vmatpush2.xpose.msra.mxu0 0.0
    %366 = vmatprep.subr.mxu0 0.0
    %367 = vmatpush2.xpose.msra.mxu0 0.0
    %368 = vmatprep.subr.mxu0 0.0
    %369 = vmatpush2.xpose.msra.mxu0 0.0
    %370 = vmatprep.subr.mxu0 0.0
    %371 = vmatpush2.xpose.msra.mxu0 0.0
    %372 = vmatprep.subr.mxu0 0.0
    %373 = vmatpush2.xpose.msra.mxu0 0.0
    %374 = vmatprep.subr.mxu0 0.0
    %375 = vmatpush2.xpose.msra.mxu0 0.0
    %376 = vmatprep.subr.mxu0 0.0
    %377 = vmatpush2.xpose.msra.mxu0 0.0
    %378 = vmatprep.subr.mxu0 0.0
    %379 = vmatpush2.xpose.msra.mxu0 0.0
    %380 = vmatprep.mubr.f32.mxu0 0.0
    %381 = vmatmul.mubr.f32.gmra.mxu0 %v312
    %v382 = vpop.f32.mrf.mxu0
    %v383 = vadd.f32 0.0, %v382
    %v384 = vpop.f32.mrf.mxu0
    %385 = vdwg.mxu0
    %386 = vrot.lane.b32.xlu0 %v300, 120
    %v387 = vpop.permute.xlu0 %386
    %388 = vrot.lane.b32.xlu0 %v300, 88
    %v389 = vpop.permute.xlu0 %388
    %v390 = vsel %vm311, %v387, 0
    %v392 = vsel %vm311, %v389, 0
    %394 = vmatprep.subr.mxu0 0.0
    %395 = vmatpush1.xpose.msra.mxu0 0.0
    %396 = vmatprep.subr.mxu0 0.0
    %397 = vmatpush1.xpose.msra.mxu0 0.0
    %398 = vmatprep.subr.mxu0 0.0
    %399 = vmatpush1.xpose.msra.mxu0 0.0
    %400 = vmatprep.subr.mxu0 0.0
    %401 = vmatpush1.xpose.msra.mxu0 0.0
    %402 = vmatprep.subr.mxu0 0.0
    %403 = vmatpush1.xpose.msra.mxu0 0.0
    %404 = vmatprep.subr.mxu0 0.0
    %405 = vmatpush1.xpose.msra.mxu0 0.0
    %406 = vmatprep.subr.mxu0 0.0
    %407 = vmatpush1.xpose.msra.mxu0 0.0
    %408 = vmatprep.subr.mxu0 0.0
    %409 = vmatpush1.xpose.msra.mxu0 0.0
    %410 = vmatprep.subr.mxu0 0.0
    %411 = vmatpush1.xpose.msra.mxu0 0.0
    %412 = vmatprep.subr.mxu0 0.0
    %413 = vmatpush1.xpose.msra.mxu0 0.0
    %414 = vmatprep.subr.mxu0 0.0
    %415 = vmatpush1.xpose.msra.mxu0 0.0
    %416 = vmatprep.subr.mxu0 0.0
    %417 = vmatpush1.xpose.msra.mxu0 0.0
    %418 = vmatprep.subr.mxu0 0.0
    %419 = vmatpush1.xpose.msra.mxu0 0.0
    %420 = vmatprep.subr.mxu0 0.0
    %421 = vmatpush1.xpose.msra.mxu0 0.0
    %422 = vmatprep.subr.mxu0 0.0
    %423 = vmatpush1.xpose.msra.mxu0 0.0
    %424 = vmatprep.subr.mxu0 0.0
    %425 = vmatpush1.xpose.msra.mxu0 %v392
    %426 = vmatprep.subr.mxu0 0.0
    %427 = vmatpush2.xpose.msra.mxu0 0.0
    %428 = vmatprep.subr.mxu0 0.0
    %429 = vmatpush2.xpose.msra.mxu0 0.0
    %430 = vmatprep.subr.mxu0 0.0
    %431 = vmatpush2.xpose.msra.mxu0 0.0
    %432 = vmatprep.subr.mxu0 0.0
    %433 = vmatpush2.xpose.msra.mxu0 0.0
    %434 = vmatprep.subr.mxu0 0.0
    %435 = vmatpush2.xpose.msra.mxu0 0.0
    %436 = vmatprep.subr.mxu0 0.0
    %437 = vmatpush2.xpose.msra.mxu0 0.0
    %438 = vmatprep.subr.mxu0 0.0
    %439 = vmatpush2.xpose.msra.mxu0 0.0
    %440 = vmatprep.subr.mxu0 0.0
    %441 = vmatpush2.xpose.msra.mxu0 0.0
    %442 = vmatprep.subr.mxu0 0.0
    %443 = vmatpush2.xpose.msra.mxu0 0.0
    %444 = vmatprep.subr.mxu0 0.0
    %445 = vmatpush2.xpose.msra.mxu0 0.0
    %446 = vmatprep.subr.mxu0 0.0
    %447 = vmatpush2.xpose.msra.mxu0 0.0
    %448 = vmatprep.subr.mxu0 0.0
    %449 = vmatpush2.xpose.msra.mxu0 0.0
    %450 = vmatprep.subr.mxu0 0.0
    %451 = vmatpush2.xpose.msra.mxu0 0.0
    %452 = vmatprep.subr.mxu0 0.0
    %453 = vmatpush2.xpose.msra.mxu0 0.0
    %454 = vmatprep.subr.mxu0 0.0
    %455 = vmatpush2.xpose.msra.mxu0 0.0
    %456 = vmatprep.subr.mxu0 0.0
    %457 = vmatpush2.xpose.msra.mxu0 0.0
    %458 = vmatprep.mubr.f32.mxu0 0.0
    %459 = vmatmul.mubr.f32.gmra.mxu0 %v390
    %v460 = vpop.f32.mrf.mxu0
    %v461 = vadd.f32 0.0, %v460
    %v462 = vpop.f32.mrf.mxu0
    %463 = vdwg.mxu0
    %464 = vrot.lane.b32.xlu0 %v300, 112
    %v465 = vpop.permute.xlu0 %464
    %466 = vrot.lane.b32.xlu0 %v300, 80
    %v467 = vpop.permute.xlu0 %466
    %v468 = vsel %vm311, %v465, 0
    %v470 = vsel %vm311, %v467, 0
    %472 = vmatprep.subr.mxu0 0.0
    %473 = vmatpush1.xpose.msra.mxu0 0.0
    %474 = vmatprep.subr.mxu0 0.0
    %475 = vmatpush1.xpose.msra.mxu0 0.0
    %476 = vmatprep.subr.mxu0 0.0
    %477 = vmatpush1.xpose.msra.mxu0 0.0
    %478 = vmatprep.subr.mxu0 0.0
    %479 = vmatpush1.xpose.msra.mxu0 0.0
    %480 = vmatprep.subr.mxu0 0.0
    %481 = vmatpush1.xpose.msra.mxu0 0.0
    %482 = vmatprep.subr.mxu0 0.0
    %483 = vmatpush1.xpose.msra.mxu0 0.0
    %484 = vmatprep.subr.mxu0 0.0
    %485 = vmatpush1.xpose.msra.mxu0 0.0
    %486 = vmatprep.subr.mxu0 0.0
    %487 = vmatpush1.xpose.msra.mxu0 0.0
    %488 = vmatprep.subr.mxu0 0.0
    %489 = vmatpush1.xpose.msra.mxu0 0.0
    %490 = vmatprep.subr.mxu0 0.0
    %491 = vmatpush1.xpose.msra.mxu0 0.0
    %492 = vmatprep.subr.mxu0 0.0
    %493 = vmatpush1.xpose.msra.mxu0 0.0
    %494 = vmatprep.subr.mxu0 0.0
    %495 = vmatpush1.xpose.msra.mxu0 0.0
    %496 = vmatprep.subr.mxu0 0.0
    %497 = vmatpush1.xpose.msra.mxu0 0.0
    %498 = vmatprep.subr.mxu0 0.0
    %499 = vmatpush1.xpose.msra.mxu0 0.0
    %500 = vmatprep.subr.mxu0 0.0
    %501 = vmatpush1.xpose.msra.mxu0 0.0
    %502 = vmatprep.subr.mxu0 0.0
    %503 = vmatpush1.xpose.msra.mxu0 %v470
    %504 = vmatprep.subr.mxu0 0.0
    %505 = vmatpush2.xpose.msra.mxu0 0.0
    %506 = vmatprep.subr.mxu0 0.0
    %507 = vmatpush2.xpose.msra.mxu0 0.0
    %508 = vmatprep.subr.mxu0 0.0
    %509 = vmatpush2.xpose.msra.mxu0 0.0
    %510 = vmatprep.subr.mxu0 0.0
    %511 = vmatpush2.xpose.msra.mxu0 0.0
    %512 = vmatprep.subr.mxu0 0.0
    %513 = vmatpush2.xpose.msra.mxu0 0.0
    %514 = vmatprep.subr.mxu0 0.0
    %515 = vmatpush2.xpose.msra.mxu0 0.0
    %516 = vmatprep.subr.mxu0 0.0
    %517 = vmatpush2.xpose.msra.mxu0 0.0
    %518 = vmatprep.subr.mxu0 0.0
    %519 = vmatpush2.xpose.msra.mxu0 0.0
    %520 = vmatprep.subr.mxu0 0.0
    %521 = vmatpush2.xpose.msra.mxu0 0.0
    %522 = vmatprep.subr.mxu0 0.0
    %523 = vmatpush2.xpose.msra.mxu0 0.0
    %524 = vmatprep.subr.mxu0 0.0
    %525 = vmatpush2.xpose.msra.mxu0 0.0
    %526 = vmatprep.subr.mxu0 0.0
    %527 = vmatpush2.xpose.msra.mxu0 0.0
    %528 = vmatprep.subr.mxu0 0.0
    %529 = vmatpush2.xpose.msra.mxu0 0.0
    %530 = vmatprep.subr.mxu0 0.0
    %531 = vmatpush2.xpose.msra.mxu0 0.0
    %532 = vmatprep.subr.mxu0 0.0
    %533 = vmatpush2.xpose.msra.mxu0 0.0
    %534 = vmatprep.subr.mxu0 0.0
    %535 = vmatpush2.xpose.msra.mxu0 0.0
    %536 = vmatprep.mubr.f32.mxu0 0.0
    %537 = vmatmul.mubr.f32.gmra.mxu0 %v468
    %v538 = vpop.f32.mrf.mxu0
    %v539 = vadd.f32 0.0, %v538
    %v540 = vpop.f32.mrf.mxu0
    %541 = vdwg.mxu0
    %542 = vrot.lane.b32.xlu0 %v300, 104
    %v543 = vpop.permute.xlu0 %542
    %544 = vrot.lane.b32.xlu0 %v300, 72
    %v545 = vpop.permute.xlu0 %544
    %v546 = vsel %vm311, %v543, 0
    %v548 = vsel %vm311, %v545, 0
    %550 = vmatprep.subr.mxu0 0.0
    %551 = vmatpush1.xpose.msra.mxu0 0.0
    %552 = vmatprep.subr.mxu0 0.0
    %553 = vmatpush1.xpose.msra.mxu0 0.0
    %554 = vmatprep.subr.mxu0 0.0
    %555 = vmatpush1.xpose.msra.mxu0 0.0
    %556 = vmatprep.subr.mxu0 0.0
    %557 = vmatpush1.xpose.msra.mxu0 0.0
    %558 = vmatprep.subr.mxu0 0.0
    %559 = vmatpush1.xpose.msra.mxu0 0.0
    %560 = vmatprep.subr.mxu0 0.0
    %561 = vmatpush1.xpose.msra.mxu0 0.0
    %562 = vmatprep.subr.mxu0 0.0
    %563 = vmatpush1.xpose.msra.mxu0 0.0
    %564 = vmatprep.subr.mxu0 0.0
    %565 = vmatpush1.xpose.msra.mxu0 0.0
    %566 = vmatprep.subr.mxu0 0.0
    %567 = vmatpush1.xpose.msra.mxu0 0.0
    %568 = vmatprep.subr.mxu0 0.0
    %569 = vmatpush1.xpose.msra.mxu0 0.0
    %570 = vmatprep.subr.mxu0 0.0
    %571 = vmatpush1.xpose.msra.mxu0 0.0
    %572 = vmatprep.subr.mxu0 0.0
    %573 = vmatpush1.xpose.msra.mxu0 0.0
    %574 = vmatprep.subr.mxu0 0.0
    %575 = vmatpush1.xpose.msra.mxu0 0.0
    %576 = vmatprep.subr.mxu0 0.0
    %577 = vmatpush1.xpose.msra.mxu0 0.0
    %578 = vmatprep.subr.mxu0 0.0
    %579 = vmatpush1.xpose.msra.mxu0 0.0
    %580 = vmatprep.subr.mxu0 0.0
    %581 = vmatpush1.xpose.msra.mxu0 %v548
    %582 = vmatprep.subr.mxu0 0.0
    %583 = vmatpush2.xpose.msra.mxu0 0.0
    %584 = vmatprep.subr.mxu0 0.0
    %585 = vmatpush2.xpose.msra.mxu0 0.0
    %586 = vmatprep.subr.mxu0 0.0
    %587 = vmatpush2.xpose.msra.mxu0 0.0
    %588 = vmatprep.subr.mxu0 0.0
    %589 = vmatpush2.xpose.msra.mxu0 0.0
    %590 = vmatprep.subr.mxu0 0.0
    %591 = vmatpush2.xpose.msra.mxu0 0.0
    %592 = vmatprep.subr.mxu0 0.0
    %593 = vmatpush2.xpose.msra.mxu0 0.0
    %594 = vmatprep.subr.mxu0 0.0
    %595 = vmatpush2.xpose.msra.mxu0 0.0
    %596 = vmatprep.subr.mxu0 0.0
    %597 = vmatpush2.xpose.msra.mxu0 0.0
    %598 = vmatprep.subr.mxu0 0.0
    %599 = vmatpush2.xpose.msra.mxu0 0.0
    %600 = vmatprep.subr.mxu0 0.0
    %601 = vmatpush2.xpose.msra.mxu0 0.0
    %602 = vmatprep.subr.mxu0 0.0
    %603 = vmatpush2.xpose.msra.mxu0 0.0
    %604 = vmatprep.subr.mxu0 0.0
    %605 = vmatpush2.xpose.msra.mxu0 0.0
    %606 = vmatprep.subr.mxu0 0.0
    %607 = vmatpush2.xpose.msra.mxu0 0.0
    %608 = vmatprep.subr.mxu0 0.0
    %609 = vmatpush2.xpose.msra.mxu0 0.0
    %610 = vmatprep.subr.mxu0 0.0
    %611 = vmatpush2.xpose.msra.mxu0 0.0
    %612 = vmatprep.subr.mxu0 0.0
    %613 = vmatpush2.xpose.msra.mxu0 0.0
    %614 = vmatprep.mubr.f32.mxu0 0.0
    %615 = vmatmul.mubr.f32.gmra.mxu0 %v546
    %v616 = vpop.f32.mrf.mxu0
    %v617 = vadd.f32 0.0, %v616
    %v618 = vpop.f32.mrf.mxu0
    %619 = vdwg.mxu0
    %621 = vrot.lane.b32.xlu0 %v461, 8
    %v622 = vpop.permute.xlu0 %621
    %625 = vrot.lane.b32.xlu0 %v539, 16
    %v626 = vpop.permute.xlu0 %625
    %629 = vrot.lane.b32.xlu0 %v617, 24
    %v630 = vpop.permute.xlu0 %629
    %v632 = vsel %vm311, %v383, %v622
    %v633 = vsel %vm133, %v632, %v626
    %vm634 = vcmask 195584
    %v635 = vsel %vm634, %v633, %v630
    %v636 = vsel %vm226, %v635, -inf
    %637 = vmax.xlane.f32.xlu0 %v636
    %v638 = vpop.xlane.xlu0 %637
    %v639 = vsub.f32 %v635, %v638
    %v640 = vmul.f32 %v639, 1.442695
    %v641 = vpow.pop %v640
    %v642 = vld [vmem:[#allocation6] sm:$0xff]
    %v643 = vld [vmem:[#allocation6 + $0x8] sm:$0xff]
    %v644 = vld [vmem:[#allocation6 + $0x10] sm:$0xff]
    %v645 = vld [vmem:[#allocation6 + $0x18] sm:$0xff]
    %v647 = vsel %vm226, %v641, 0
    %649 = vmatprep.subr.mxu0 0.0
    %650 = vmatpush1.msra.mxu0 0.0
    %651 = vmatprep.subr.mxu0 0.0
    %652 = vmatpush1.msra.mxu0 0.0
    %653 = vmatprep.subr.mxu0 0.0
    %654 = vmatpush1.msra.mxu0 0.0
    %655 = vmatprep.subr.mxu0 0.0
    %656 = vmatpush1.msra.mxu0 0.0
    %657 = vmatprep.subr.mxu0 0.0
    %658 = vmatpush1.msra.mxu0 0.0
    %659 = vmatprep.subr.mxu0 0.0
    %660 = vmatpush1.msra.mxu0 0.0
    %661 = vmatprep.subr.mxu0 0.0
    %662 = vmatpush1.msra.mxu0 0.0
    %663 = vmatprep.subr.mxu0 0.0
    %664 = vmatpush1.msra.mxu0 0.0
    %665 = vmatprep.subr.mxu0 0.0
    %666 = vmatpush1.msra.mxu0 0.0
    %667 = vmatprep.subr.mxu0 0.0
    %668 = vmatpush1.msra.mxu0 0.0
    %669 = vmatprep.subr.mxu0 0.0
    %670 = vmatpush1.msra.mxu0 0.0
    %671 = vmatprep.subr.mxu0 0.0
    %672 = vmatpush1.msra.mxu0 0.0
    %673 = vmatprep.subr.mxu0 0.0
    %674 = vmatpush1.msra.mxu0 %v645
    %675 = vmatprep.subr.mxu0 0.0
    %676 = vmatpush1.msra.mxu0 %v644
    %677 = vmatprep.subr.mxu0 0.0
    %678 = vmatpush1.msra.mxu0 %v643
    %679 = vmatprep.subr.mxu0 0.0
    %680 = vmatpush1.msra.mxu0 %v642
    %681 = vmatprep.subr.mxu0 0.0
    %682 = vmatpush2.msra.mxu0 0.0
    %683 = vmatprep.subr.mxu0 0.0
    %684 = vmatpush2.msra.mxu0 0.0
    %685 = vmatprep.subr.mxu0 0.0
    %686 = vmatpush2.msra.mxu0 0.0
    %687 = vmatprep.subr.mxu0 0.0
    %688 = vmatpush2.msra.mxu0 0.0
    %689 = vmatprep.subr.mxu0 0.0
    %690 = vmatpush2.msra.mxu0 0.0
    %691 = vmatprep.subr.mxu0 0.0
    %692 = vmatpush2.msra.mxu0 0.0
    %693 = vmatprep.subr.mxu0 0.0
    %694 = vmatpush2.msra.mxu0 0.0
    %695 = vmatprep.subr.mxu0 0.0
    %696 = vmatpush2.msra.mxu0 0.0
    %697 = vmatprep.subr.mxu0 0.0
    %698 = vmatpush2.msra.mxu0 0.0
    %699 = vmatprep.subr.mxu0 0.0
    %700 = vmatpush2.msra.mxu0 0.0
    %701 = vmatprep.subr.mxu0 0.0
    %702 = vmatpush2.msra.mxu0 0.0
    %703 = vmatprep.subr.mxu0 0.0
    %704 = vmatpush2.msra.mxu0 0.0
    %705 = vmatprep.subr.mxu0 0.0
    %706 = vmatpush2.msra.mxu0 0.0
    %707 = vmatprep.subr.mxu0 0.0
    %708 = vmatpush2.msra.mxu0 0.0
    %709 = vmatprep.subr.mxu0 0.0
    %710 = vmatpush2.msra.mxu0 0.0
    %711 = vmatprep.subr.mxu0 0.0
    %712 = vmatpush2.msra.mxu0 0.0
    %713 = vmatprep.mubr.f32.mxu0 0.0
    %714 = vmatmul.mubr.f32.gmra.mxu0 %v647
    %v715 = vpop.f32.mrf.mxu0
    %v716 = vadd.f32 0.0, %v715
    %v717 = vpop.f32.mrf.mxu0
    %718 = vdwg.mxu0
    %v719 = vrcp.pop %v716
    %v720 = vmul.f32 %v641, %v719
    %721 = vrot.lane.b32.xlu0 %v300, 64
    %v722 = vpop.permute.xlu0 %721
    %v725 = vsel %vm311, %v720, 0
    %727 = vmatprep.subr.mxu0 0.0
    %728 = vmatpush1.msra.mxu0 0.0
    %729 = vmatprep.subr.mxu0 0.0
    %730 = vmatpush1.msra.mxu0 0.0
    %731 = vmatprep.subr.mxu0 0.0
    %732 = vmatpush1.msra.mxu0 0.0
    %733 = vmatprep.subr.mxu0 0.0
    %734 = vmatpush1.msra.mxu0 0.0
    %735 = vmatprep.subr.mxu0 0.0
    %736 = vmatpush1.msra.mxu0 0.0
    %737 = vmatprep.subr.mxu0 0.0
    %738 = vmatpush1.msra.mxu0 0.0
    %739 = vmatprep.subr.mxu0 0.0
    %740 = vmatpush1.msra.mxu0 0.0
    %741 = vmatprep.subr.mxu0 0.0
    %742 = vmatpush1.msra.mxu0 0.0
    %743 = vmatprep.subr.mxu0 0.0
    %744 = vmatpush1.msra.mxu0 0.0
    %745 = vmatprep.subr.mxu0 0.0
    %746 = vmatpush1.msra.mxu0 0.0
    %747 = vmatprep.subr.mxu0 0.0
    %748 = vmatpush1.msra.mxu0 0.0
    %749 = vmatprep.subr.mxu0 0.0
    %750 = vmatpush1.msra.mxu0 0.0
    %751 = vmatprep.subr.mxu0 0.0
    %752 = vmatpush1.msra.mxu0 0.0
    %753 = vmatprep.subr.mxu0 0.0
    %754 = vmatpush1.msra.mxu0 0.0
    %755 = vmatprep.subr.mxu0 0.0
    %756 = vmatpush1.msra.mxu0 0.0
    %757 = vmatprep.subr.mxu0 0.0
    %758 = vmatpush1.msra.mxu0 %v722
    %759 = vmatprep.subr.mxu0 0.0
    %760 = vmatpush2.msra.mxu0 0.0
    %761 = vmatprep.subr.mxu0 0.0
    %762 = vmatpush2.msra.mxu0 0.0
    %763 = vmatprep.subr.mxu0 0.0
    %764 = vmatpush2.msra.mxu0 0.0
    %765 = vmatprep.subr.mxu0 0.0
    %766 = vmatpush2.msra.mxu0 0.0
    %767 = vmatprep.subr.mxu0 0.0
    %768 = vmatpush2.msra.mxu0 0.0
    %769 = vmatprep.subr.mxu0 0.0
    %770 = vmatpush2.msra.mxu0 0.0
    %771 = vmatprep.subr.mxu0 0.0
    %772 = vmatpush2.msra.mxu0 0.0
    %773 = vmatprep.subr.mxu0 0.0
    %774 = vmatpush2.msra.mxu0 0.0
    %775 = vmatprep.subr.mxu0 0.0
    %776 = vmatpush2.msra.mxu0 0.0
    %777 = vmatprep.subr.mxu0 0.0
    %778 = vmatpush2.msra.mxu0 0.0
    %779 = vmatprep.subr.mxu0 0.0
    %780 = vmatpush2.msra.mxu0 0.0
    %781 = vmatprep.subr.mxu0 0.0
    %782 = vmatpush2.msra.mxu0 0.0
    %783 = vmatprep.subr.mxu0 0.0
    %784 = vmatpush2.msra.mxu0 0.0
    %785 = vmatprep.subr.mxu0 0.0
    %786 = vmatpush2.msra.mxu0 0.0
    %787 = vmatprep.subr.mxu0 0.0
    %788 = vmatpush2.msra.mxu0 0.0
    %789 = vmatprep.subr.mxu0 0.0
    %790 = vmatpush2.msra.mxu0 0.0
    %791 = vmatprep.mubr.f32.mxu0 0.0
    %792 = vmatmul.mubr.f32.gmra.mxu0 %v725
    %v793 = vpop.f32.mrf.mxu0
    %v794 = vadd.f32 0.0, %v793
    %v795 = vpop.f32.mrf.mxu0
    %796 = vdwg.mxu0
    %797 = vrot.lane.b32.xlu0 %v720, 120
    %v798 = vpop.permute.xlu0 %797
    %799 = vrot.lane.b32.xlu0 %v300, 56
    %v800 = vpop.permute.xlu0 %799
    %v802 = vsel %vm311, %v798, 0
    %804 = vmatprep.subr.mxu0 0.0
    %805 = vmatpush1.msra.mxu0 0.0
    %806 = vmatprep.subr.mxu0 0.0
    %807 = vmatpush1.msra.mxu0 0.0
    %808 = vmatprep.subr.mxu0 0.0
    %809 = vmatpush1.msra.mxu0 0.0
    %810 = vmatprep.subr.mxu0 0.0
    %811 = vmatpush1.msra.mxu0 0.0
    %812 = vmatprep.subr.mxu0 0.0
    %813 = vmatpush1.msra.mxu0 0.0
    %814 = vmatprep.subr.mxu0 0.0
    %815 = vmatpush1.msra.mxu0 0.0
    %816 = vmatprep.subr.mxu0 0.0
    %817 = vmatpush1.msra.mxu0 0.0
    %818 = vmatprep.subr.mxu0 0.0
    %819 = vmatpush1.msra.mxu0 0.0
    %820 = vmatprep.subr.mxu0 0.0
    %821 = vmatpush1.msra.mxu0 0.0
    %822 = vmatprep.subr.mxu0 0.0
    %823 = vmatpush1.msra.mxu0 0.0
    %824 = vmatprep.subr.mxu0 0.0
    %825 = vmatpush1.msra.mxu0 0.0
    %826 = vmatprep.subr.mxu0 0.0
    %827 = vmatpush1.msra.mxu0 0.0
    %828 = vmatprep.subr.mxu0 0.0
    %829 = vmatpush1.msra.mxu0 0.0
    %830 = vmatprep.subr.mxu0 0.0
    %831 = vmatpush1.msra.mxu0 0.0
    %832 = vmatprep.subr.mxu0 0.0
    %833 = vmatpush1.msra.mxu0 0.0
    %834 = vmatprep.subr.mxu0 0.0
    %835 = vmatpush1.msra.mxu0 %v800
    %836 = vmatprep.subr.mxu0 0.0
    %837 = vmatpush2.msra.mxu0 0.0
    %838 = vmatprep.subr.mxu0 0.0
    %839 = vmatpush2.msra.mxu0 0.0
    %840 = vmatprep.subr.mxu0 0.0
    %841 = vmatpush2.msra.mxu0 0.0
    %842 = vmatprep.subr.mxu0 0.0
    %843 = vmatpush2.msra.mxu0 0.0
    %844 = vmatprep.subr.mxu0 0.0
    %845 = vmatpush2.msra.mxu0 0.0
    %846 = vmatprep.subr.mxu0 0.0
    %847 = vmatpush2.msra.mxu0 0.0
    %848 = vmatprep.subr.mxu0 0.0
    %849 = vmatpush2.msra.mxu0 0.0
    %850 = vmatprep.subr.mxu0 0.0
    %851 = vmatpush2.msra.mxu0 0.0
    %852 = vmatprep.subr.mxu0 0.0
    %853 = vmatpush2.msra.mxu0 0.0
    %854 = vmatprep.subr.mxu0 0.0
    %855 = vmatpush2.msra.mxu0 0.0
    %856 = vmatprep.subr.mxu0 0.0
    %857 = vmatpush2.msra.mxu0 0.0
    %858 = vmatprep.subr.mxu0 0.0
    %859 = vmatpush2.msra.mxu0 0.0
    %860 = vmatprep.subr.mxu0 0.0
    %861 = vmatpush2.msra.mxu0 0.0
    %862 = vmatprep.subr.mxu0 0.0
    %863 = vmatpush2.msra.mxu0 0.0
    %864 = vmatprep.subr.mxu0 0.0
    %865 = vmatpush2.msra.mxu0 0.0
    %866 = vmatprep.subr.mxu0 0.0
    %867 = vmatpush2.msra.mxu0 0.0
    %868 = vmatprep.mubr.f32.mxu0 0.0
    %869 = vmatmul.mubr.f32.gmra.mxu0 %v802
    %v870 = vpop.f32.mrf.mxu0
    %v871 = vadd.f32 0.0, %v870
    %v872 = vpop.f32.mrf.mxu0
    %873 = vdwg.mxu0
    %874 = vrot.lane.b32.xlu0 %v720, 112
    %v875 = vpop.permute.xlu0 %874
    %876 = vrot.lane.b32.xlu0 %v300, 48
    %v877 = vpop.permute.xlu0 %876
    %v879 = vsel %vm311, %v875, 0
    %881 = vmatprep.subr.mxu0 0.0
    %882 = vmatpush1.msra.mxu0 0.0
    %883 = vmatprep.subr.mxu0 0.0
    %884 = vmatpush1.msra.mxu0 0.0
    %885 = vmatprep.subr.mxu0 0.0
    %886 = vmatpush1.msra.mxu0 0.0
    %887 = vmatprep.subr.mxu0 0.0
    %888 = vmatpush1.msra.mxu0 0.0
    %889 = vmatprep.subr.mxu0 0.0
    %890 = vmatpush1.msra.mxu0 0.0
    %891 = vmatprep.subr.mxu0 0.0
    %892 = vmatpush1.msra.mxu0 0.0
    %893 = vmatprep.subr.mxu0 0.0
    %894 = vmatpush1.msra.mxu0 0.0
    %895 = vmatprep.subr.mxu0 0.0
    %896 = vmatpush1.msra.mxu0 0.0
    %897 = vmatprep.subr.mxu0 0.0
    %898 = vmatpush1.msra.mxu0 0.0
    %899 = vmatprep.subr.mxu0 0.0
    %900 = vmatpush1.msra.mxu0 0.0
    %901 = vmatprep.subr.mxu0 0.0
    %902 = vmatpush1.msra.mxu0 0.0
    %903 = vmatprep.subr.mxu0 0.0
    %904 = vmatpush1.msra.mxu0 0.0
    %905 = vmatprep.subr.mxu0 0.0
    %906 = vmatpush1.msra.mxu0 0.0
    %907 = vmatprep.subr.mxu0 0.0
    %908 = vmatpush1.msra.mxu0 0.0
    %909 = vmatprep.subr.mxu0 0.0
    %910 = vmatpush1.msra.mxu0 0.0
    %911 = vmatprep.subr.mxu0 0.0
    %912 = vmatpush1.msra.mxu0 %v877
    %913 = vmatprep.subr.mxu0 0.0
    %914 = vmatpush2.msra.mxu0 0.0
    %915 = vmatprep.subr.mxu0 0.0
    %916 = vmatpush2.msra.mxu0 0.0
    %917 = vmatprep.subr.mxu0 0.0
    %918 = vmatpush2.msra.mxu0 0.0
    %919 = vmatprep.subr.mxu0 0.0
    %920 = vmatpush2.msra.mxu0 0.0
    %921 = vmatprep.subr.mxu0 0.0
    %922 = vmatpush2.msra.mxu0 0.0
    %923 = vmatprep.subr.mxu0 0.0
    %924 = vmatpush2.msra.mxu0 0.0
    %925 = vmatprep.subr.mxu0 0.0
    %926 = vmatpush2.msra.mxu0 0.0
    %927 = vmatprep.subr.mxu0 0.0
    %928 = vmatpush2.msra.mxu0 0.0
    %929 = vmatprep.subr.mxu0 0.0
    %930 = vmatpush2.msra.mxu0 0.0
    %931 = vmatprep.subr.mxu0 0.0
    %932 = vmatpush2.msra.mxu0 0.0
    %933 = vmatprep.subr.mxu0 0.0
    %934 = vmatpush2.msra.mxu0 0.0
    %935 = vmatprep.subr.mxu0 0.0
    %936 = vmatpush2.msra.mxu0 0.0
    %937 = vmatprep.subr.mxu0 0.0
    %938 = vmatpush2.msra.mxu0 0.0
    %939 = vmatprep.subr.mxu0 0.0
    %940 = vmatpush2.msra.mxu0 0.0
    %941 = vmatprep.subr.mxu0 0.0
    %942 = vmatpush2.msra.mxu0 0.0
    %943 = vmatprep.subr.mxu0 0.0
    %944 = vmatpush2.msra.mxu0 0.0
    %945 = vmatprep.mubr.f32.mxu0 0.0
    %946 = vmatmul.mubr.f32.gmra.mxu0 %v879
    %v947 = vpop.f32.mrf.mxu0
    %v948 = vadd.f32 0.0, %v947
    %v949 = vpop.f32.mrf.mxu0
    %950 = vdwg.mxu0
    %951 = vrot.lane.b32.xlu0 %v720, 104
    %v952 = vpop.permute.xlu0 %951
    %953 = vrot.lane.b32.xlu0 %v300, 40
    %v954 = vpop.permute.xlu0 %953
    %v956 = vsel %vm311, %v952, 0
    %958 = vmatprep.subr.mxu0 0.0
    %959 = vmatpush1.msra.mxu0 0.0
    %960 = vmatprep.subr.mxu0 0.0
    %961 = vmatpush1.msra.mxu0 0.0
    %962 = vmatprep.subr.mxu0 0.0
    %963 = vmatpush1.msra.mxu0 0.0
    %964 = vmatprep.subr.mxu0 0.0
    %965 = vmatpush1.msra.mxu0 0.0
    %966 = vmatprep.subr.mxu0 0.0
    %967 = vmatpush1.msra.mxu0 0.0
    %968 = vmatprep.subr.mxu0 0.0
    %969 = vmatpush1.msra.mxu0 0.0
    %970 = vmatprep.subr.mxu0 0.0
    %971 = vmatpush1.msra.mxu0 0.0
    %972 = vmatprep.subr.mxu0 0.0
    %973 = vmatpush1.msra.mxu0 0.0
    %974 = vmatprep.subr.mxu0 0.0
    %975 = vmatpush1.msra.mxu0 0.0
    %976 = vmatprep.subr.mxu0 0.0
    %977 = vmatpush1.msra.mxu0 0.0
    %978 = vmatprep.subr.mxu0 0.0
    %979 = vmatpush1.msra.mxu0 0.0
    %980 = vmatprep.subr.mxu0 0.0
    %981 = vmatpush1.msra.mxu0 0.0
    %982 = vmatprep.subr.mxu0 0.0
    %983 = vmatpush1.msra.mxu0 0.0
    %984 = vmatprep.subr.mxu0 0.0
    %985 = vmatpush1.msra.mxu0 0.0
    %986 = vmatprep.subr.mxu0 0.0
    %987 = vmatpush1.msra.mxu0 0.0
    %988 = vmatprep.subr.mxu0 0.0
    %989 = vmatpush1.msra.mxu0 %v954
    %990 = vmatprep.subr.mxu0 0.0
    %991 = vmatpush2.msra.mxu0 0.0
    %992 = vmatprep.subr.mxu0 0.0
    %993 = vmatpush2.msra.mxu0 0.0
    %994 = vmatprep.subr.mxu0 0.0
    %995 = vmatpush2.msra.mxu0 0.0
    %996 = vmatprep.subr.mxu0 0.0
    %997 = vmatpush2.msra.mxu0 0.0
    %998 = vmatprep.subr.mxu0 0.0
    %999 = vmatpush2.msra.mxu0 0.0
    %1000 = vmatprep.subr.mxu0 0.0
    %1001 = vmatpush2.msra.mxu0 0.0
    %1002 = vmatprep.subr.mxu0 0.0
    %1003 = vmatpush2.msra.mxu0 0.0
    %1004 = vmatprep.subr.mxu0 0.0
    %1005 = vmatpush2.msra.mxu0 0.0
    %1006 = vmatprep.subr.mxu0 0.0
    %1007 = vmatpush2.msra.mxu0 0.0
    %1008 = vmatprep.subr.mxu0 0.0
    %1009 = vmatpush2.msra.mxu0 0.0
    %1010 = vmatprep.subr.mxu0 0.0
    %1011 = vmatpush2.msra.mxu0 0.0
    %1012 = vmatprep.subr.mxu0 0.0
    %1013 = vmatpush2.msra.mxu0 0.0
    %1014 = vmatprep.subr.mxu0 0.0
    %1015 = vmatpush2.msra.mxu0 0.0
    %1016 = vmatprep.subr.mxu0 0.0
    %1017 = vmatpush2.msra.mxu0 0.0
    %1018 = vmatprep.subr.mxu0 0.0
    %1019 = vmatpush2.msra.mxu0 0.0
    %1020 = vmatprep.subr.mxu0 0.0
    %1021 = vmatpush2.msra.mxu0 0.0
    %1022 = vmatprep.mubr.f32.mxu0 0.0
    %1023 = vmatmul.mubr.f32.gmra.mxu0 %v956
    %v1024 = vpop.f32.mrf.mxu0
    %v1025 = vadd.f32 0.0, %v1024
    %v1026 = vpop.f32.mrf.mxu0
    %1027 = vdwg.mxu0
    %1029 = vrot.lane.b32.xlu0 %v871, 8
    %v1030 = vpop.permute.xlu0 %1029
    %1033 = vrot.lane.b32.xlu0 %v948, 16
    %v1034 = vpop.permute.xlu0 %1033
    %1037 = vrot.lane.b32.xlu0 %v1025, 24
    %v1038 = vpop.permute.xlu0 %1037
    %v1040 = vsel %vm311, %v794, %v1030
    %v1041 = vsel %vm133, %v1040, %v1034
    %v1042 = vsel %vm634, %v1041, %v1038
    %1044 = vrot.lane.b32.xlu0 %v305, 96
    %v1045 = vpop.permute.xlu0 %1044
    %v1046 = vsel %vm311, %v305, 0
    %v1048 = vsel %vm311, %v1045, 0
    %1050 = vmatprep.subr.mxu0 0.0
    %1051 = vmatpush1.xpose.msra.mxu0 0.0
    %1052 = vmatprep.subr.mxu0 0.0
    %1053 = vmatpush1.xpose.msra.mxu0 0.0
    %1054 = vmatprep.subr.mxu0 0.0
    %1055 = vmatpush1.xpose.msra.mxu0 0.0
    %1056 = vmatprep.subr.mxu0 0.0
    %1057 = vmatpush1.xpose.msra.mxu0 0.0
    %1058 = vmatprep.subr.mxu0 0.0
    %1059 = vmatpush1.xpose.msra.mxu0 0.0
    %1060 = vmatprep.subr.mxu0 0.0
    %1061 = vmatpush1.xpose.msra.mxu0 0.0
    %1062 = vmatprep.subr.mxu0 0.0
    %1063 = vmatpush1.xpose.msra.mxu0 0.0
    %1064 = vmatprep.subr.mxu0 0.0
    %1065 = vmatpush1.xpose.msra.mxu0 0.0
    %1066 = vmatprep.subr.mxu0 0.0
    %1067 = vmatpush1.xpose.msra.mxu0 0.0
    %1068 = vmatprep.subr.mxu0 0.0
    %1069 = vmatpush1.xpose.msra.mxu0 0.0
    %1070 = vmatprep.subr.mxu0 0.0
    %1071 = vmatpush1.xpose.msra.mxu0 0.0
    %1072 = vmatprep.subr.mxu0 0.0
    %1073 = vmatpush1.xpose.msra.mxu0 0.0
    %1074 = vmatprep.subr.mxu0 0.0
    %1075 = vmatpush1.xpose.msra.mxu0 0.0
    %1076 = vmatprep.subr.mxu0 0.0
    %1077 = vmatpush1.xpose.msra.mxu0 0.0
    %1078 = vmatprep.subr.mxu0 0.0
    %1079 = vmatpush1.xpose.msra.mxu0 0.0
    %1080 = vmatprep.subr.mxu0 0.0
    %1081 = vmatpush1.xpose.msra.mxu0 %v1048
    %1082 = vmatprep.subr.mxu0 0.0
    %1083 = vmatpush2.xpose.msra.mxu0 0.0
    %1084 = vmatprep.subr.mxu0 0.0
    %1085 = vmatpush2.xpose.msra.mxu0 0.0
    %1086 = vmatprep.subr.mxu0 0.0
    %1087 = vmatpush2.xpose.msra.mxu0 0.0
    %1088 = vmatprep.subr.mxu0 0.0
    %1089 = vmatpush2.xpose.msra.mxu0 0.0
    %1090 = vmatprep.subr.mxu0 0.0
    %1091 = vmatpush2.xpose.msra.mxu0 0.0
    %1092 = vmatprep.subr.mxu0 0.0
    %1093 = vmatpush2.xpose.msra.mxu0 0.0
    %1094 = vmatprep.subr.mxu0 0.0
    %1095 = vmatpush2.xpose.msra.mxu0 0.0
    %1096 = vmatprep.subr.mxu0 0.0
    %1097 = vmatpush2.xpose.msra.mxu0 0.0
    %1098 = vmatprep.subr.mxu0 0.0
    %1099 = vmatpush2.xpose.msra.mxu0 0.0
    %1100 = vmatprep.subr.mxu0 0.0
    %1101 = vmatpush2.xpose.msra.mxu0 0.0
    %1102 = vmatprep.subr.mxu0 0.0
    %1103 = vmatpush2.xpose.msra.mxu0 0.0
    %1104 = vmatprep.subr.mxu0 0.0
    %1105 = vmatpush2.xpose.msra.mxu0 0.0
    %1106 = vmatprep.subr.mxu0 0.0
    %1107 = vmatpush2.xpose.msra.mxu0 0.0
    %1108 = vmatprep.subr.mxu0 0.0
    %1109 = vmatpush2.xpose.msra.mxu0 0.0
    %1110 = vmatprep.subr.mxu0 0.0
    %1111 = vmatpush2.xpose.msra.mxu0 0.0
    %1112 = vmatprep.subr.mxu0 0.0
    %1113 = vmatpush2.xpose.msra.mxu0 0.0
    %1114 = vmatprep.mubr.f32.mxu0 0.0
    %1115 = vmatmul.mubr.f32.gmra.mxu0 %v1046
    %v1116 = vpop.f32.mrf.mxu0
    %v1117 = vadd.f32 0.0, %v1116
    %v1118 = vpop.f32.mrf.mxu0
    %1119 = vdwg.mxu0
    %1120 = vrot.lane.b32.xlu0 %v305, 120
    %v1121 = vpop.permute.xlu0 %1120
    %1122 = vrot.lane.b32.xlu0 %v305, 88
    %v1123 = vpop.permute.xlu0 %1122
    %v1124 = vsel %vm311, %v1121, 0
    %v1126 = vsel %vm311, %v1123, 0
    %1128 = vmatprep.subr.mxu0 0.0
    %1129 = vmatpush1.xpose.msra.mxu0 0.0
    %1130 = vmatprep.subr.mxu0 0.0
    %1131 = vmatpush1.xpose.msra.mxu0 0.0
    %1132 = vmatprep.subr.mxu0 0.0
    %1133 = vmatpush1.xpose.msra.mxu0 0.0
    %1134 = vmatprep.subr.mxu0 0.0
    %1135 = vmatpush1.xpose.msra.mxu0 0.0
    %1136 = vmatprep.subr.mxu0 0.0
    %1137 = vmatpush1.xpose.msra.mxu0 0.0
    %1138 = vmatprep.subr.mxu0 0.0
    %1139 = vmatpush1.xpose.msra.mxu0 0.0
    %1140 = vmatprep.subr.mxu0 0.0
    %1141 = vmatpush1.xpose.msra.mxu0 0.0
    %1142 = vmatprep.subr.mxu0 0.0
    %1143 = vmatpush1.xpose.msra.mxu0 0.0
    %1144 = vmatprep.subr.mxu0 0.0
    %1145 = vmatpush1.xpose.msra.mxu0 0.0
    %1146 = vmatprep.subr.mxu0 0.0
    %1147 = vmatpush1.xpose.msra.mxu0 0.0
    %1148 = vmatprep.subr.mxu0 0.0
    %1149 = vmatpush1.xpose.msra.mxu0 0.0
    %1150 = vmatprep.subr.mxu0 0.0
    %1151 = vmatpush1.xpose.msra.mxu0 0.0
    %1152 = vmatprep.subr.mxu0 0.0
    %1153 = vmatpush1.xpose.msra.mxu0 0.0
    %1154 = vmatprep.subr.mxu0 0.0
    %1155 = vmatpush1.xpose.msra.mxu0 0.0
    %1156 = vmatprep.subr.mxu0 0.0
    %1157 = vmatpush1.xpose.msra.mxu0 0.0
    %1158 = vmatprep.subr.mxu0 0.0
    %1159 = vmatpush1.xpose.msra.mxu0 %v1126
    %1160 = vmatprep.subr.mxu0 0.0
    %1161 = vmatpush2.xpose.msra.mxu0 0.0
    %1162 = vmatprep.subr.mxu0 0.0
    %1163 = vmatpush2.xpose.msra.mxu0 0.0
    %1164 = vmatprep.subr.mxu0 0.0
    %1165 = vmatpush2.xpose.msra.mxu0 0.0
    %1166 = vmatprep.subr.mxu0 0.0
    %1167 = vmatpush2.xpose.msra.mxu0 0.0
    %1168 = vmatprep.subr.mxu0 0.0
    %1169 = vmatpush2.xpose.msra.mxu0 0.0
    %1170 = vmatprep.subr.mxu0 0.0
    %1171 = vmatpush2.xpose.msra.mxu0 0.0
    %1172 = vmatprep.subr.mxu0 0.0
    %1173 = vmatpush2.xpose.msra.mxu0 0.0
    %1174 = vmatprep.subr.mxu0 0.0
    %1175 = vmatpush2.xpose.msra.mxu0 0.0
    %1176 = vmatprep.subr.mxu0 0.0
    %1177 = vmatpush2.xpose.msra.mxu0 0.0
    %1178 = vmatprep.subr.mxu0 0.0
    %1179 = vmatpush2.xpose.msra.mxu0 0.0
    %1180 = vmatprep.subr.mxu0 0.0
    %1181 = vmatpush2.xpose.msra.mxu0 0.0
    %1182 = vmatprep.subr.mxu0 0.0
    %1183 = vmatpush2.xpose.msra.mxu0 0.0
    %1184 = vmatprep.subr.mxu0 0.0
    %1185 = vmatpush2.xpose.msra.mxu0 0.0
    %1186 = vmatprep.subr.mxu0 0.0
    %1187 = vmatpush2.xpose.msra.mxu0 0.0
    %1188 = vmatprep.subr.mxu0 0.0
    %1189 = vmatpush2.xpose.msra.mxu0 0.0
    %1190 = vmatprep.subr.mxu0 0.0
    %1191 = vmatpush2.xpose.msra.mxu0 0.0
    %1192 = vmatprep.mubr.f32.mxu0 0.0
    %1193 = vmatmul.mubr.f32.gmra.mxu0 %v1124
    %v1194 = vpop.f32.mrf.mxu0
    %v1195 = vadd.f32 0.0, %v1194
    %v1196 = vpop.f32.mrf.mxu0
    %1197 = vdwg.mxu0
    %1198 = vrot.lane.b32.xlu0 %v305, 112
    %v1199 = vpop.permute.xlu0 %1198
    %1200 = vrot.lane.b32.xlu0 %v305, 80
    %v1201 = vpop.permute.xlu0 %1200
    %v1202 = vsel %vm311, %v1199, 0
    %v1204 = vsel %vm311, %v1201, 0
    %1206 = vmatprep.subr.mxu0 0.0
    %1207 = vmatpush1.xpose.msra.mxu0 0.0
    %1208 = vmatprep.subr.mxu0 0.0
    %1209 = vmatpush1.xpose.msra.mxu0 0.0
    %1210 = vmatprep.subr.mxu0 0.0
    %1211 = vmatpush1.xpose.msra.mxu0 0.0
    %1212 = vmatprep.subr.mxu0 0.0
    %1213 = vmatpush1.xpose.msra.mxu0 0.0
    %1214 = vmatprep.subr.mxu0 0.0
    %1215 = vmatpush1.xpose.msra.mxu0 0.0
    %1216 = vmatprep.subr.mxu0 0.0
    %1217 = vmatpush1.xpose.msra.mxu0 0.0
    %1218 = vmatprep.subr.mxu0 0.0
    %1219 = vmatpush1.xpose.msra.mxu0 0.0
    %1220 = vmatprep.subr.mxu0 0.0
    %1221 = vmatpush1.xpose.msra.mxu0 0.0
    %1222 = vmatprep.subr.mxu0 0.0
    %1223 = vmatpush1.xpose.msra.mxu0 0.0
    %1224 = vmatprep.subr.mxu0 0.0
    %1225 = vmatpush1.xpose.msra.mxu0 0.0
    %1226 = vmatprep.subr.mxu0 0.0
    %1227 = vmatpush1.xpose.msra.mxu0 0.0
    %1228 = vmatprep.subr.mxu0 0.0
    %1229 = vmatpush1.xpose.msra.mxu0 0.0
    %1230 = vmatprep.subr.mxu0 0.0
    %1231 = vmatpush1.xpose.msra.mxu0 0.0
    %1232 = vmatprep.subr.mxu0 0.0
    %1233 = vmatpush1.xpose.msra.mxu0 0.0
    %1234 = vmatprep.subr.mxu0 0.0
    %1235 = vmatpush1.xpose.msra.mxu0 0.0
    %1236 = vmatprep.subr.mxu0 0.0
    %1237 = vmatpush1.xpose.msra.mxu0 %v1204
    %1238 = vmatprep.subr.mxu0 0.0
    %1239 = vmatpush2.xpose.msra.mxu0 0.0
    %1240 = vmatprep.subr.mxu0 0.0
    %1241 = vmatpush2.xpose.msra.mxu0 0.0
    %1242 = vmatprep.subr.mxu0 0.0
    %1243 = vmatpush2.xpose.msra.mxu0 0.0
    %1244 = vmatprep.subr.mxu0 0.0
    %1245 = vmatpush2.xpose.msra.mxu0 0.0
    %1246 = vmatprep.subr.mxu0 0.0
    %1247 = vmatpush2.xpose.msra.mxu0 0.0
    %1248 = vmatprep.subr.mxu0 0.0
    %1249 = vmatpush2.xpose.msra.mxu0 0.0
    %1250 = vmatprep.subr.mxu0 0.0
    %1251 = vmatpush2.xpose.msra.mxu0 0.0
    %1252 = vmatprep.subr.mxu0 0.0
    %1253 = vmatpush2.xpose.msra.mxu0 0.0
    %1254 = vmatprep.subr.mxu0 0.0
    %1255 = vmatpush2.xpose.msra.mxu0 0.0
    %1256 = vmatprep.subr.mxu0 0.0
    %1257 = vmatpush2.xpose.msra.mxu0 0.0
    %1258 = vmatprep.subr.mxu0 0.0
    %1259 = vmatpush2.xpose.msra.mxu0 0.0
    %1260 = vmatprep.subr.mxu0 0.0
    %1261 = vmatpush2.xpose.msra.mxu0 0.0
    %1262 = vmatprep.subr.mxu0 0.0
    %1263 = vmatpush2.xpose.msra.mxu0 0.0
    %1264 = vmatprep.subr.mxu0 0.0
    %1265 = vmatpush2.xpose.msra.mxu0 0.0
    %1266 = vmatprep.subr.mxu0 0.0
    %1267 = vmatpush2.xpose.msra.mxu0 0.0
    %1268 = vmatprep.subr.mxu0 0.0
    %1269 = vmatpush2.xpose.msra.mxu0 0.0
    %1270 = vmatprep.mubr.f32.mxu0 0.0
    %1271 = vmatmul.mubr.f32.gmra.mxu0 %v1202
    %v1272 = vpop.f32.mrf.mxu0
    %v1273 = vadd.f32 0.0, %v1272
    %v1274 = vpop.f32.mrf.mxu0
    %1275 = vdwg.mxu0
    %1276 = vrot.lane.b32.xlu0 %v305, 104
    %v1277 = vpop.permute.xlu0 %1276
    %1278 = vrot.lane.b32.xlu0 %v305, 72
    %v1279 = vpop.permute.xlu0 %1278
    %v1280 = vsel %vm311, %v1277, 0
    %v1282 = vsel %vm311, %v1279, 0
    %1284 = vmatprep.subr.mxu0 0.0
    %1285 = vmatpush1.xpose.msra.mxu0 0.0
    %1286 = vmatprep.subr.mxu0 0.0
    %1287 = vmatpush1.xpose.msra.mxu0 0.0
    %1288 = vmatprep.subr.mxu0 0.0
    %1289 = vmatpush1.xpose.msra.mxu0 0.0
    %1290 = vmatprep.subr.mxu0 0.0
    %1291 = vmatpush1.xpose.msra.mxu0 0.0
    %1292 = vmatprep.subr.mxu0 0.0
    %1293 = vmatpush1.xpose.msra.mxu0 0.0
    %1294 = vmatprep.subr.mxu0 0.0
    %1295 = vmatpush1.xpose.msra.mxu0 0.0
    %1296 = vmatprep.subr.mxu0 0.0
    %1297 = vmatpush1.xpose.msra.mxu0 0.0
    %1298 = vmatprep.subr.mxu0 0.0
    %1299 = vmatpush1.xpose.msra.mxu0 0.0
    %1300 = vmatprep.subr.mxu0 0.0
    %1301 = vmatpush1.xpose.msra.mxu0 0.0
    %1302 = vmatprep.subr.mxu0 0.0
    %1303 = vmatpush1.xpose.msra.mxu0 0.0
    %1304 = vmatprep.subr.mxu0 0.0
    %1305 = vmatpush1.xpose.msra.mxu0 0.0
    %1306 = vmatprep.subr.mxu0 0.0
    %1307 = vmatpush1.xpose.msra.mxu0 0.0
    %1308 = vmatprep.subr.mxu0 0.0
    %1309 = vmatpush1.xpose.msra.mxu0 0.0
    %1310 = vmatprep.subr.mxu0 0.0
    %1311 = vmatpush1.xpose.msra.mxu0 0.0
    %1312 = vmatprep.subr.mxu0 0.0
    %1313 = vmatpush1.xpose.msra.mxu0 0.0
    %1314 = vmatprep.subr.mxu0 0.0
    %1315 = vmatpush1.xpose.msra.mxu0 %v1282
    %1316 = vmatprep.subr.mxu0 0.0
    %1317 = vmatpush2.xpose.msra.mxu0 0.0
    %1318 = vmatprep.subr.mxu0 0.0
    %1319 = vmatpush2.xpose.msra.mxu0 0.0
    %1320 = vmatprep.subr.mxu0 0.0
    %1321 = vmatpush2.xpose.msra.mxu0 0.0
    %1322 = vmatprep.subr.mxu0 0.0
    %1323 = vmatpush2.xpose.msra.mxu0 0.0
    %1324 = vmatprep.subr.mxu0 0.0
    %1325 = vmatpush2.xpose.msra.mxu0 0.0
    %1326 = vmatprep.subr.mxu0 0.0
    %1327 = vmatpush2.xpose.msra.mxu0 0.0
    %1328 = vmatprep.subr.mxu0 0.0
    %1329 = vmatpush2.xpose.msra.mxu0 0.0
    %1330 = vmatprep.subr.mxu0 0.0
    %1331 = vmatpush2.xpose.msra.mxu0 0.0
    %1332 = vmatprep.subr.mxu0 0.0
    %1333 = vmatpush2.xpose.msra.mxu0 0.0
    %1334 = vmatprep.subr.mxu0 0.0
    %1335 = vmatpush2.xpose.msra.mxu0 0.0
    %1336 = vmatprep.subr.mxu0 0.0
    %1337 = vmatpush2.xpose.msra.mxu0 0.0
    %1338 = vmatprep.subr.mxu0 0.0
    %1339 = vmatpush2.xpose.msra.mxu0 0.0
    %1340 = vmatprep.subr.mxu0 0.0
    %1341 = vmatpush2.xpose.msra.mxu0 0.0
    %1342 = vmatprep.subr.mxu0 0.0
    %1343 = vmatpush2.xpose.msra.mxu0 0.0
    %1344 = vmatprep.subr.mxu0 0.0
    %1345 = vmatpush2.xpose.msra.mxu0 0.0
    %1346 = vmatprep.subr.mxu0 0.0
    %1347 = vmatpush2.xpose.msra.mxu0 0.0
    %1348 = vmatprep.mubr.f32.mxu0 0.0
    %1349 = vmatmul.mubr.f32.gmra.mxu0 %v1280
    %v1350 = vpop.f32.mrf.mxu0
    %v1351 = vadd.f32 0.0, %v1350
    %v1352 = vpop.f32.mrf.mxu0
    %1353 = vdwg.mxu0
    %1355 = vrot.lane.b32.xlu0 %v1195, 8
    %v1356 = vpop.permute.xlu0 %1355
    %1359 = vrot.lane.b32.xlu0 %v1273, 16
    %v1360 = vpop.permute.xlu0 %1359
    %1363 = vrot.lane.b32.xlu0 %v1351, 24
    %v1364 = vpop.permute.xlu0 %1363
    %v1366 = vsel %vm311, %v1117, %v1356
    %v1367 = vsel %vm133, %v1366, %v1360
    %v1368 = vsel %vm634, %v1367, %v1364
    %v1369 = vsel %vm226, %v1368, -inf
    %1370 = vmax.xlane.f32.xlu0 %v1369
    %v1371 = vpop.xlane.xlu0 %1370
    %v1372 = vsub.f32 %v1368, %v1371
    %v1373 = vmul.f32 %v1372, 1.442695
    %v1374 = vpow.pop %v1373
    %v1376 = vsel %vm226, %v1374, 0
    %1378 = vmatprep.subr.mxu0 0.0
    %1379 = vmatpush1.msra.mxu0 0.0
    %1380 = vmatprep.subr.mxu0 0.0
    %1381 = vmatpush1.msra.mxu0 0.0
    %1382 = vmatprep.subr.mxu0 0.0
    %1383 = vmatpush1.msra.mxu0 0.0
    %1384 = vmatprep.subr.mxu0 0.0
    %1385 = vmatpush1.msra.mxu0 0.0
    %1386 = vmatprep.subr.mxu0 0.0
    %1387 = vmatpush1.msra.mxu0 0.0
    %1388 = vmatprep.subr.mxu0 0.0
    %1389 = vmatpush1.msra.mxu0 0.0
    %1390 = vmatprep.subr.mxu0 0.0
    %1391 = vmatpush1.msra.mxu0 0.0
    %1392 = vmatprep.subr.mxu0 0.0
    %1393 = vmatpush1.msra.mxu0 0.0
    %1394 = vmatprep.subr.mxu0 0.0
    %1395 = vmatpush1.msra.mxu0 0.0
    %1396 = vmatprep.subr.mxu0 0.0
    %1397 = vmatpush1.msra.mxu0 0.0
    %1398 = vmatprep.subr.mxu0 0.0
    %1399 = vmatpush1.msra.mxu0 0.0
    %1400 = vmatprep.subr.mxu0 0.0
    %1401 = vmatpush1.msra.mxu0 0.0
    %1402 = vmatprep.subr.mxu0 0.0
    %1403 = vmatpush1.msra.mxu0 %v645
    %1404 = vmatprep.subr.mxu0 0.0
    %1405 = vmatpush1.msra.mxu0 %v644
    %1406 = vmatprep.subr.mxu0 0.0
    %1407 = vmatpush1.msra.mxu0 %v643
    %1408 = vmatprep.subr.mxu0 0.0
    %1409 = vmatpush1.msra.mxu0 %v642
    %1410 = vmatprep.subr.mxu0 0.0
    %1411 = vmatpush2.msra.mxu0 0.0
    %1412 = vmatprep.subr.mxu0 0.0
    %1413 = vmatpush2.msra.mxu0 0.0
    %1414 = vmatprep.subr.mxu0 0.0
    %1415 = vmatpush2.msra.mxu0 0.0
    %1416 = vmatprep.subr.mxu0 0.0
    %1417 = vmatpush2.msra.mxu0 0.0
    %1418 = vmatprep.subr.mxu0 0.0
    %1419 = vmatpush2.msra.mxu0 0.0
    %1420 = vmatprep.subr.mxu0 0.0
    %1421 = vmatpush2.msra.mxu0 0.0
    %1422 = vmatprep.subr.mxu0 0.0
    %1423 = vmatpush2.msra.mxu0 0.0
    %1424 = vmatprep.subr.mxu0 0.0
    %1425 = vmatpush2.msra.mxu0 0.0
    %1426 = vmatprep.subr.mxu0 0.0
    %1427 = vmatpush2.msra.mxu0 0.0
    %1428 = vmatprep.subr.mxu0 0.0
    %1429 = vmatpush2.msra.mxu0 0.0
    %1430 = vmatprep.subr.mxu0 0.0
    %1431 = vmatpush2.msra.mxu0 0.0
    %1432 = vmatprep.subr.mxu0 0.0
    %1433 = vmatpush2.msra.mxu0 0.0
    %1434 = vmatprep.subr.mxu0 0.0
    %1435 = vmatpush2.msra.mxu0 0.0
    %1436 = vmatprep.subr.mxu0 0.0
    %1437 = vmatpush2.msra.mxu0 0.0
    %1438 = vmatprep.subr.mxu0 0.0
    %1439 = vmatpush2.msra.mxu0 0.0
    %1440 = vmatprep.subr.mxu0 0.0
    %1441 = vmatpush2.msra.mxu0 0.0
    %1442 = vmatprep.mubr.f32.mxu0 0.0
    %1443 = vmatmul.mubr.f32.gmra.mxu0 %v1376
    %v1444 = vpop.f32.mrf.mxu0
    %v1445 = vadd.f32 0.0, %v1444
    %v1446 = vpop.f32.mrf.mxu0
    %1447 = vdwg.mxu0
    %v1448 = vrcp.pop %v1445
    %v1449 = vmul.f32 %v1374, %v1448
    %1450 = vrot.lane.b32.xlu0 %v305, 64
    %v1451 = vpop.permute.xlu0 %1450
    %v1454 = vsel %vm311, %v1449, 0
    %1456 = vmatprep.subr.mxu0 0.0
    %1457 = vmatpush1.msra.mxu0 0.0
    %1458 = vmatprep.subr.mxu0 0.0
    %1459 = vmatpush1.msra.mxu0 0.0
    %1460 = vmatprep.subr.mxu0 0.0
    %1461 = vmatpush1.msra.mxu0 0.0
    %1462 = vmatprep.subr.mxu0 0.0
    %1463 = vmatpush1.msra.mxu0 0.0
    %1464 = vmatprep.subr.mxu0 0.0
    %1465 = vmatpush1.msra.mxu0 0.0
    %1466 = vmatprep.subr.mxu0 0.0
    %1467 = vmatpush1.msra.mxu0 0.0
    %1468 = vmatprep.subr.mxu0 0.0
    %1469 = vmatpush1.msra.mxu0 0.0
    %1470 = vmatprep.subr.mxu0 0.0
    %1471 = vmatpush1.msra.mxu0 0.0
    %1472 = vmatprep.subr.mxu0 0.0
    %1473 = vmatpush1.msra.mxu0 0.0
    %1474 = vmatprep.subr.mxu0 0.0
    %1475 = vmatpush1.msra.mxu0 0.0
    %1476 = vmatprep.subr.mxu0 0.0
    %1477 = vmatpush1.msra.mxu0 0.0
    %1478 = vmatprep.subr.mxu0 0.0
    %1479 = vmatpush1.msra.mxu0 0.0
    %1480 = vmatprep.subr.mxu0 0.0
    %1481 = vmatpush1.msra.mxu0 0.0
    %1482 = vmatprep.subr.mxu0 0.0
    %1483 = vmatpush1.msra.mxu0 0.0
    %1484 = vmatprep.subr.mxu0 0.0
    %1485 = vmatpush1.msra.mxu0 0.0
    %1486 = vmatprep.subr.mxu0 0.0
    %1487 = vmatpush1.msra.mxu0 %v1451
    %1488 = vmatprep.subr.mxu0 0.0
    %1489 = vmatpush2.msra.mxu0 0.0
    %1490 = vmatprep.subr.mxu0 0.0
    %1491 = vmatpush2.msra.mxu0 0.0
    %1492 = vmatprep.subr.mxu0 0.0
    %1493 = vmatpush2.msra.mxu0 0.0
    %1494 = vmatprep.subr.mxu0 0.0
    %1495 = vmatpush2.msra.mxu0 0.0
    %1496 = vmatprep.subr.mxu0 0.0
    %1497 = vmatpush2.msra.mxu0 0.0
    %1498 = vmatprep.subr.mxu0 0.0
    %1499 = vmatpush2.msra.mxu0 0.0
    %1500 = vmatprep.subr.mxu0 0.0
    %1501 = vmatpush2.msra.mxu0 0.0
    %1502 = vmatprep.subr.mxu0 0.0
    %1503 = vmatpush2.msra.mxu0 0.0
    %1504 = vmatprep.subr.mxu0 0.0
    %1505 = vmatpush2.msra.mxu0 0.0
    %1506 = vmatprep.subr.mxu0 0.0
    %1507 = vmatpush2.msra.mxu0 0.0
    %1508 = vmatprep.subr.mxu0 0.0
    %1509 = vmatpush2.msra.mxu0 0.0
    %1510 = vmatprep.subr.mxu0 0.0
    %1511 = vmatpush2.msra.mxu0 0.0
    %1512 = vmatprep.subr.mxu0 0.0
    %1513 = vmatpush2.msra.mxu0 0.0
    %1514 = vmatprep.subr.mxu0 0.0
    %1515 = vmatpush2.msra.mxu0 0.0
    %1516 = vmatprep.subr.mxu0 0.0
    %1517 = vmatpush2.msra.mxu0 0.0
    %1518 = vmatprep.subr.mxu0 0.0
    %1519 = vmatpush2.msra.mxu0 0.0
    %1520 = vmatprep.mubr.f32.mxu0 0.0
    %1521 = vmatmul.mubr.f32.gmra.mxu0 %v1454
    %v1522 = vpop.f32.mrf.mxu0
    %v1523 = vadd.f32 0.0, %v1522
    %v1524 = vpop.f32.mrf.mxu0
    %1525 = vdwg.mxu0
    %1526 = vrot.lane.b32.xlu0 %v1449, 120
    %v1527 = vpop.permute.xlu0 %1526
    %1528 = vrot.lane.b32.xlu0 %v305, 56
    %v1529 = vpop.permute.xlu0 %1528
    %v1531 = vsel %vm311, %v1527, 0
    %1533 = vmatprep.subr.mxu0 0.0
    %1534 = vmatpush1.msra.mxu0 0.0
    %1535 = vmatprep.subr.mxu0 0.0
    %1536 = vmatpush1.msra.mxu0 0.0
    %1537 = vmatprep.subr.mxu0 0.0
    %1538 = vmatpush1.msra.mxu0 0.0
    %1539 = vmatprep.subr.mxu0 0.0
    %1540 = vmatpush1.msra.mxu0 0.0
    %1541 = vmatprep.subr.mxu0 0.0
    %1542 = vmatpush1.msra.mxu0 0.0
    %1543 = vmatprep.subr.mxu0 0.0
    %1544 = vmatpush1.msra.mxu0 0.0
    %1545 = vmatprep.subr.mxu0 0.0
    %1546 = vmatpush1.msra.mxu0 0.0
    %1547 = vmatprep.subr.mxu0 0.0
    %1548 = vmatpush1.msra.mxu0 0.0
    %1549 = vmatprep.subr.mxu0 0.0
    %1550 = vmatpush1.msra.mxu0 0.0
    %1551 = vmatprep.subr.mxu0 0.0
    %1552 = vmatpush1.msra.mxu0 0.0
    %1553 = vmatprep.subr.mxu0 0.0
    %1554 = vmatpush1.msra.mxu0 0.0
    %1555 = vmatprep.subr.mxu0 0.0
    %1556 = vmatpush1.msra.mxu0 0.0
    %1557 = vmatprep.subr.mxu0 0.0
    %1558 = vmatpush1.msra.mxu0 0.0
    %1559 = vmatprep.subr.mxu0 0.0
    %1560 = vmatpush1.msra.mxu0 0.0
    %1561 = vmatprep.subr.mxu0 0.0
    %1562 = vmatpush1.msra.mxu0 0.0
    %1563 = vmatprep.subr.mxu0 0.0
    %1564 = vmatpush1.msra.mxu0 %v1529
    %1565 = vmatprep.subr.mxu0 0.0
    %1566 = vmatpush2.msra.mxu0 0.0
    %1567 = vmatprep.subr.mxu0 0.0
    %1568 = vmatpush2.msra.mxu0 0.0
    %1569 = vmatprep.subr.mxu0 0.0
    %1570 = vmatpush2.msra.mxu0 0.0
    %1571 = vmatprep.subr.mxu0 0.0
    %1572 = vmatpush2.msra.mxu0 0.0
    %1573 = vmatprep.subr.mxu0 0.0
    %1574 = vmatpush2.msra.mxu0 0.0
    %1575 = vmatprep.subr.mxu0 0.0
    %1576 = vmatpush2.msra.mxu0 0.0
    %1577 = vmatprep.subr.mxu0 0.0
    %1578 = vmatpush2.msra.mxu0 0.0
    %1579 = vmatprep.subr.mxu0 0.0
    %1580 = vmatpush2.msra.mxu0 0.0
    %1581 = vmatprep.subr.mxu0 0.0
    %1582 = vmatpush2.msra.mxu0 0.0
    %1583 = vmatprep.subr.mxu0 0.0
    %1584 = vmatpush2.msra.mxu0 0.0
    %1585 = vmatprep.subr.mxu0 0.0
    %1586 = vmatpush2.msra.mxu0 0.0
    %1587 = vmatprep.subr.mxu0 0.0
    %1588 = vmatpush2.msra.mxu0 0.0
    %1589 = vmatprep.subr.mxu0 0.0
    %1590 = vmatpush2.msra.mxu0 0.0
    %1591 = vmatprep.subr.mxu0 0.0
    %1592 = vmatpush2.msra.mxu0 0.0
    %1593 = vmatprep.subr.mxu0 0.0
    %1594 = vmatpush2.msra.mxu0 0.0
    %1595 = vmatprep.subr.mxu0 0.0
    %1596 = vmatpush2.msra.mxu0 0.0
    %1597 = vmatprep.mubr.f32.mxu0 0.0
    %1598 = vmatmul.mubr.f32.gmra.mxu0 %v1531
    %v1599 = vpop.f32.mrf.mxu0
    %v1600 = vadd.f32 0.0, %v1599
    %v1601 = vpop.f32.mrf.mxu0
    %1602 = vdwg.mxu0
    %1603 = vrot.lane.b32.xlu0 %v1449, 112
    %v1604 = vpop.permute.xlu0 %1603
    %1605 = vrot.lane.b32.xlu0 %v305, 48
    %v1606 = vpop.permute.xlu0 %1605
    %v1608 = vsel %vm311, %v1604, 0
    %1610 = vmatprep.subr.mxu0 0.0
    %1611 = vmatpush1.msra.mxu0 0.0
    %1612 = vmatprep.subr.mxu0 0.0
    %1613 = vmatpush1.msra.mxu0 0.0
    %1614 = vmatprep.subr.mxu0 0.0
    %1615 = vmatpush1.msra.mxu0 0.0
    %1616 = vmatprep.subr.mxu0 0.0
    %1617 = vmatpush1.msra.mxu0 0.0
    %1618 = vmatprep.subr.mxu0 0.0
    %1619 = vmatpush1.msra.mxu0 0.0
    %1620 = vmatprep.subr.mxu0 0.0
    %1621 = vmatpush1.msra.mxu0 0.0
    %1622 = vmatprep.subr.mxu0 0.0
    %1623 = vmatpush1.msra.mxu0 0.0
    %1624 = vmatprep.subr.mxu0 0.0
    %1625 = vmatpush1.msra.mxu0 0.0
    %1626 = vmatprep.subr.mxu0 0.0
    %1627 = vmatpush1.msra.mxu0 0.0
    %1628 = vmatprep.subr.mxu0 0.0
    %1629 = vmatpush1.msra.mxu0 0.0
    %1630 = vmatprep.subr.mxu0 0.0
    %1631 = vmatpush1.msra.mxu0 0.0
    %1632 = vmatprep.subr.mxu0 0.0
    %1633 = vmatpush1.msra.mxu0 0.0
    %1634 = vmatprep.subr.mxu0 0.0
    %1635 = vmatpush1.msra.mxu0 0.0
    %1636 = vmatprep.subr.mxu0 0.0
    %1637 = vmatpush1.msra.mxu0 0.0
    %1638 = vmatprep.subr.mxu0 0.0
    %1639 = vmatpush1.msra.mxu0 0.0
    %1640 = vmatprep.subr.mxu0 0.0
    %1641 = vmatpush1.msra.mxu0 %v1606
    %1642 = vmatprep.subr.mxu0 0.0
    %1643 = vmatpush2.msra.mxu0 0.0
    %1644 = vmatprep.subr.mxu0 0.0
    %1645 = vmatpush2.msra.mxu0 0.0
    %1646 = vmatprep.subr.mxu0 0.0
    %1647 = vmatpush2.msra.mxu0 0.0
    %1648 = vmatprep.subr.mxu0 0.0
    %1649 = vmatpush2.msra.mxu0 0.0
    %1650 = vmatprep.subr.mxu0 0.0
    %1651 = vmatpush2.msra.mxu0 0.0
    %1652 = vmatprep.subr.mxu0 0.0
    %1653 = vmatpush2.msra.mxu0 0.0
    %1654 = vmatprep.subr.mxu0 0.0
    %1655 = vmatpush2.msra.mxu0 0.0
    %1656 = vmatprep.subr.mxu0 0.0
    %1657 = vmatpush2.msra.mxu0 0.0
    %1658 = vmatprep.subr.mxu0 0.0
    %1659 = vmatpush2.msra.mxu0 0.0
    %1660 = vmatprep.subr.mxu0 0.0
    %1661 = vmatpush2.msra.mxu0 0.0
    %1662 = vmatprep.subr.mxu0 0.0
    %1663 = vmatpush2.msra.mxu0 0.0
    %1664 = vmatprep.subr.mxu0 0.0
    %1665 = vmatpush2.msra.mxu0 0.0
    %1666 = vmatprep.subr.mxu0 0.0
    %1667 = vmatpush2.msra.mxu0 0.0
    %1668 = vmatprep.subr.mxu0 0.0
    %1669 = vmatpush2.msra.mxu0 0.0
    %1670 = vmatprep.subr.mxu0 0.0
    %1671 = vmatpush2.msra.mxu0 0.0
    %1672 = vmatprep.subr.mxu0 0.0
    %1673 = vmatpush2.msra.mxu0 0.0
    %1674 = vmatprep.mubr.f32.mxu0 0.0
    %1675 = vmatmul.mubr.f32.gmra.mxu0 %v1608
    %v1676 = vpop.f32.mrf.mxu0
    %v1677 = vadd.f32 0.0, %v1676
    %v1678 = vpop.f32.mrf.mxu0
    %1679 = vdwg.mxu0
    %1680 = vrot.lane.b32.xlu0 %v1449, 104
    %v1681 = vpop.permute.xlu0 %1680
    %1682 = vrot.lane.b32.xlu0 %v305, 40
    %v1683 = vpop.permute.xlu0 %1682
    %v1685 = vsel %vm311, %v1681, 0
    %1687 = vmatprep.subr.mxu0 0.0
    %1688 = vmatpush1.msra.mxu0 0.0
    %1689 = vmatprep.subr.mxu0 0.0
    %1690 = vmatpush1.msra.mxu0 0.0
    %1691 = vmatprep.subr.mxu0 0.0
    %1692 = vmatpush1.msra.mxu0 0.0
    %1693 = vmatprep.subr.mxu0 0.0
    %1694 = vmatpush1.msra.mxu0 0.0
    %1695 = vmatprep.subr.mxu0 0.0
    %1696 = vmatpush1.msra.mxu0 0.0
    %1697 = vmatprep.subr.mxu0 0.0
    %1698 = vmatpush1.msra.mxu0 0.0
    %1699 = vmatprep.subr.mxu0 0.0
    %1700 = vmatpush1.msra.mxu0 0.0
    %1701 = vmatprep.subr.mxu0 0.0
    %1702 = vmatpush1.msra.mxu0 0.0
    %1703 = vmatprep.subr.mxu0 0.0
    %1704 = vmatpush1.msra.mxu0 0.0
    %1705 = vmatprep.subr.mxu0 0.0
    %1706 = vmatpush1.msra.mxu0 0.0
    %1707 = vmatprep.subr.mxu0 0.0
    %1708 = vmatpush1.msra.mxu0 0.0
    %1709 = vmatprep.subr.mxu0 0.0
    %1710 = vmatpush1.msra.mxu0 0.0
    %1711 = vmatprep.subr.mxu0 0.0
    %1712 = vmatpush1.msra.mxu0 0.0
    %1713 = vmatprep.subr.mxu0 0.0
    %1714 = vmatpush1.msra.mxu0 0.0
    %1715 = vmatprep.subr.mxu0 0.0
    %1716 = vmatpush1.msra.mxu0 0.0
    %1717 = vmatprep.subr.mxu0 0.0
    %1718 = vmatpush1.msra.mxu0 %v1683
    %1719 = vmatprep.subr.mxu0 0.0
    %1720 = vmatpush2.msra.mxu0 0.0
    %1721 = vmatprep.subr.mxu0 0.0
    %1722 = vmatpush2.msra.mxu0 0.0
    %1723 = vmatprep.subr.mxu0 0.0
    %1724 = vmatpush2.msra.mxu0 0.0
    %1725 = vmatprep.subr.mxu0 0.0
    %1726 = vmatpush2.msra.mxu0 0.0
    %1727 = vmatprep.subr.mxu0 0.0
    %1728 = vmatpush2.msra.mxu0 0.0
    %1729 = vmatprep.subr.mxu0 0.0
    %1730 = vmatpush2.msra.mxu0 0.0
    %1731 = vmatprep.subr.mxu0 0.0
    %1732 = vmatpush2.msra.mxu0 0.0
    %1733 = vmatprep.subr.mxu0 0.0
    %1734 = vmatpush2.msra.mxu0 0.0
    %1735 = vmatprep.subr.mxu0 0.0
    %1736 = vmatpush2.msra.mxu0 0.0
    %1737 = vmatprep.subr.mxu0 0.0
    %1738 = vmatpush2.msra.mxu0 0.0
    %1739 = vmatprep.subr.mxu0 0.0
    %1740 = vmatpush2.msra.mxu0 0.0
    %1741 = vmatprep.subr.mxu0 0.0
    %1742 = vmatpush2.msra.mxu0 0.0
    %1743 = vmatprep.subr.mxu0 0.0
    %1744 = vmatpush2.msra.mxu0 0.0
    %1745 = vmatprep.subr.mxu0 0.0
    %1746 = vmatpush2.msra.mxu0 0.0
    %1747 = vmatprep.subr.mxu0 0.0
    %1748 = vmatpush2.msra.mxu0 0.0
    %1749 = vmatprep.subr.mxu0 0.0
    %1750 = vmatpush2.msra.mxu0 0.0
    %1751 = vmatprep.mubr.f32.mxu0 0.0
    %1752 = vmatmul.mubr.f32.gmra.mxu0 %v1685
    %v1753 = vpop.f32.mrf.mxu0
    %v1754 = vadd.f32 0.0, %v1753
    %v1755 = vpop.f32.mrf.mxu0
    %1756 = vdwg.mxu0
    %1758 = vrot.lane.b32.xlu0 %v1600, 8
    %v1759 = vpop.permute.xlu0 %1758
    %1762 = vrot.lane.b32.xlu0 %v1677, 16
    %v1763 = vpop.permute.xlu0 %1762
    %1766 = vrot.lane.b32.xlu0 %v1754, 24
    %v1767 = vpop.permute.xlu0 %1766
    %v1769 = vsel %vm311, %v1523, %v1759
    %v1770 = vsel %vm133, %v1769, %v1763
    %v1771 = vsel %vm634, %v1770, %v1767
    %v1772 = vld [vmem:[%s6] sm:$0xff]
    %v1773 = vld [vmem:[%s6 + $0x8] sm:$0xff]
    %v1774 = vld [vmem:[%s6 + $0x10] sm:$0xff]
    %v1775 = vld [vmem:[%s6 + $0x18] sm:$0xff]
    %v1776 = vld [vmem:[%s7] sm:$0x1]
    %v1778 = vlaneseq
    %v1779 = vshrl.u32 %v1778, 7
    %v1780 = vsub.s32 0, %v1779
    %v1781 = vrot.slane %v1776, %v1780
    %v1784 = vsel %vm226, %v1042, 0
    %v1787 = vsel %vm226, %v1771, 0
    %1789 = vmatprep.subr.mxu0 0.0
    %1790 = vmatpush1.msra.mxu0 0.0
    %1791 = vmatprep.subr.mxu0 0.0
    %1792 = vmatpush1.msra.mxu0 0.0
    %1793 = vmatprep.subr.mxu0 0.0
    %1794 = vmatpush1.msra.mxu0 0.0
    %1795 = vmatprep.subr.mxu0 0.0
    %1796 = vmatpush1.msra.mxu0 0.0
    %1797 = vmatprep.subr.mxu0 0.0
    %1798 = vmatpush1.msra.mxu0 0.0
    %1799 = vmatprep.subr.mxu0 0.0
    %1800 = vmatpush1.msra.mxu0 0.0
    %1801 = vmatprep.subr.mxu0 0.0
    %1802 = vmatpush1.msra.mxu0 0.0
    %1803 = vmatprep.subr.mxu0 0.0
    %1804 = vmatpush1.msra.mxu0 0.0
    %1805 = vmatprep.subr.mxu0 0.0
    %1806 = vmatpush1.msra.mxu0 0.0
    %1807 = vmatprep.subr.mxu0 0.0
    %1808 = vmatpush1.msra.mxu0 0.0
    %1809 = vmatprep.subr.mxu0 0.0
    %1810 = vmatpush1.msra.mxu0 0.0
    %1811 = vmatprep.subr.mxu0 0.0
    %1812 = vmatpush1.msra.mxu0 0.0
    %1813 = vmatprep.subr.mxu0 0.0
    %1814 = vmatpush1.msra.mxu0 %v1775
    %1815 = vmatprep.subr.mxu0 0.0
    %1816 = vmatpush1.msra.mxu0 %v1774
    %1817 = vmatprep.subr.mxu0 0.0
    %1818 = vmatpush1.msra.mxu0 %v1773
    %1819 = vmatprep.subr.mxu0 0.0
    %1820 = vmatpush1.msra.mxu0 %v1772
    %1821 = vmatprep.subr.mxu0 0.0
    %1822 = vmatpush2.msra.mxu0 0.0
    %1823 = vmatprep.subr.mxu0 0.0
    %1824 = vmatpush2.msra.mxu0 0.0
    %1825 = vmatprep.subr.mxu0 0.0
    %1826 = vmatpush2.msra.mxu0 0.0
    %1827 = vmatprep.subr.mxu0 0.0
    %1828 = vmatpush2.msra.mxu0 0.0
    %1829 = vmatprep.subr.mxu0 0.0
    %1830 = vmatpush2.msra.mxu0 0.0
    %1831 = vmatprep.subr.mxu0 0.0
    %1832 = vmatpush2.msra.mxu0 0.0
    %1833 = vmatprep.subr.mxu0 0.0
    %1834 = vmatpush2.msra.mxu0 0.0
    %1835 = vmatprep.subr.mxu0 0.0
    %1836 = vmatpush2.msra.mxu0 0.0
    %1837 = vmatprep.subr.mxu0 0.0
    %1838 = vmatpush2.msra.mxu0 0.0
    %1839 = vmatprep.subr.mxu0 0.0
    %1840 = vmatpush2.msra.mxu0 0.0
    %1841 = vmatprep.subr.mxu0 0.0
    %1842 = vmatpush2.msra.mxu0 0.0
    %1843 = vmatprep.subr.mxu0 0.0
    %1844 = vmatpush2.msra.mxu0 0.0
    %1845 = vmatprep.subr.mxu0 0.0
    %1846 = vmatpush2.msra.mxu0 0.0
    %1847 = vmatprep.subr.mxu0 0.0
    %1848 = vmatpush2.msra.mxu0 0.0
    %1849 = vmatprep.subr.mxu0 0.0
    %1850 = vmatpush2.msra.mxu0 0.0
    %1851 = vmatprep.subr.mxu0 0.0
    %1852 = vmatpush2.msra.mxu0 0.0
    %1853 = vmatprep.mubr.f32.mxu0 0.0
    %1854 = vmatmul.mubr.f32.gmra.mxu0 %v1784
    %v1855 = vpop.f32.mrf.mxu0
    %v1856 = vadd.f32 %v1781, %v1855
    %v1857 = vpop.f32.mrf.mxu0
    %1858 = vmatprep.mubr.f32.mxu0 0.0
    %1859 = vmatmul.mubr.f32.gmra.mxu0 %v1787
    %v1860 = vpop.f32.mrf.mxu0
    %v1861 = vadd.f32 %v1781, %v1860
    %v1862 = vpop.f32.mrf.mxu0
    %1863 = vdwg.mxu0
    %v1864 = vld [vmem:[%s8] sm:$0xff]
    %v1865 = vld [vmem:[%s8 + $0x8] sm:$0xff]
    %v1866 = vld [vmem:[%s8 + $0x10] sm:$0xff]
    %v1867 = vld [vmem:[%s8 + $0x18] sm:$0xff]
    %v1868 = vld [vmem:[%s9] sm:$0x1]
    %v1870 = vlaneseq
    %v1871 = vshrl.u32 %v1870, 7
    %v1872 = vsub.s32 0, %v1871
    %v1873 = vrot.slane %v1868, %v1872
    %v1876 = vsel %vm226, %v1856, 0
    %v1879 = vsel %vm226, %v1861, 0
    %1881 = vmatprep.subr.mxu0 0.0
    %1882 = vmatpush1.msra.mxu0 0.0
    %1883 = vmatprep.subr.mxu0 0.0
    %1884 = vmatpush1.msra.mxu0 0.0
    %1885 = vmatprep.subr.mxu0 0.0
    %1886 = vmatpush1.msra.mxu0 0.0
    %1887 = vmatprep.subr.mxu0 0.0
    %1888 = vmatpush1.msra.mxu0 0.0
    %1889 = vmatprep.subr.mxu0 0.0
    %1890 = vmatpush1.msra.mxu0 0.0
    %1891 = vmatprep.subr.mxu0 0.0
    %1892 = vmatpush1.msra.mxu0 0.0
    %1893 = vmatprep.subr.mxu0 0.0
    %1894 = vmatpush1.msra.mxu0 0.0
    %1895 = vmatprep.subr.mxu0 0.0
    %1896 = vmatpush1.msra.mxu0 0.0
    %1897 = vmatprep.subr.mxu0 0.0
    %1898 = vmatpush1.msra.mxu0 0.0
    %1899 = vmatprep.subr.mxu0 0.0
    %1900 = vmatpush1.msra.mxu0 0.0
    %1901 = vmatprep.subr.mxu0 0.0
    %1902 = vmatpush1.msra.mxu0 0.0
    %1903 = vmatprep.subr.mxu0 0.0
    %1904 = vmatpush1.msra.mxu0 0.0
    %1905 = vmatprep.subr.mxu0 0.0
    %1906 = vmatpush1.msra.mxu0 %v1867
    %1907 = vmatprep.subr.mxu0 0.0
    %1908 = vmatpush1.msra.mxu0 %v1866
    %1909 = vmatprep.subr.mxu0 0.0
    %1910 = vmatpush1.msra.mxu0 %v1865
    %1911 = vmatprep.subr.mxu0 0.0
    %1912 = vmatpush1.msra.mxu0 %v1864
    %1913 = vmatprep.subr.mxu0 0.0
    %1914 = vmatpush2.msra.mxu0 0.0
    %1915 = vmatprep.subr.mxu0 0.0
    %1916 = vmatpush2.msra.mxu0 0.0
    %1917 = vmatprep.subr.mxu0 0.0
    %1918 = vmatpush2.msra.mxu0 0.0
    %1919 = vmatprep.subr.mxu0 0.0
    %1920 = vmatpush2.msra.mxu0 0.0
    %1921 = vmatprep.subr.mxu0 0.0
    %1922 = vmatpush2.msra.mxu0 0.0
    %1923 = vmatprep.subr.mxu0 0.0
    %1924 = vmatpush2.msra.mxu0 0.0
    %1925 = vmatprep.subr.mxu0 0.0
    %1926 = vmatpush2.msra.mxu0 0.0
    %1927 = vmatprep.subr.mxu0 0.0
    %1928 = vmatpush2.msra.mxu0 0.0
    %1929 = vmatprep.subr.mxu0 0.0
    %1930 = vmatpush2.msra.mxu0 0.0
    %1931 = vmatprep.subr.mxu0 0.0
    %1932 = vmatpush2.msra.mxu0 0.0
    %1933 = vmatprep.subr.mxu0 0.0
    %1934 = vmatpush2.msra.mxu0 0.0
    %1935 = vmatprep.subr.mxu0 0.0
    %1936 = vmatpush2.msra.mxu0 0.0
    %1937 = vmatprep.subr.mxu0 0.0
    %1938 = vmatpush2.msra.mxu0 0.0
    %1939 = vmatprep.subr.mxu0 0.0
    %1940 = vmatpush2.msra.mxu0 0.0
    %1941 = vmatprep.subr.mxu0 0.0
    %1942 = vmatpush2.msra.mxu0 0.0
    %1943 = vmatprep.subr.mxu0 0.0
    %1944 = vmatpush2.msra.mxu0 0.0
    %1945 = vmatprep.mubr.f32.mxu0 0.0
    %1946 = vmatmul.mubr.f32.gmra.mxu0 %v1876
    %v1947 = vpop.f32.mrf.mxu0
    %v1948 = vadd.f32 %v1873, %v1947
    %v1949 = vpop.f32.mrf.mxu0
    %1950 = vmatprep.mubr.f32.mxu0 0.0
    %1951 = vmatmul.mubr.f32.gmra.mxu0 %v1879
    %v1952 = vpop.f32.mrf.mxu0
    %v1953 = vadd.f32 %v1873, %v1952
    %v1954 = vpop.f32.mrf.mxu0
    %1955 = vdwg.mxu0
    %v1956 = vmax.f32 %v1948, 0.0
    %v1957 = vmax.f32 %v1953, 0.0
    %v1958 = vld [vmem:[%s10] sm:$0xff]
    %v1959 = vld [vmem:[%s10 + $0x8] sm:$0xff]
    %v1960 = vld [vmem:[%s10 + $0x10] sm:$0xff]
    %v1961 = vld [vmem:[%s10 + $0x18] sm:$0xff]
    %v1962 = vld [vmem:[%s10 + $0x20] sm:$0xff]
    %v1963 = vld [vmem:[%s10 + $0x28] sm:$0xff]
    %v1964 = vld [vmem:[%s10 + $0x30] sm:$0xff]
    %v1965 = vld [vmem:[%s10 + $0x38] sm:$0xff]
    %v1966 = vld [vmem:[#allocation7] sm:$0x1]
    %v1968 = vlaneseq
    %v1969 = vshrl.u32 %v1968, 7
    %v1970 = vsub.s32 0, %v1969
    %v1971 = vrot.slane %v1966, %v1970
    %vm1973 = vcmask 523264
    %v1975 = vsel %vm1973, %v1956, 0
    %v1978 = vsel %vm1973, %v1957, 0
    %1980 = vmatprep.subr.mxu0 0.0
    %1981 = vmatpush1.msra.mxu0 0.0
    %1982 = vmatprep.subr.mxu0 0.0
    %1983 = vmatpush1.msra.mxu0 0.0
    %1984 = vmatprep.subr.mxu0 0.0
    %1985 = vmatpush1.msra.mxu0 0.0
    %1986 = vmatprep.subr.mxu0 0.0
    %1987 = vmatpush1.msra.mxu0 0.0
    %1988 = vmatprep.subr.mxu0 0.0
    %1989 = vmatpush1.msra.mxu0 0.0
    %1990 = vmatprep.subr.mxu0 0.0
    %1991 = vmatpush1.msra.mxu0 0.0
    %1992 = vmatprep.subr.mxu0 0.0
    %1993 = vmatpush1.msra.mxu0 0.0
    %1994 = vmatprep.subr.mxu0 0.0
    %1995 = vmatpush1.msra.mxu0 0.0
    %1996 = vmatprep.subr.mxu0 0.0
    %1997 = vmatpush1.msra.mxu0 %v1965
    %1998 = vmatprep.subr.mxu0 0.0
    %1999 = vmatpush1.msra.mxu0 %v1964
    %2000 = vmatprep.subr.mxu0 0.0
    %2001 = vmatpush1.msra.mxu0 %v1963
    %2002 = vmatprep.subr.mxu0 0.0
    %2003 = vmatpush1.msra.mxu0 %v1962
    %2004 = vmatprep.subr.mxu0 0.0
    %2005 = vmatpush1.msra.mxu0 %v1961
    %2006 = vmatprep.subr.mxu0 0.0
    %2007 = vmatpush1.msra.mxu0 %v1960
    %2008 = vmatprep.subr.mxu0 0.0
    %2009 = vmatpush1.msra.mxu0 %v1959
    %2010 = vmatprep.subr.mxu0 0.0
    %2011 = vmatpush1.msra.mxu0 %v1958
    %2012 = vmatprep.subr.mxu0 0.0
    %2013 = vmatpush2.msra.mxu0 0.0
    %2014 = vmatprep.subr.mxu0 0.0
    %2015 = vmatpush2.msra.mxu0 0.0
    %2016 = vmatprep.subr.mxu0 0.0
    %2017 = vmatpush2.msra.mxu0 0.0
    %2018 = vmatprep.subr.mxu0 0.0
    %2019 = vmatpush2.msra.mxu0 0.0
    %2020 = vmatprep.subr.mxu0 0.0
    %2021 = vmatpush2.msra.mxu0 0.0
    %2022 = vmatprep.subr.mxu0 0.0
    %2023 = vmatpush2.msra.mxu0 0.0
    %2024 = vmatprep.subr.mxu0 0.0
    %2025 = vmatpush2.msra.mxu0 0.0
    %2026 = vmatprep.subr.mxu0 0.0
    %2027 = vmatpush2.msra.mxu0 0.0
    %2028 = vmatprep.subr.mxu0 0.0
    %2029 = vmatpush2.msra.mxu0 0.0
    %2030 = vmatprep.subr.mxu0 0.0
    %2031 = vmatpush2.msra.mxu0 0.0
    %2032 = vmatprep.subr.mxu0 0.0
    %2033 = vmatpush2.msra.mxu0 0.0
    %2034 = vmatprep.subr.mxu0 0.0
    %2035 = vmatpush2.msra.mxu0 0.0
    %2036 = vmatprep.subr.mxu0 0.0
    %2037 = vmatpush2.msra.mxu0 0.0
    %2038 = vmatprep.subr.mxu0 0.0
    %2039 = vmatpush2.msra.mxu0 0.0
    %2040 = vmatprep.subr.mxu0 0.0
    %2041 = vmatpush2.msra.mxu0 0.0
    %2042 = vmatprep.subr.mxu0 0.0
    %2043 = vmatpush2.msra.mxu0 0.0
    %2044 = vmatprep.mubr.f32.mxu0 0.0
    %2045 = vmatmul.mubr.f32.gmra.mxu0 %v1975
    %v2046 = vpop.f32.mrf.mxu0
    %v2047 = vadd.f32 %v1971, %v2046
    %v2048 = vpop.f32.mrf.mxu0
    %2049 = vmatprep.mubr.f32.mxu0 0.0
    %2050 = vmatmul.mubr.f32.gmra.mxu0 %v1978
    %v2051 = vpop.f32.mrf.mxu0
    %v2052 = vadd.f32 %v1971, %v2051
    %v2053 = vpop.f32.mrf.mxu0
    %2054 = vdwg.mxu0
    %s2055 = scalar_lea.vmem %s4, 32
    %v2056 = vld [vmem:[%s2055] sm:$0xff]
    %v2057 = vld [vmem:[%s2055 + $0x8] sm:$0xff]
    %v2058 = vld [vmem:[%s2055 + $0x10] sm:$0xff]
    %v2059 = vld [vmem:[%s2055 + $0x18] sm:$0xff]
    %s2060 = scalar_lea.vmem %s5, 1
    %v2061 = vld [vmem:[%s2060] sm:$0x1]
    %v2063 = vlaneseq
    %v2064 = vshrl.u32 %v2063, 7
    %v2065 = vsub.s32 0, %v2064
    %v2066 = vrot.slane %v2061, %v2065
    %v2069 = vsel %vm226, %v2047, 0
    %v2072 = vsel %vm226, %v2052, 0
    %2074 = vmatprep.subr.mxu0 0.0
    %2075 = vmatpush1.msra.mxu0 0.0
    %2076 = vmatprep.subr.mxu0 0.0
    %2077 = vmatpush1.msra.mxu0 0.0
    %2078 = vmatprep.subr.mxu0 0.0
    %2079 = vmatpush1.msra.mxu0 0.0
    %2080 = vmatprep.subr.mxu0 0.0
    %2081 = vmatpush1.msra.mxu0 0.0
    %2082 = vmatprep.subr.mxu0 0.0
    %2083 = vmatpush1.msra.mxu0 0.0
    %2084 = vmatprep.subr.mxu0 0.0
    %2085 = vmatpush1.msra.mxu0 0.0
    %2086 = vmatprep.subr.mxu0 0.0
    %2087 = vmatpush1.msra.mxu0 0.0
    %2088 = vmatprep.subr.mxu0 0.0
    %2089 = vmatpush1.msra.mxu0 0.0
    %2090 = vmatprep.subr.mxu0 0.0
    %2091 = vmatpush1.msra.mxu0 0.0
    %2092 = vmatprep.subr.mxu0 0.0
    %2093 = vmatpush1.msra.mxu0 0.0
    %2094 = vmatprep.subr.mxu0 0.0
    %2095 = vmatpush1.msra.mxu0 0.0
    %2096 = vmatprep.subr.mxu0 0.0
    %2097 = vmatpush1.msra.mxu0 0.0
    %2098 = vmatprep.subr.mxu0 0.0
    %2099 = vmatpush1.msra.mxu0 %v2059
    %2100 = vmatprep.subr.mxu0 0.0
    %2101 = vmatpush1.msra.mxu0 %v2058
    %2102 = vmatprep.subr.mxu0 0.0
    %2103 = vmatpush1.msra.mxu0 %v2057
    %2104 = vmatprep.subr.mxu0 0.0
    %2105 = vmatpush1.msra.mxu0 %v2056
    %2106 = vmatprep.subr.mxu0 0.0
    %2107 = vmatpush2.msra.mxu0 0.0
    %2108 = vmatprep.subr.mxu0 0.0
    %2109 = vmatpush2.msra.mxu0 0.0
    %2110 = vmatprep.subr.mxu0 0.0
    %2111 = vmatpush2.msra.mxu0 0.0
    %2112 = vmatprep.subr.mxu0 0.0
    %2113 = vmatpush2.msra.mxu0 0.0
    %2114 = vmatprep.subr.mxu0 0.0
    %2115 = vmatpush2.msra.mxu0 0.0
    %2116 = vmatprep.subr.mxu0 0.0
    %2117 = vmatpush2.msra.mxu0 0.0
    %2118 = vmatprep.subr.mxu0 0.0
    %2119 = vmatpush2.msra.mxu0 0.0
    %2120 = vmatprep.subr.mxu0 0.0
    %2121 = vmatpush2.msra.mxu0 0.0
    %2122 = vmatprep.subr.mxu0 0.0
    %2123 = vmatpush2.msra.mxu0 0.0
    %2124 = vmatprep.subr.mxu0 0.0
    %2125 = vmatpush2.msra.mxu0 0.0
    %2126 = vmatprep.subr.mxu0 0.0
    %2127 = vmatpush2.msra.mxu0 0.0
    %2128 = vmatprep.subr.mxu0 0.0
    %2129 = vmatpush2.msra.mxu0 0.0
    %2130 = vmatprep.subr.mxu0 0.0
    %2131 = vmatpush2.msra.mxu0 0.0
    %2132 = vmatprep.subr.mxu0 0.0
    %2133 = vmatpush2.msra.mxu0 0.0
    %2134 = vmatprep.subr.mxu0 0.0
    %2135 = vmatpush2.msra.mxu0 0.0
    %2136 = vmatprep.subr.mxu0 0.0
    %2137 = vmatpush2.msra.mxu0 0.0
    %2138 = vmatprep.mubr.f32.mxu0 0.0
    %2139 = vmatmul.mubr.f32.gmra.mxu0 %v2069
    %v2140 = vpop.f32.mrf.mxu0
    %v2141 = vadd.f32 %v2066, %v2140
    %v2142 = vpop.f32.mrf.mxu0
    %2143 = vmatprep.mubr.f32.mxu0 0.0
    %2144 = vmatmul.mubr.f32.gmra.mxu0 %v2072
    %v2145 = vpop.f32.mrf.mxu0
    %v2146 = vadd.f32 %v2066, %v2145
    %v2147 = vpop.f32.mrf.mxu0
    %2148 = vdwg.mxu0
    %2150 = vrot.lane.b32.xlu0 %v2141, 96
    %v2151 = vpop.permute.xlu0 %2150
    %v2152 = vsel %vm311, %v2141, 0
    %v2154 = vsel %vm311, %v2151, 0
    %2156 = vmatprep.subr.mxu0 0.0
    %2157 = vmatpush1.xpose.msra.mxu0 0.0
    %2158 = vmatprep.subr.mxu0 0.0
    %2159 = vmatpush1.xpose.msra.mxu0 0.0
    %2160 = vmatprep.subr.mxu0 0.0
    %2161 = vmatpush1.xpose.msra.mxu0 0.0
    %2162 = vmatprep.subr.mxu0 0.0
    %2163 = vmatpush1.xpose.msra.mxu0 0.0
    %2164 = vmatprep.subr.mxu0 0.0
    %2165 = vmatpush1.xpose.msra.mxu0 0.0
    %2166 = vmatprep.subr.mxu0 0.0
    %2167 = vmatpush1.xpose.msra.mxu0 0.0
    %2168 = vmatprep.subr.mxu0 0.0
    %2169 = vmatpush1.xpose.msra.mxu0 0.0
    %2170 = vmatprep.subr.mxu0 0.0
    %2171 = vmatpush1.xpose.msra.mxu0 0.0
    %2172 = vmatprep.subr.mxu0 0.0
    %2173 = vmatpush1.xpose.msra.mxu0 0.0
    %2174 = vmatprep.subr.mxu0 0.0
    %2175 = vmatpush1.xpose.msra.mxu0 0.0
    %2176 = vmatprep.subr.mxu0 0.0
    %2177 = vmatpush1.xpose.msra.mxu0 0.0
    %2178 = vmatprep.subr.mxu0 0.0
    %2179 = vmatpush1.xpose.msra.mxu0 0.0
    %2180 = vmatprep.subr.mxu0 0.0
    %2181 = vmatpush1.xpose.msra.mxu0 0.0
    %2182 = vmatprep.subr.mxu0 0.0
    %2183 = vmatpush1.xpose.msra.mxu0 0.0
    %2184 = vmatprep.subr.mxu0 0.0
    %2185 = vmatpush1.xpose.msra.mxu0 0.0
    %2186 = vmatprep.subr.mxu0 0.0
    %2187 = vmatpush1.xpose.msra.mxu0 %v2154
    %2188 = vmatprep.subr.mxu0 0.0
    %2189 = vmatpush2.xpose.msra.mxu0 0.0
    %2190 = vmatprep.subr.mxu0 0.0
    %2191 = vmatpush2.xpose.msra.mxu0 0.0
    %2192 = vmatprep.subr.mxu0 0.0
    %2193 = vmatpush2.xpose.msra.mxu0 0.0
    %2194 = vmatprep.subr.mxu0 0.0
    %2195 = vmatpush2.xpose.msra.mxu0 0.0
    %2196 = vmatprep.subr.mxu0 0.0
    %2197 = vmatpush2.xpose.msra.mxu0 0.0
    %2198 = vmatprep.subr.mxu0 0.0
    %2199 = vmatpush2.xpose.msra.mxu0 0.0
    %2200 = vmatprep.subr.mxu0 0.0
    %2201 = vmatpush2.xpose.msra.mxu0 0.0
    %2202 = vmatprep.subr.mxu0 0.0
    %2203 = vmatpush2.xpose.msra.mxu0 0.0
    %2204 = vmatprep.subr.mxu0 0.0
    %2205 = vmatpush2.xpose.msra.mxu0 0.0
    %2206 = vmatprep.subr.mxu0 0.0
    %2207 = vmatpush2.xpose.msra.mxu0 0.0
    %2208 = vmatprep.subr.mxu0 0.0
    %2209 = vmatpush2.xpose.msra.mxu0 0.0
    %2210 = vmatprep.subr.mxu0 0.0
    %2211 = vmatpush2.xpose.msra.mxu0 0.0
    %2212 = vmatprep.subr.mxu0 0.0
    %2213 = vmatpush2.xpose.msra.mxu0 0.0
    %2214 = vmatprep.subr.mxu0 0.0
    %2215 = vmatpush2.xpose.msra.mxu0 0.0
    %2216 = vmatprep.subr.mxu0 0.0
    %2217 = vmatpush2.xpose.msra.mxu0 0.0
    %2218 = vmatprep.subr.mxu0 0.0
    %2219 = vmatpush2.xpose.msra.mxu0 0.0
    %2220 = vmatprep.mubr.f32.mxu0 0.0
    %2221 = vmatmul.mubr.f32.gmra.mxu0 %v2152
    %v2222 = vpop.f32.mrf.mxu0
    %v2223 = vadd.f32 0.0, %v2222
    %v2224 = vpop.f32.mrf.mxu0
    %2225 = vdwg.mxu0
    %2226 = vrot.lane.b32.xlu0 %v2141, 120
    %v2227 = vpop.permute.xlu0 %2226
    %2228 = vrot.lane.b32.xlu0 %v2141, 88
    %v2229 = vpop.permute.xlu0 %2228
    %v2230 = vsel %vm311, %v2227, 0
    %v2232 = vsel %vm311, %v2229, 0
    %2234 = vmatprep.subr.mxu0 0.0
    %2235 = vmatpush1.xpose.msra.mxu0 0.0
    %2236 = vmatprep.subr.mxu0 0.0
    %2237 = vmatpush1.xpose.msra.mxu0 0.0
    %2238 = vmatprep.subr.mxu0 0.0
    %2239 = vmatpush1.xpose.msra.mxu0 0.0
    %2240 = vmatprep.subr.mxu0 0.0
    %2241 = vmatpush1.xpose.msra.mxu0 0.0
    %2242 = vmatprep.subr.mxu0 0.0
    %2243 = vmatpush1.xpose.msra.mxu0 0.0
    %2244 = vmatprep.subr.mxu0 0.0
    %2245 = vmatpush1.xpose.msra.mxu0 0.0
    %2246 = vmatprep.subr.mxu0 0.0
    %2247 = vmatpush1.xpose.msra.mxu0 0.0
    %2248 = vmatprep.subr.mxu0 0.0
    %2249 = vmatpush1.xpose.msra.mxu0 0.0
    %2250 = vmatprep.subr.mxu0 0.0
    %2251 = vmatpush1.xpose.msra.mxu0 0.0
    %2252 = vmatprep.subr.mxu0 0.0
    %2253 = vmatpush1.xpose.msra.mxu0 0.0
    %2254 = vmatprep.subr.mxu0 0.0
    %2255 = vmatpush1.xpose.msra.mxu0 0.0
    %2256 = vmatprep.subr.mxu0 0.0
    %2257 = vmatpush1.xpose.msra.mxu0 0.0
    %2258 = vmatprep.subr.mxu0 0.0
    %2259 = vmatpush1.xpose.msra.mxu0 0.0
    %2260 = vmatprep.subr.mxu0 0.0
    %2261 = vmatpush1.xpose.msra.mxu0 0.0
    %2262 = vmatprep.subr.mxu0 0.0
    %2263 = vmatpush1.xpose.msra.mxu0 0.0
    %2264 = vmatprep.subr.mxu0 0.0
    %2265 = vmatpush1.xpose.msra.mxu0 %v2232
    %2266 = vmatprep.subr.mxu0 0.0
    %2267 = vmatpush2.xpose.msra.mxu0 0.0
    %2268 = vmatprep.subr.mxu0 0.0
    %2269 = vmatpush2.xpose.msra.mxu0 0.0
    %2270 = vmatprep.subr.mxu0 0.0
    %2271 = vmatpush2.xpose.msra.mxu0 0.0
    %2272 = vmatprep.subr.mxu0 0.0
    %2273 = vmatpush2.xpose.msra.mxu0 0.0
    %2274 = vmatprep.subr.mxu0 0.0
    %2275 = vmatpush2.xpose.msra.mxu0 0.0
    %2276 = vmatprep.subr.mxu0 0.0
    %2277 = vmatpush2.xpose.msra.mxu0 0.0
    %2278 = vmatprep.subr.mxu0 0.0
    %2279 = vmatpush2.xpose.msra.mxu0 0.0
    %2280 = vmatprep.subr.mxu0 0.0
    %2281 = vmatpush2.xpose.msra.mxu0 0.0
    %2282 = vmatprep.subr.mxu0 0.0
    %2283 = vmatpush2.xpose.msra.mxu0 0.0
    %2284 = vmatprep.subr.mxu0 0.0
    %2285 = vmatpush2.xpose.msra.mxu0 0.0
    %2286 = vmatprep.subr.mxu0 0.0
    %2287 = vmatpush2.xpose.msra.mxu0 0.0
    %2288 = vmatprep.subr.mxu0 0.0
    %2289 = vmatpush2.xpose.msra.mxu0 0.0
    %2290 = vmatprep.subr.mxu0 0.0
    %2291 = vmatpush2.xpose.msra.mxu0 0.0
    %2292 = vmatprep.subr.mxu0 0.0
    %2293 = vmatpush2.xpose.msra.mxu0 0.0
    %2294 = vmatprep.subr.mxu0 0.0
    %2295 = vmatpush2.xpose.msra.mxu0 0.0
    %2296 = vmatprep.subr.mxu0 0.0
    %2297 = vmatpush2.xpose.msra.mxu0 0.0
    %2298 = vmatprep.mubr.f32.mxu0 0.0
    %2299 = vmatmul.mubr.f32.gmra.mxu0 %v2230
    %v2300 = vpop.f32.mrf.mxu0
    %v2301 = vadd.f32 0.0, %v2300
    %v2302 = vpop.f32.mrf.mxu0
    %2303 = vdwg.mxu0
    %2304 = vrot.lane.b32.xlu0 %v2141, 112
    %v2305 = vpop.permute.xlu0 %2304
    %2306 = vrot.lane.b32.xlu0 %v2141, 80
    %v2307 = vpop.permute.xlu0 %2306
    %v2308 = vsel %vm311, %v2305, 0
    %v2310 = vsel %vm311, %v2307, 0
    %2312 = vmatprep.subr.mxu0 0.0
    %2313 = vmatpush1.xpose.msra.mxu0 0.0
    %2314 = vmatprep.subr.mxu0 0.0
    %2315 = vmatpush1.xpose.msra.mxu0 0.0
    %2316 = vmatprep.subr.mxu0 0.0
    %2317 = vmatpush1.xpose.msra.mxu0 0.0
    %2318 = vmatprep.subr.mxu0 0.0
    %2319 = vmatpush1.xpose.msra.mxu0 0.0
    %2320 = vmatprep.subr.mxu0 0.0
    %2321 = vmatpush1.xpose.msra.mxu0 0.0
    %2322 = vmatprep.subr.mxu0 0.0
    %2323 = vmatpush1.xpose.msra.mxu0 0.0
    %2324 = vmatprep.subr.mxu0 0.0
    %2325 = vmatpush1.xpose.msra.mxu0 0.0
    %2326 = vmatprep.subr.mxu0 0.0
    %2327 = vmatpush1.xpose.msra.mxu0 0.0
    %2328 = vmatprep.subr.mxu0 0.0
    %2329 = vmatpush1.xpose.msra.mxu0 0.0
    %2330 = vmatprep.subr.mxu0 0.0
    %2331 = vmatpush1.xpose.msra.mxu0 0.0
    %2332 = vmatprep.subr.mxu0 0.0
    %2333 = vmatpush1.xpose.msra.mxu0 0.0
    %2334 = vmatprep.subr.mxu0 0.0
    %2335 = vmatpush1.xpose.msra.mxu0 0.0
    %2336 = vmatprep.subr.mxu0 0.0
    %2337 = vmatpush1.xpose.msra.mxu0 0.0
    %2338 = vmatprep.subr.mxu0 0.0
    %2339 = vmatpush1.xpose.msra.mxu0 0.0
    %2340 = vmatprep.subr.mxu0 0.0
    %2341 = vmatpush1.xpose.msra.mxu0 0.0
    %2342 = vmatprep.subr.mxu0 0.0
    %2343 = vmatpush1.xpose.msra.mxu0 %v2310
    %2344 = vmatprep.subr.mxu0 0.0
    %2345 = vmatpush2.xpose.msra.mxu0 0.0
    %2346 = vmatprep.subr.mxu0 0.0
    %2347 = vmatpush2.xpose.msra.mxu0 0.0
    %2348 = vmatprep.subr.mxu0 0.0
    %2349 = vmatpush2.xpose.msra.mxu0 0.0
    %2350 = vmatprep.subr.mxu0 0.0
    %2351 = vmatpush2.xpose.msra.mxu0 0.0
    %2352 = vmatprep.subr.mxu0 0.0
    %2353 = vmatpush2.xpose.msra.mxu0 0.0
    %2354 = vmatprep.subr.mxu0 0.0
    %2355 = vmatpush2.xpose.msra.mxu0 0.0
    %2356 = vmatprep.subr.mxu0 0.0
    %2357 = vmatpush2.xpose.msra.mxu0 0.0
    %2358 = vmatprep.subr.mxu0 0.0
    %2359 = vmatpush2.xpose.msra.mxu0 0.0
    %2360 = vmatprep.subr.mxu0 0.0
    %2361 = vmatpush2.xpose.msra.mxu0 0.0
    %2362 = vmatprep.subr.mxu0 0.0
    %2363 = vmatpush2.xpose.msra.mxu0 0.0
    %2364 = vmatprep.subr.mxu0 0.0
    %2365 = vmatpush2.xpose.msra.mxu0 0.0
    %2366 = vmatprep.subr.mxu0 0.0
    %2367 = vmatpush2.xpose.msra.mxu0 0.0
    %2368 = vmatprep.subr.mxu0 0.0
    %2369 = vmatpush2.xpose.msra.mxu0 0.0
    %2370 = vmatprep.subr.mxu0 0.0
    %2371 = vmatpush2.xpose.msra.mxu0 0.0
    %2372 = vmatprep.subr.mxu0 0.0
    %2373 = vmatpush2.xpose.msra.mxu0 0.0
    %2374 = vmatprep.subr.mxu0 0.0
    %2375 = vmatpush2.xpose.msra.mxu0 0.0
    %2376 = vmatprep.mubr.f32.mxu0 0.0
    %2377 = vmatmul.mubr.f32.gmra.mxu0 %v2308
    %v2378 = vpop.f32.mrf.mxu0
    %v2379 = vadd.f32 0.0, %v2378
    %v2380 = vpop.f32.mrf.mxu0
    %2381 = vdwg.mxu0
    %2382 = vrot.lane.b32.xlu0 %v2141, 104
    %v2383 = vpop.permute.xlu0 %2382
    %2384 = vrot.lane.b32.xlu0 %v2141, 72
    %v2385 = vpop.permute.xlu0 %2384
    %v2386 = vsel %vm311, %v2383, 0
    %v2388 = vsel %vm311, %v2385, 0
    %2390 = vmatprep.subr.mxu0 0.0
    %2391 = vmatpush1.xpose.msra.mxu0 0.0
    %2392 = vmatprep.subr.mxu0 0.0
    %2393 = vmatpush1.xpose.msra.mxu0 0.0
    %2394 = vmatprep.subr.mxu0 0.0
    %2395 = vmatpush1.xpose.msra.mxu0 0.0
    %2396 = vmatprep.subr.mxu0 0.0
    %2397 = vmatpush1.xpose.msra.mxu0 0.0
    %2398 = vmatprep.subr.mxu0 0.0
    %2399 = vmatpush1.xpose.msra.mxu0 0.0
    %2400 = vmatprep.subr.mxu0 0.0
    %2401 = vmatpush1.xpose.msra.mxu0 0.0
    %2402 = vmatprep.subr.mxu0 0.0
    %2403 = vmatpush1.xpose.msra.mxu0 0.0
    %2404 = vmatprep.subr.mxu0 0.0
    %2405 = vmatpush1.xpose.msra.mxu0 0.0
    %2406 = vmatprep.subr.mxu0 0.0
    %2407 = vmatpush1.xpose.msra.mxu0 0.0
    %2408 = vmatprep.subr.mxu0 0.0
    %2409 = vmatpush1.xpose.msra.mxu0 0.0
    %2410 = vmatprep.subr.mxu0 0.0
    %2411 = vmatpush1.xpose.msra.mxu0 0.0
    %2412 = vmatprep.subr.mxu0 0.0
    %2413 = vmatpush1.xpose.msra.mxu0 0.0
    %2414 = vmatprep.subr.mxu0 0.0
    %2415 = vmatpush1.xpose.msra.mxu0 0.0
    %2416 = vmatprep.subr.mxu0 0.0
    %2417 = vmatpush1.xpose.msra.mxu0 0.0
    %2418 = vmatprep.subr.mxu0 0.0
    %2419 = vmatpush1.xpose.msra.mxu0 0.0
    %2420 = vmatprep.subr.mxu0 0.0
    %2421 = vmatpush1.xpose.msra.mxu0 %v2388
    %2422 = vmatprep.subr.mxu0 0.0
    %2423 = vmatpush2.xpose.msra.mxu0 0.0
    %2424 = vmatprep.subr.mxu0 0.0
    %2425 = vmatpush2.xpose.msra.mxu0 0.0
    %2426 = vmatprep.subr.mxu0 0.0
    %2427 = vmatpush2.xpose.msra.mxu0 0.0
    %2428 = vmatprep.subr.mxu0 0.0
    %2429 = vmatpush2.xpose.msra.mxu0 0.0
    %2430 = vmatprep.subr.mxu0 0.0
    %2431 = vmatpush2.xpose.msra.mxu0 0.0
    %2432 = vmatprep.subr.mxu0 0.0
    %2433 = vmatpush2.xpose.msra.mxu0 0.0
    %2434 = vmatprep.subr.mxu0 0.0
    %2435 = vmatpush2.xpose.msra.mxu0 0.0
    %2436 = vmatprep.subr.mxu0 0.0
    %2437 = vmatpush2.xpose.msra.mxu0 0.0
    %2438 = vmatprep.subr.mxu0 0.0
    %2439 = vmatpush2.xpose.msra.mxu0 0.0
    %2440 = vmatprep.subr.mxu0 0.0
    %2441 = vmatpush2.xpose.msra.mxu0 0.0
    %2442 = vmatprep.subr.mxu0 0.0
    %2443 = vmatpush2.xpose.msra.mxu0 0.0
    %2444 = vmatprep.subr.mxu0 0.0
    %2445 = vmatpush2.xpose.msra.mxu0 0.0
    %2446 = vmatprep.subr.mxu0 0.0
    %2447 = vmatpush2.xpose.msra.mxu0 0.0
    %2448 = vmatprep.subr.mxu0 0.0
    %2449 = vmatpush2.xpose.msra.mxu0 0.0
    %2450 = vmatprep.subr.mxu0 0.0
    %2451 = vmatpush2.xpose.msra.mxu0 0.0
    %2452 = vmatprep.subr.mxu0 0.0
    %2453 = vmatpush2.xpose.msra.mxu0 0.0
    %2454 = vmatprep.mubr.f32.mxu0 0.0
    %2455 = vmatmul.mubr.f32.gmra.mxu0 %v2386
    %v2456 = vpop.f32.mrf.mxu0
    %v2457 = vadd.f32 0.0, %v2456
    %v2458 = vpop.f32.mrf.mxu0
    %2459 = vdwg.mxu0
    %2461 = vrot.lane.b32.xlu0 %v2301, 8
    %v2462 = vpop.permute.xlu0 %2461
    %2465 = vrot.lane.b32.xlu0 %v2379, 16
    %v2466 = vpop.permute.xlu0 %2465
    %2469 = vrot.lane.b32.xlu0 %v2457, 24
    %v2470 = vpop.permute.xlu0 %2469
    %v2472 = vsel %vm311, %v2223, %v2462
    %v2473 = vsel %vm133, %v2472, %v2466
    %v2474 = vsel %vm634, %v2473, %v2470
    %v2475 = vsel %vm226, %v2474, -inf
    %2476 = vmax.xlane.f32.xlu0 %v2475
    %v2477 = vpop.xlane.xlu0 %2476
    %v2478 = vsub.f32 %v2474, %v2477
    %v2479 = vmul.f32 %v2478, 1.442695
    %v2480 = vpow.pop %v2479
    %v2482 = vsel %vm226, %v2480, 0
    %2484 = vmatprep.subr.mxu0 0.0
    %2485 = vmatpush1.msra.mxu0 0.0
    %2486 = vmatprep.subr.mxu0 0.0
    %2487 = vmatpush1.msra.mxu0 0.0
    %2488 = vmatprep.subr.mxu0 0.0
    %2489 = vmatpush1.msra.mxu0 0.0
    %2490 = vmatprep.subr.mxu0 0.0
    %2491 = vmatpush1.msra.mxu0 0.0
    %2492 = vmatprep.subr.mxu0 0.0
    %2493 = vmatpush1.msra.mxu0 0.0
    %2494 = vmatprep.subr.mxu0 0.0
    %2495 = vmatpush1.msra.mxu0 0.0
    %2496 = vmatprep.subr.mxu0 0.0
    %2497 = vmatpush1.msra.mxu0 0.0
    %2498 = vmatprep.subr.mxu0 0.0
    %2499 = vmatpush1.msra.mxu0 0.0
    %2500 = vmatprep.subr.mxu0 0.0
    %2501 = vmatpush1.msra.mxu0 0.0
    %2502 = vmatprep.subr.mxu0 0.0
    %2503 = vmatpush1.msra.mxu0 0.0
    %2504 = vmatprep.subr.mxu0 0.0
    %2505 = vmatpush1.msra.mxu0 0.0
    %2506 = vmatprep.subr.mxu0 0.0
    %2507 = vmatpush1.msra.mxu0 0.0
    %2508 = vmatprep.subr.mxu0 0.0
    %2509 = vmatpush1.msra.mxu0 %v645
    %2510 = vmatprep.subr.mxu0 0.0
    %2511 = vmatpush1.msra.mxu0 %v644
    %2512 = vmatprep.subr.mxu0 0.0
    %2513 = vmatpush1.msra.mxu0 %v643
    %2514 = vmatprep.subr.mxu0 0.0
    %2515 = vmatpush1.msra.mxu0 %v642
    %2516 = vmatprep.subr.mxu0 0.0
    %2517 = vmatpush2.msra.mxu0 0.0
    %2518 = vmatprep.subr.mxu0 0.0
    %2519 = vmatpush2.msra.mxu0 0.0
    %2520 = vmatprep.subr.mxu0 0.0
    %2521 = vmatpush2.msra.mxu0 0.0
    %2522 = vmatprep.subr.mxu0 0.0
    %2523 = vmatpush2.msra.mxu0 0.0
    %2524 = vmatprep.subr.mxu0 0.0
    %2525 = vmatpush2.msra.mxu0 0.0
    %2526 = vmatprep.subr.mxu0 0.0
    %2527 = vmatpush2.msra.mxu0 0.0
    %2528 = vmatprep.subr.mxu0 0.0
    %2529 = vmatpush2.msra.mxu0 0.0
    %2530 = vmatprep.subr.mxu0 0.0
    %2531 = vmatpush2.msra.mxu0 0.0
    %2532 = vmatprep.subr.mxu0 0.0
    %2533 = vmatpush2.msra.mxu0 0.0
    %2534 = vmatprep.subr.mxu0 0.0
    %2535 = vmatpush2.msra.mxu0 0.0
    %2536 = vmatprep.subr.mxu0 0.0
    %2537 = vmatpush2.msra.mxu0 0.0
    %2538 = vmatprep.subr.mxu0 0.0
    %2539 = vmatpush2.msra.mxu0 0.0
    %2540 = vmatprep.subr.mxu0 0.0
    %2541 = vmatpush2.msra.mxu0 0.0
    %2542 = vmatprep.subr.mxu0 0.0
    %2543 = vmatpush2.msra.mxu0 0.0
    %2544 = vmatprep.subr.mxu0 0.0
    %2545 = vmatpush2.msra.mxu0 0.0
    %2546 = vmatprep.subr.mxu0 0.0
    %2547 = vmatpush2.msra.mxu0 0.0
    %2548 = vmatprep.mubr.f32.mxu0 0.0
    %2549 = vmatmul.mubr.f32.gmra.mxu0 %v2482
    %v2550 = vpop.f32.mrf.mxu0
    %v2551 = vadd.f32 0.0, %v2550
    %v2552 = vpop.f32.mrf.mxu0
    %2553 = vdwg.mxu0
    %v2554 = vrcp.pop %v2551
    %v2555 = vmul.f32 %v2480, %v2554
    %2556 = vrot.lane.b32.xlu0 %v2141, 64
    %v2557 = vpop.permute.xlu0 %2556
    %v2560 = vsel %vm311, %v2555, 0
    %2562 = vmatprep.subr.mxu0 0.0
    %2563 = vmatpush1.msra.mxu0 0.0
    %2564 = vmatprep.subr.mxu0 0.0
    %2565 = vmatpush1.msra.mxu0 0.0
    %2566 = vmatprep.subr.mxu0 0.0
    %2567 = vmatpush1.msra.mxu0 0.0
    %2568 = vmatprep.subr.mxu0 0.0
    %2569 = vmatpush1.msra.mxu0 0.0
    %2570 = vmatprep.subr.mxu0 0.0
    %2571 = vmatpush1.msra.mxu0 0.0
    %2572 = vmatprep.subr.mxu0 0.0
    %2573 = vmatpush1.msra.mxu0 0.0
    %2574 = vmatprep.subr.mxu0 0.0
    %2575 = vmatpush1.msra.mxu0 0.0
    %2576 = vmatprep.subr.mxu0 0.0
    %2577 = vmatpush1.msra.mxu0 0.0
    %2578 = vmatprep.subr.mxu0 0.0
    %2579 = vmatpush1.msra.mxu0 0.0
    %2580 = vmatprep.subr.mxu0 0.0
    %2581 = vmatpush1.msra.mxu0 0.0
    %2582 = vmatprep.subr.mxu0 0.0
    %2583 = vmatpush1.msra.mxu0 0.0
    %2584 = vmatprep.subr.mxu0 0.0
    %2585 = vmatpush1.msra.mxu0 0.0
    %2586 = vmatprep.subr.mxu0 0.0
    %2587 = vmatpush1.msra.mxu0 0.0
    %2588 = vmatprep.subr.mxu0 0.0
    %2589 = vmatpush1.msra.mxu0 0.0
    %2590 = vmatprep.subr.mxu0 0.0
    %2591 = vmatpush1.msra.mxu0 0.0
    %2592 = vmatprep.subr.mxu0 0.0
    %2593 = vmatpush1.msra.mxu0 %v2557
    %2594 = vmatprep.subr.mxu0 0.0
    %2595 = vmatpush2.msra.mxu0 0.0
    %2596 = vmatprep.subr.mxu0 0.0
    %2597 = vmatpush2.msra.mxu0 0.0
    %2598 = vmatprep.subr.mxu0 0.0
    %2599 = vmatpush2.msra.mxu0 0.0
    %2600 = vmatprep.subr.mxu0 0.0
    %2601 = vmatpush2.msra.mxu0 0.0
    %2602 = vmatprep.subr.mxu0 0.0
    %2603 = vmatpush2.msra.mxu0 0.0
    %2604 = vmatprep.subr.mxu0 0.0
    %2605 = vmatpush2.msra.mxu0 0.0
    %2606 = vmatprep.subr.mxu0 0.0
    %2607 = vmatpush2.msra.mxu0 0.0
    %2608 = vmatprep.subr.mxu0 0.0
    %2609 = vmatpush2.msra.mxu0 0.0
    %2610 = vmatprep.subr.mxu0 0.0
    %2611 = vmatpush2.msra.mxu0 0.0
    %2612 = vmatprep.subr.mxu0 0.0
    %2613 = vmatpush2.msra.mxu0 0.0
    %2614 = vmatprep.subr.mxu0 0.0
    %2615 = vmatpush2.msra.mxu0 0.0
    %2616 = vmatprep.subr.mxu0 0.0
    %2617 = vmatpush2.msra.mxu0 0.0
    %2618 = vmatprep.subr.mxu0 0.0
    %2619 = vmatpush2.msra.mxu0 0.0
    %2620 = vmatprep.subr.mxu0 0.0
    %2621 = vmatpush2.msra.mxu0 0.0
    %2622 = vmatprep.subr.mxu0 0.0
    %2623 = vmatpush2.msra.mxu0 0.0
    %2624 = vmatprep.subr.mxu0 0.0
    %2625 = vmatpush2.msra.mxu0 0.0
    %2626 = vmatprep.mubr.f32.mxu0 0.0
    %2627 = vmatmul.mubr.f32.gmra.mxu0 %v2560
    %v2628 = vpop.f32.mrf.mxu0
    %v2629 = vadd.f32 0.0, %v2628
    %v2630 = vpop.f32.mrf.mxu0
    %2631 = vdwg.mxu0
    %2632 = vrot.lane.b32.xlu0 %v2555, 120
    %v2633 = vpop.permute.xlu0 %2632
    %2634 = vrot.lane.b32.xlu0 %v2141, 56
    %v2635 = vpop.permute.xlu0 %2634
    %v2637 = vsel %vm311, %v2633, 0
    %2639 = vmatprep.subr.mxu0 0.0
    %2640 = vmatpush1.msra.mxu0 0.0
    %2641 = vmatprep.subr.mxu0 0.0
    %2642 = vmatpush1.msra.mxu0 0.0
    %2643 = vmatprep.subr.mxu0 0.0
    %2644 = vmatpush1.msra.mxu0 0.0
    %2645 = vmatprep.subr.mxu0 0.0
    %2646 = vmatpush1.msra.mxu0 0.0
    %2647 = vmatprep.subr.mxu0 0.0
    %2648 = vmatpush1.msra.mxu0 0.0
    %2649 = vmatprep.subr.mxu0 0.0
    %2650 = vmatpush1.msra.mxu0 0.0
    %2651 = vmatprep.subr.mxu0 0.0
    %2652 = vmatpush1.msra.mxu0 0.0
    %2653 = vmatprep.subr.mxu0 0.0
    %2654 = vmatpush1.msra.mxu0 0.0
    %2655 = vmatprep.subr.mxu0 0.0
    %2656 = vmatpush1.msra.mxu0 0.0
    %2657 = vmatprep.subr.mxu0 0.0
    %2658 = vmatpush1.msra.mxu0 0.0
    %2659 = vmatprep.subr.mxu0 0.0
    %2660 = vmatpush1.msra.mxu0 0.0
    %2661 = vmatprep.subr.mxu0 0.0
    %2662 = vmatpush1.msra.mxu0 0.0
    %2663 = vmatprep.subr.mxu0 0.0
    %2664 = vmatpush1.msra.mxu0 0.0
    %2665 = vmatprep.subr.mxu0 0.0
    %2666 = vmatpush1.msra.mxu0 0.0
    %2667 = vmatprep.subr.mxu0 0.0
    %2668 = vmatpush1.msra.mxu0 0.0
    %2669 = vmatprep.subr.mxu0 0.0
    %2670 = vmatpush1.msra.mxu0 %v2635
    %2671 = vmatprep.subr.mxu0 0.0
    %2672 = vmatpush2.msra.mxu0 0.0
    %2673 = vmatprep.subr.mxu0 0.0
    %2674 = vmatpush2.msra.mxu0 0.0
    %2675 = vmatprep.subr.mxu0 0.0
    %2676 = vmatpush2.msra.mxu0 0.0
    %2677 = vmatprep.subr.mxu0 0.0
    %2678 = vmatpush2.msra.mxu0 0.0
    %2679 = vmatprep.subr.mxu0 0.0
    %2680 = vmatpush2.msra.mxu0 0.0
    %2681 = vmatprep.subr.mxu0 0.0
    %2682 = vmatpush2.msra.mxu0 0.0
    %2683 = vmatprep.subr.mxu0 0.0
    %2684 = vmatpush2.msra.mxu0 0.0
    %2685 = vmatprep.subr.mxu0 0.0
    %2686 = vmatpush2.msra.mxu0 0.0
    %2687 = vmatprep.subr.mxu0 0.0
    %2688 = vmatpush2.msra.mxu0 0.0
    %2689 = vmatprep.subr.mxu0 0.0
    %2690 = vmatpush2.msra.mxu0 0.0
    %2691 = vmatprep.subr.mxu0 0.0
    %2692 = vmatpush2.msra.mxu0 0.0
    %2693 = vmatprep.subr.mxu0 0.0
    %2694 = vmatpush2.msra.mxu0 0.0
    %2695 = vmatprep.subr.mxu0 0.0
    %2696 = vmatpush2.msra.mxu0 0.0
    %2697 = vmatprep.subr.mxu0 0.0
    %2698 = vmatpush2.msra.mxu0 0.0
    %2699 = vmatprep.subr.mxu0 0.0
    %2700 = vmatpush2.msra.mxu0 0.0
    %2701 = vmatprep.subr.mxu0 0.0
    %2702 = vmatpush2.msra.mxu0 0.0
    %2703 = vmatprep.mubr.f32.mxu0 0.0
    %2704 = vmatmul.mubr.f32.gmra.mxu0 %v2637
    %v2705 = vpop.f32.mrf.mxu0
    %v2706 = vadd.f32 0.0, %v2705
    %v2707 = vpop.f32.mrf.mxu0
    %2708 = vdwg.mxu0
    %2709 = vrot.lane.b32.xlu0 %v2555, 112
    %v2710 = vpop.permute.xlu0 %2709
    %2711 = vrot.lane.b32.xlu0 %v2141, 48
    %v2712 = vpop.permute.xlu0 %2711
    %v2714 = vsel %vm311, %v2710, 0
    %2716 = vmatprep.subr.mxu0 0.0
    %2717 = vmatpush1.msra.mxu0 0.0
    %2718 = vmatprep.subr.mxu0 0.0
    %2719 = vmatpush1.msra.mxu0 0.0
    %2720 = vmatprep.subr.mxu0 0.0
    %2721 = vmatpush1.msra.mxu0 0.0
    %2722 = vmatprep.subr.mxu0 0.0
    %2723 = vmatpush1.msra.mxu0 0.0
    %2724 = vmatprep.subr.mxu0 0.0
    %2725 = vmatpush1.msra.mxu0 0.0
    %2726 = vmatprep.subr.mxu0 0.0
    %2727 = vmatpush1.msra.mxu0 0.0
    %2728 = vmatprep.subr.mxu0 0.0
    %2729 = vmatpush1.msra.mxu0 0.0
    %2730 = vmatprep.subr.mxu0 0.0
    %2731 = vmatpush1.msra.mxu0 0.0
    %2732 = vmatprep.subr.mxu0 0.0
    %2733 = vmatpush1.msra.mxu0 0.0
    %2734 = vmatprep.subr.mxu0 0.0
    %2735 = vmatpush1.msra.mxu0 0.0
    %2736 = vmatprep.subr.mxu0 0.0
    %2737 = vmatpush1.msra.mxu0 0.0
    %2738 = vmatprep.subr.mxu0 0.0
    %2739 = vmatpush1.msra.mxu0 0.0
    %2740 = vmatprep.subr.mxu0 0.0
    %2741 = vmatpush1.msra.mxu0 0.0
    %2742 = vmatprep.subr.mxu0 0.0
    %2743 = vmatpush1.msra.mxu0 0.0
    %2744 = vmatprep.subr.mxu0 0.0
    %2745 = vmatpush1.msra.mxu0 0.0
    %2746 = vmatprep.subr.mxu0 0.0
    %2747 = vmatpush1.msra.mxu0 %v2712
    %2748 = vmatprep.subr.mxu0 0.0
    %2749 = vmatpush2.msra.mxu0 0.0
    %2750 = vmatprep.subr.mxu0 0.0
    %2751 = vmatpush2.msra.mxu0 0.0
    %2752 = vmatprep.subr.mxu0 0.0
    %2753 = vmatpush2.msra.mxu0 0.0
    %2754 = vmatprep.subr.mxu0 0.0
    %2755 = vmatpush2.msra.mxu0 0.0
    %2756 = vmatprep.subr.mxu0 0.0
    %2757 = vmatpush2.msra.mxu0 0.0
    %2758 = vmatprep.subr.mxu0 0.0
    %2759 = vmatpush2.msra.mxu0 0.0
    %2760 = vmatprep.subr.mxu0 0.0
    %2761 = vmatpush2.msra.mxu0 0.0
    %2762 = vmatprep.subr.mxu0 0.0
    %2763 = vmatpush2.msra.mxu0 0.0
    %2764 = vmatprep.subr.mxu0 0.0
    %2765 = vmatpush2.msra.mxu0 0.0
    %2766 = vmatprep.subr.mxu0 0.0
    %2767 = vmatpush2.msra.mxu0 0.0
    %2768 = vmatprep.subr.mxu0 0.0
    %2769 = vmatpush2.msra.mxu0 0.0
    %2770 = vmatprep.subr.mxu0 0.0
    %2771 = vmatpush2.msra.mxu0 0.0
    %2772 = vmatprep.subr.mxu0 0.0
    %2773 = vmatpush2.msra.mxu0 0.0
    %2774 = vmatprep.subr.mxu0 0.0
    %2775 = vmatpush2.msra.mxu0 0.0
    %2776 = vmatprep.subr.mxu0 0.0
    %2777 = vmatpush2.msra.mxu0 0.0
    %2778 = vmatprep.subr.mxu0 0.0
    %2779 = vmatpush2.msra.mxu0 0.0
    %2780 = vmatprep.mubr.f32.mxu0 0.0
    %2781 = vmatmul.mubr.f32.gmra.mxu0 %v2714
    %v2782 = vpop.f32.mrf.mxu0
    %v2783 = vadd.f32 0.0, %v2782
    %v2784 = vpop.f32.mrf.mxu0
    %2785 = vdwg.mxu0
    %2786 = vrot.lane.b32.xlu0 %v2555, 104
    %v2787 = vpop.permute.xlu0 %2786
    %2788 = vrot.lane.b32.xlu0 %v2141, 40
    %v2789 = vpop.permute.xlu0 %2788
    %v2791 = vsel %vm311, %v2787, 0
    %2793 = vmatprep.subr.mxu0 0.0
    %2794 = vmatpush1.msra.mxu0 0.0
    %2795 = vmatprep.subr.mxu0 0.0
    %2796 = vmatpush1.msra.mxu0 0.0
    %2797 = vmatprep.subr.mxu0 0.0
    %2798 = vmatpush1.msra.mxu0 0.0
    %2799 = vmatprep.subr.mxu0 0.0
    %2800 = vmatpush1.msra.mxu0 0.0
    %2801 = vmatprep.subr.mxu0 0.0
    %2802 = vmatpush1.msra.mxu0 0.0
    %2803 = vmatprep.subr.mxu0 0.0
    %2804 = vmatpush1.msra.mxu0 0.0
    %2805 = vmatprep.subr.mxu0 0.0
    %2806 = vmatpush1.msra.mxu0 0.0
    %2807 = vmatprep.subr.mxu0 0.0
    %2808 = vmatpush1.msra.mxu0 0.0
    %2809 = vmatprep.subr.mxu0 0.0
    %2810 = vmatpush1.msra.mxu0 0.0
    %2811 = vmatprep.subr.mxu0 0.0
    %2812 = vmatpush1.msra.mxu0 0.0
    %2813 = vmatprep.subr.mxu0 0.0
    %2814 = vmatpush1.msra.mxu0 0.0
    %2815 = vmatprep.subr.mxu0 0.0
    %2816 = vmatpush1.msra.mxu0 0.0
    %2817 = vmatprep.subr.mxu0 0.0
    %2818 = vmatpush1.msra.mxu0 0.0
    %2819 = vmatprep.subr.mxu0 0.0
    %2820 = vmatpush1.msra.mxu0 0.0
    %2821 = vmatprep.subr.mxu0 0.0
    %2822 = vmatpush1.msra.mxu0 0.0
    %2823 = vmatprep.subr.mxu0 0.0
    %2824 = vmatpush1.msra.mxu0 %v2789
    %2825 = vmatprep.subr.mxu0 0.0
    %2826 = vmatpush2.msra.mxu0 0.0
    %2827 = vmatprep.subr.mxu0 0.0
    %2828 = vmatpush2.msra.mxu0 0.0
    %2829 = vmatprep.subr.mxu0 0.0
    %2830 = vmatpush2.msra.mxu0 0.0
    %2831 = vmatprep.subr.mxu0 0.0
    %2832 = vmatpush2.msra.mxu0 0.0
    %2833 = vmatprep.subr.mxu0 0.0
    %2834 = vmatpush2.msra.mxu0 0.0
    %2835 = vmatprep.subr.mxu0 0.0
    %2836 = vmatpush2.msra.mxu0 0.0
    %2837 = vmatprep.subr.mxu0 0.0
    %2838 = vmatpush2.msra.mxu0 0.0
    %2839 = vmatprep.subr.mxu0 0.0
    %2840 = vmatpush2.msra.mxu0 0.0
    %2841 = vmatprep.subr.mxu0 0.0
    %2842 = vmatpush2.msra.mxu0 0.0
    %2843 = vmatprep.subr.mxu0 0.0
    %2844 = vmatpush2.msra.mxu0 0.0
    %2845 = vmatprep.subr.mxu0 0.0
    %2846 = vmatpush2.msra.mxu0 0.0
    %2847 = vmatprep.subr.mxu0 0.0
    %2848 = vmatpush2.msra.mxu0 0.0
    %2849 = vmatprep.subr.mxu0 0.0
    %2850 = vmatpush2.msra.mxu0 0.0
    %2851 = vmatprep.subr.mxu0 0.0
    %2852 = vmatpush2.msra.mxu0 0.0
    %2853 = vmatprep.subr.mxu0 0.0
    %2854 = vmatpush2.msra.mxu0 0.0
    %2855 = vmatprep.subr.mxu0 0.0
    %2856 = vmatpush2.msra.mxu0 0.0
    %2857 = vmatprep.mubr.f32.mxu0 0.0
    %2858 = vmatmul.mubr.f32.gmra.mxu0 %v2791
    %v2859 = vpop.f32.mrf.mxu0
    %v2860 = vadd.f32 0.0, %v2859
    %v2861 = vpop.f32.mrf.mxu0
    %2862 = vdwg.mxu0
    %2864 = vrot.lane.b32.xlu0 %v2706, 8
    %v2865 = vpop.permute.xlu0 %2864
    %2868 = vrot.lane.b32.xlu0 %v2783, 16
    %v2869 = vpop.permute.xlu0 %2868
    %2872 = vrot.lane.b32.xlu0 %v2860, 24
    %v2873 = vpop.permute.xlu0 %2872
    %v2875 = vsel %vm311, %v2629, %v2865
    %v2876 = vsel %vm133, %v2875, %v2869
    %v2877 = vsel %vm634, %v2876, %v2873
    %2879 = vrot.lane.b32.xlu0 %v2146, 96
    %v2880 = vpop.permute.xlu0 %2879
    %v2881 = vsel %vm311, %v2146, 0
    %v2883 = vsel %vm311, %v2880, 0
    %2885 = vmatprep.subr.mxu0 0.0
    %2886 = vmatpush1.xpose.msra.mxu0 0.0
    %2887 = vmatprep.subr.mxu0 0.0
    %2888 = vmatpush1.xpose.msra.mxu0 0.0
    %2889 = vmatprep.subr.mxu0 0.0
    %2890 = vmatpush1.xpose.msra.mxu0 0.0
    %2891 = vmatprep.subr.mxu0 0.0
    %2892 = vmatpush1.xpose.msra.mxu0 0.0
    %2893 = vmatprep.subr.mxu0 0.0
    %2894 = vmatpush1.xpose.msra.mxu0 0.0
    %2895 = vmatprep.subr.mxu0 0.0
    %2896 = vmatpush1.xpose.msra.mxu0 0.0
    %2897 = vmatprep.subr.mxu0 0.0
    %2898 = vmatpush1.xpose.msra.mxu0 0.0
    %2899 = vmatprep.subr.mxu0 0.0
    %2900 = vmatpush1.xpose.msra.mxu0 0.0
    %2901 = vmatprep.subr.mxu0 0.0
    %2902 = vmatpush1.xpose.msra.mxu0 0.0
    %2903 = vmatprep.subr.mxu0 0.0
    %2904 = vmatpush1.xpose.msra.mxu0 0.0
    %2905 = vmatprep.subr.mxu0 0.0
    %2906 = vmatpush1.xpose.msra.mxu0 0.0
    %2907 = vmatprep.subr.mxu0 0.0
    %2908 = vmatpush1.xpose.msra.mxu0 0.0
    %2909 = vmatprep.subr.mxu0 0.0
    %2910 = vmatpush1.xpose.msra.mxu0 0.0
    %2911 = vmatprep.subr.mxu0 0.0
    %2912 = vmatpush1.xpose.msra.mxu0 0.0
    %2913 = vmatprep.subr.mxu0 0.0
    %2914 = vmatpush1.xpose.msra.mxu0 0.0
    %2915 = vmatprep.subr.mxu0 0.0
    %2916 = vmatpush1.xpose.msra.mxu0 %v2883
    %2917 = vmatprep.subr.mxu0 0.0
    %2918 = vmatpush2.xpose.msra.mxu0 0.0
    %2919 = vmatprep.subr.mxu0 0.0
    %2920 = vmatpush2.xpose.msra.mxu0 0.0
    %2921 = vmatprep.subr.mxu0 0.0
    %2922 = vmatpush2.xpose.msra.mxu0 0.0
    %2923 = vmatprep.subr.mxu0 0.0
    %2924 = vmatpush2.xpose.msra.mxu0 0.0
    %2925 = vmatprep.subr.mxu0 0.0
    %2926 = vmatpush2.xpose.msra.mxu0 0.0
    %2927 = vmatprep.subr.mxu0 0.0
    %2928 = vmatpush2.xpose.msra.mxu0 0.0
    %2929 = vmatprep.subr.mxu0 0.0
    %2930 = vmatpush2.xpose.msra.mxu0 0.0
    %2931 = vmatprep.subr.mxu0 0.0
    %2932 = vmatpush2.xpose.msra.mxu0 0.0
    %2933 = vmatprep.subr.mxu0 0.0
    %2934 = vmatpush2.xpose.msra.mxu0 0.0
    %2935 = vmatprep.subr.mxu0 0.0
    %2936 = vmatpush2.xpose.msra.mxu0 0.0
    %2937 = vmatprep.subr.mxu0 0.0
    %2938 = vmatpush2.xpose.msra.mxu0 0.0
    %2939 = vmatprep.subr.mxu0 0.0
    %2940 = vmatpush2.xpose.msra.mxu0 0.0
    %2941 = vmatprep.subr.mxu0 0.0
    %2942 = vmatpush2.xpose.msra.mxu0 0.0
    %2943 = vmatprep.subr.mxu0 0.0
    %2944 = vmatpush2.xpose.msra.mxu0 0.0
    %2945 = vmatprep.subr.mxu0 0.0
    %2946 = vmatpush2.xpose.msra.mxu0 0.0
    %2947 = vmatprep.subr.mxu0 0.0
    %2948 = vmatpush2.xpose.msra.mxu0 0.0
    %2949 = vmatprep.mubr.f32.mxu0 0.0
    %2950 = vmatmul.mubr.f32.gmra.mxu0 %v2881
    %v2951 = vpop.f32.mrf.mxu0
    %v2952 = vadd.f32 0.0, %v2951
    %v2953 = vpop.f32.mrf.mxu0
    %2954 = vdwg.mxu0
    %2955 = vrot.lane.b32.xlu0 %v2146, 120
    %v2956 = vpop.permute.xlu0 %2955
    %2957 = vrot.lane.b32.xlu0 %v2146, 88
    %v2958 = vpop.permute.xlu0 %2957
    %v2959 = vsel %vm311, %v2956, 0
    %v2961 = vsel %vm311, %v2958, 0
    %2963 = vmatprep.subr.mxu0 0.0
    %2964 = vmatpush1.xpose.msra.mxu0 0.0
    %2965 = vmatprep.subr.mxu0 0.0
    %2966 = vmatpush1.xpose.msra.mxu0 0.0
    %2967 = vmatprep.subr.mxu0 0.0
    %2968 = vmatpush1.xpose.msra.mxu0 0.0
    %2969 = vmatprep.subr.mxu0 0.0
    %2970 = vmatpush1.xpose.msra.mxu0 0.0
    %2971 = vmatprep.subr.mxu0 0.0
    %2972 = vmatpush1.xpose.msra.mxu0 0.0
    %2973 = vmatprep.subr.mxu0 0.0
    %2974 = vmatpush1.xpose.msra.mxu0 0.0
    %2975 = vmatprep.subr.mxu0 0.0
    %2976 = vmatpush1.xpose.msra.mxu0 0.0
    %2977 = vmatprep.subr.mxu0 0.0
    %2978 = vmatpush1.xpose.msra.mxu0 0.0
    %2979 = vmatprep.subr.mxu0 0.0
    %2980 = vmatpush1.xpose.msra.mxu0 0.0
    %2981 = vmatprep.subr.mxu0 0.0
    %2982 = vmatpush1.xpose.msra.mxu0 0.0
    %2983 = vmatprep.subr.mxu0 0.0
    %2984 = vmatpush1.xpose.msra.mxu0 0.0
    %2985 = vmatprep.subr.mxu0 0.0
    %2986 = vmatpush1.xpose.msra.mxu0 0.0
    %2987 = vmatprep.subr.mxu0 0.0
    %2988 = vmatpush1.xpose.msra.mxu0 0.0
    %2989 = vmatprep.subr.mxu0 0.0
    %2990 = vmatpush1.xpose.msra.mxu0 0.0
    %2991 = vmatprep.subr.mxu0 0.0
    %2992 = vmatpush1.xpose.msra.mxu0 0.0
    %2993 = vmatprep.subr.mxu0 0.0
    %2994 = vmatpush1.xpose.msra.mxu0 %v2961
    %2995 = vmatprep.subr.mxu0 0.0
    %2996 = vmatpush2.xpose.msra.mxu0 0.0
    %2997 = vmatprep.subr.mxu0 0.0
    %2998 = vmatpush2.xpose.msra.mxu0 0.0
    %2999 = vmatprep.subr.mxu0 0.0
    %3000 = vmatpush2.xpose.msra.mxu0 0.0
    %3001 = vmatprep.subr.mxu0 0.0
    %3002 = vmatpush2.xpose.msra.mxu0 0.0
    %3003 = vmatprep.subr.mxu0 0.0
    %3004 = vmatpush2.xpose.msra.mxu0 0.0
    %3005 = vmatprep.subr.mxu0 0.0
    %3006 = vmatpush2.xpose.msra.mxu0 0.0
    %3007 = vmatprep.subr.mxu0 0.0
    %3008 = vmatpush2.xpose.msra.mxu0 0.0
    %3009 = vmatprep.subr.mxu0 0.0
    %3010 = vmatpush2.xpose.msra.mxu0 0.0
    %3011 = vmatprep.subr.mxu0 0.0
    %3012 = vmatpush2.xpose.msra.mxu0 0.0
    %3013 = vmatprep.subr.mxu0 0.0
    %3014 = vmatpush2.xpose.msra.mxu0 0.0
    %3015 = vmatprep.subr.mxu0 0.0
    %3016 = vmatpush2.xpose.msra.mxu0 0.0
    %3017 = vmatprep.subr.mxu0 0.0
    %3018 = vmatpush2.xpose.msra.mxu0 0.0
    %3019 = vmatprep.subr.mxu0 0.0
    %3020 = vmatpush2.xpose.msra.mxu0 0.0
    %3021 = vmatprep.subr.mxu0 0.0
    %3022 = vmatpush2.xpose.msra.mxu0 0.0
    %3023 = vmatprep.subr.mxu0 0.0
    %3024 = vmatpush2.xpose.msra.mxu0 0.0
    %3025 = vmatprep.subr.mxu0 0.0
    %3026 = vmatpush2.xpose.msra.mxu0 0.0
    %3027 = vmatprep.mubr.f32.mxu0 0.0
    %3028 = vmatmul.mubr.f32.gmra.mxu0 %v2959
    %v3029 = vpop.f32.mrf.mxu0
    %v3030 = vadd.f32 0.0, %v3029
    %v3031 = vpop.f32.mrf.mxu0
    %3032 = vdwg.mxu0
    %3033 = vrot.lane.b32.xlu0 %v2146, 112
    %v3034 = vpop.permute.xlu0 %3033
    %3035 = vrot.lane.b32.xlu0 %v2146, 80
    %v3036 = vpop.permute.xlu0 %3035
    %v3037 = vsel %vm311, %v3034, 0
    %v3039 = vsel %vm311, %v3036, 0
    %3041 = vmatprep.subr.mxu0 0.0
    %3042 = vmatpush1.xpose.msra.mxu0 0.0
    %3043 = vmatprep.subr.mxu0 0.0
    %3044 = vmatpush1.xpose.msra.mxu0 0.0
    %3045 = vmatprep.subr.mxu0 0.0
    %3046 = vmatpush1.xpose.msra.mxu0 0.0
    %3047 = vmatprep.subr.mxu0 0.0
    %3048 = vmatpush1.xpose.msra.mxu0 0.0
    %3049 = vmatprep.subr.mxu0 0.0
    %3050 = vmatpush1.xpose.msra.mxu0 0.0
    %3051 = vmatprep.subr.mxu0 0.0
    %3052 = vmatpush1.xpose.msra.mxu0 0.0
    %3053 = vmatprep.subr.mxu0 0.0
    %3054 = vmatpush1.xpose.msra.mxu0 0.0
    %3055 = vmatprep.subr.mxu0 0.0
    %3056 = vmatpush1.xpose.msra.mxu0 0.0
    %3057 = vmatprep.subr.mxu0 0.0
    %3058 = vmatpush1.xpose.msra.mxu0 0.0
    %3059 = vmatprep.subr.mxu0 0.0
    %3060 = vmatpush1.xpose.msra.mxu0 0.0
    %3061 = vmatprep.subr.mxu0 0.0
    %3062 = vmatpush1.xpose.msra.mxu0 0.0
    %3063 = vmatprep.subr.mxu0 0.0
    %3064 = vmatpush1.xpose.msra.mxu0 0.0
    %3065 = vmatprep.subr.mxu0 0.0
    %3066 = vmatpush1.xpose.msra.mxu0 0.0
    %3067 = vmatprep.subr.mxu0 0.0
    %3068 = vmatpush1.xpose.msra.mxu0 0.0
    %3069 = vmatprep.subr.mxu0 0.0
    %3070 = vmatpush1.xpose.msra.mxu0 0.0
    %3071 = vmatprep.subr.mxu0 0.0
    %3072 = vmatpush1.xpose.msra.mxu0 %v3039
    %3073 = vmatprep.subr.mxu0 0.0
    %3074 = vmatpush2.xpose.msra.mxu0 0.0
    %3075 = vmatprep.subr.mxu0 0.0
    %3076 = vmatpush2.xpose.msra.mxu0 0.0
    %3077 = vmatprep.subr.mxu0 0.0
    %3078 = vmatpush2.xpose.msra.mxu0 0.0
    %3079 = vmatprep.subr.mxu0 0.0
    %3080 = vmatpush2.xpose.msra.mxu0 0.0
    %3081 = vmatprep.subr.mxu0 0.0
    %3082 = vmatpush2.xpose.msra.mxu0 0.0
    %3083 = vmatprep.subr.mxu0 0.0
    %3084 = vmatpush2.xpose.msra.mxu0 0.0
    %3085 = vmatprep.subr.mxu0 0.0
    %3086 = vmatpush2.xpose.msra.mxu0 0.0
    %3087 = vmatprep.subr.mxu0 0.0
    %3088 = vmatpush2.xpose.msra.mxu0 0.0
    %3089 = vmatprep.subr.mxu0 0.0
    %3090 = vmatpush2.xpose.msra.mxu0 0.0
    %3091 = vmatprep.subr.mxu0 0.0
    %3092 = vmatpush2.xpose.msra.mxu0 0.0
    %3093 = vmatprep.subr.mxu0 0.0
    %3094 = vmatpush2.xpose.msra.mxu0 0.0
    %3095 = vmatprep.subr.mxu0 0.0
    %3096 = vmatpush2.xpose.msra.mxu0 0.0
    %3097 = vmatprep.subr.mxu0 0.0
    %3098 = vmatpush2.xpose.msra.mxu0 0.0
    %3099 = vmatprep.subr.mxu0 0.0
    %3100 = vmatpush2.xpose.msra.mxu0 0.0
    %3101 = vmatprep.subr.mxu0 0.0
    %3102 = vmatpush2.xpose.msra.mxu0 0.0
    %3103 = vmatprep.subr.mxu0 0.0
    %3104 = vmatpush2.xpose.msra.mxu0 0.0
    %3105 = vmatprep.mubr.f32.mxu0 0.0
    %3106 = vmatmul.mubr.f32.gmra.mxu0 %v3037
    %v3107 = vpop.f32.mrf.mxu0
    %v3108 = vadd.f32 0.0, %v3107
    %v3109 = vpop.f32.mrf.mxu0
    %3110 = vdwg.mxu0
    %3111 = vrot.lane.b32.xlu0 %v2146, 104
    %v3112 = vpop.permute.xlu0 %3111
    %3113 = vrot.lane.b32.xlu0 %v2146, 72
    %v3114 = vpop.permute.xlu0 %3113
    %v3115 = vsel %vm311, %v3112, 0
    %v3117 = vsel %vm311, %v3114, 0
    %3119 = vmatprep.subr.mxu0 0.0
    %3120 = vmatpush1.xpose.msra.mxu0 0.0
    %3121 = vmatprep.subr.mxu0 0.0
    %3122 = vmatpush1.xpose.msra.mxu0 0.0
    %3123 = vmatprep.subr.mxu0 0.0
    %3124 = vmatpush1.xpose.msra.mxu0 0.0
    %3125 = vmatprep.subr.mxu0 0.0
    %3126 = vmatpush1.xpose.msra.mxu0 0.0
    %3127 = vmatprep.subr.mxu0 0.0
    %3128 = vmatpush1.xpose.msra.mxu0 0.0
    %3129 = vmatprep.subr.mxu0 0.0
    %3130 = vmatpush1.xpose.msra.mxu0 0.0
    %3131 = vmatprep.subr.mxu0 0.0
    %3132 = vmatpush1.xpose.msra.mxu0 0.0
    %3133 = vmatprep.subr.mxu0 0.0
    %3134 = vmatpush1.xpose.msra.mxu0 0.0
    %3135 = vmatprep.subr.mxu0 0.0
    %3136 = vmatpush1.xpose.msra.mxu0 0.0
    %3137 = vmatprep.subr.mxu0 0.0
    %3138 = vmatpush1.xpose.msra.mxu0 0.0
    %3139 = vmatprep.subr.mxu0 0.0
    %3140 = vmatpush1.xpose.msra.mxu0 0.0
    %3141 = vmatprep.subr.mxu0 0.0
    %3142 = vmatpush1.xpose.msra.mxu0 0.0
    %3143 = vmatprep.subr.mxu0 0.0
    %3144 = vmatpush1.xpose.msra.mxu0 0.0
    %3145 = vmatprep.subr.mxu0 0.0
    %3146 = vmatpush1.xpose.msra.mxu0 0.0
    %3147 = vmatprep.subr.mxu0 0.0
    %3148 = vmatpush1.xpose.msra.mxu0 0.0
    %3149 = vmatprep.subr.mxu0 0.0
    %3150 = vmatpush1.xpose.msra.mxu0 %v3117
    %3151 = vmatprep.subr.mxu0 0.0
    %3152 = vmatpush2.xpose.msra.mxu0 0.0
    %3153 = vmatprep.subr.mxu0 0.0
    %3154 = vmatpush2.xpose.msra.mxu0 0.0
    %3155 = vmatprep.subr.mxu0 0.0
    %3156 = vmatpush2.xpose.msra.mxu0 0.0
    %3157 = vmatprep.subr.mxu0 0.0
    %3158 = vmatpush2.xpose.msra.mxu0 0.0
    %3159 = vmatprep.subr.mxu0 0.0
    %3160 = vmatpush2.xpose.msra.mxu0 0.0
    %3161 = vmatprep.subr.mxu0 0.0
    %3162 = vmatpush2.xpose.msra.mxu0 0.0
    %3163 = vmatprep.subr.mxu0 0.0
    %3164 = vmatpush2.xpose.msra.mxu0 0.0
    %3165 = vmatprep.subr.mxu0 0.0
    %3166 = vmatpush2.xpose.msra.mxu0 0.0
    %3167 = vmatprep.subr.mxu0 0.0
    %3168 = vmatpush2.xpose.msra.mxu0 0.0
    %3169 = vmatprep.subr.mxu0 0.0
    %3170 = vmatpush2.xpose.msra.mxu0 0.0
    %3171 = vmatprep.subr.mxu0 0.0
    %3172 = vmatpush2.xpose.msra.mxu0 0.0
    %3173 = vmatprep.subr.mxu0 0.0
    %3174 = vmatpush2.xpose.msra.mxu0 0.0
    %3175 = vmatprep.subr.mxu0 0.0
    %3176 = vmatpush2.xpose.msra.mxu0 0.0
    %3177 = vmatprep.subr.mxu0 0.0
    %3178 = vmatpush2.xpose.msra.mxu0 0.0
    %3179 = vmatprep.subr.mxu0 0.0
    %3180 = vmatpush2.xpose.msra.mxu0 0.0
    %3181 = vmatprep.subr.mxu0 0.0
    %3182 = vmatpush2.xpose.msra.mxu0 0.0
    %3183 = vmatprep.mubr.f32.mxu0 0.0
    %3184 = vmatmul.mubr.f32.gmra.mxu0 %v3115
    %v3185 = vpop.f32.mrf.mxu0
    %v3186 = vadd.f32 0.0, %v3185
    %v3187 = vpop.f32.mrf.mxu0
    %3188 = vdwg.mxu0
    %3190 = vrot.lane.b32.xlu0 %v3030, 8
    %v3191 = vpop.permute.xlu0 %3190
    %3194 = vrot.lane.b32.xlu0 %v3108, 16
    %v3195 = vpop.permute.xlu0 %3194
    %3198 = vrot.lane.b32.xlu0 %v3186, 24
    %v3199 = vpop.permute.xlu0 %3198
    %v3201 = vsel %vm311, %v2952, %v3191
    %v3202 = vsel %vm133, %v3201, %v3195
    %v3203 = vsel %vm634, %v3202, %v3199
    %v3204 = vsel %vm226, %v3203, -inf
    %3205 = vmax.xlane.f32.xlu0 %v3204
    %v3206 = vpop.xlane.xlu0 %3205
    %v3207 = vsub.f32 %v3203, %v3206
    %v3208 = vmul.f32 %v3207, 1.442695
    %v3209 = vpow.pop %v3208
    %v3211 = vsel %vm226, %v3209, 0
    %3213 = vmatprep.subr.mxu0 0.0
    %3214 = vmatpush1.msra.mxu0 0.0
    %3215 = vmatprep.subr.mxu0 0.0
    %3216 = vmatpush1.msra.mxu0 0.0
    %3217 = vmatprep.subr.mxu0 0.0
    %3218 = vmatpush1.msra.mxu0 0.0
    %3219 = vmatprep.subr.mxu0 0.0
    %3220 = vmatpush1.msra.mxu0 0.0
    %3221 = vmatprep.subr.mxu0 0.0
    %3222 = vmatpush1.msra.mxu0 0.0
    %3223 = vmatprep.subr.mxu0 0.0
    %3224 = vmatpush1.msra.mxu0 0.0
    %3225 = vmatprep.subr.mxu0 0.0
    %3226 = vmatpush1.msra.mxu0 0.0
    %3227 = vmatprep.subr.mxu0 0.0
    %3228 = vmatpush1.msra.mxu0 0.0
    %3229 = vmatprep.subr.mxu0 0.0
    %3230 = vmatpush1.msra.mxu0 0.0
    %3231 = vmatprep.subr.mxu0 0.0
    %3232 = vmatpush1.msra.mxu0 0.0
    %3233 = vmatprep.subr.mxu0 0.0
    %3234 = vmatpush1.msra.mxu0 0.0
    %3235 = vmatprep.subr.mxu0 0.0
    %3236 = vmatpush1.msra.mxu0 0.0
    %3237 = vmatprep.subr.mxu0 0.0
    %3238 = vmatpush1.msra.mxu0 %v645
    %3239 = vmatprep.subr.mxu0 0.0
    %3240 = vmatpush1.msra.mxu0 %v644
    %3241 = vmatprep.subr.mxu0 0.0
    %3242 = vmatpush1.msra.mxu0 %v643
    %3243 = vmatprep.subr.mxu0 0.0
    %3244 = vmatpush1.msra.mxu0 %v642
    %3245 = vmatprep.subr.mxu0 0.0
    %3246 = vmatpush2.msra.mxu0 0.0
    %3247 = vmatprep.subr.mxu0 0.0
    %3248 = vmatpush2.msra.mxu0 0.0
    %3249 = vmatprep.subr.mxu0 0.0
    %3250 = vmatpush2.msra.mxu0 0.0
    %3251 = vmatprep.subr.mxu0 0.0
    %3252 = vmatpush2.msra.mxu0 0.0
    %3253 = vmatprep.subr.mxu0 0.0
    %3254 = vmatpush2.msra.mxu0 0.0
    %3255 = vmatprep.subr.mxu0 0.0
    %3256 = vmatpush2.msra.mxu0 0.0
    %3257 = vmatprep.subr.mxu0 0.0
    %3258 = vmatpush2.msra.mxu0 0.0
    %3259 = vmatprep.subr.mxu0 0.0
    %3260 = vmatpush2.msra.mxu0 0.0
    %3261 = vmatprep.subr.mxu0 0.0
    %3262 = vmatpush2.msra.mxu0 0.0
    %3263 = vmatprep.subr.mxu0 0.0
    %3264 = vmatpush2.msra.mxu0 0.0
    %3265 = vmatprep.subr.mxu0 0.0
    %3266 = vmatpush2.msra.mxu0 0.0
    %3267 = vmatprep.subr.mxu0 0.0
    %3268 = vmatpush2.msra.mxu0 0.0
    %3269 = vmatprep.subr.mxu0 0.0
    %3270 = vmatpush2.msra.mxu0 0.0
    %3271 = vmatprep.subr.mxu0 0.0
    %3272 = vmatpush2.msra.mxu0 0.0
    %3273 = vmatprep.subr.mxu0 0.0
    %3274 = vmatpush2.msra.mxu0 0.0
    %3275 = vmatprep.subr.mxu0 0.0
    %3276 = vmatpush2.msra.mxu0 0.0
    %3277 = vmatprep.mubr.f32.mxu0 0.0
    %3278 = vmatmul.mubr.f32.gmra.mxu0 %v3211
    %v3279 = vpop.f32.mrf.mxu0
    %v3280 = vadd.f32 0.0, %v3279
    %v3281 = vpop.f32.mrf.mxu0
    %3282 = vdwg.mxu0
    %v3283 = vrcp.pop %v3280
    %v3284 = vmul.f32 %v3209, %v3283
    %3285 = vrot.lane.b32.xlu0 %v2146, 64
    %v3286 = vpop.permute.xlu0 %3285
    %v3289 = vsel %vm311, %v3284, 0
    %3291 = vmatprep.subr.mxu0 0.0
    %3292 = vmatpush1.msra.mxu0 0.0
    %3293 = vmatprep.subr.mxu0 0.0
    %3294 = vmatpush1.msra.mxu0 0.0
    %3295 = vmatprep.subr.mxu0 0.0
    %3296 = vmatpush1.msra.mxu0 0.0
    %3297 = vmatprep.subr.mxu0 0.0
    %3298 = vmatpush1.msra.mxu0 0.0
    %3299 = vmatprep.subr.mxu0 0.0
    %3300 = vmatpush1.msra.mxu0 0.0
    %3301 = vmatprep.subr.mxu0 0.0
    %3302 = vmatpush1.msra.mxu0 0.0
    %3303 = vmatprep.subr.mxu0 0.0
    %3304 = vmatpush1.msra.mxu0 0.0
    %3305 = vmatprep.subr.mxu0 0.0
    %3306 = vmatpush1.msra.mxu0 0.0
    %3307 = vmatprep.subr.mxu0 0.0
    %3308 = vmatpush1.msra.mxu0 0.0
    %3309 = vmatprep.subr.mxu0 0.0
    %3310 = vmatpush1.msra.mxu0 0.0
    %3311 = vmatprep.subr.mxu0 0.0
    %3312 = vmatpush1.msra.mxu0 0.0
    %3313 = vmatprep.subr.mxu0 0.0
    %3314 = vmatpush1.msra.mxu0 0.0
    %3315 = vmatprep.subr.mxu0 0.0
    %3316 = vmatpush1.msra.mxu0 0.0
    %3317 = vmatprep.subr.mxu0 0.0
    %3318 = vmatpush1.msra.mxu0 0.0
    %3319 = vmatprep.subr.mxu0 0.0
    %3320 = vmatpush1.msra.mxu0 0.0
    %3321 = vmatprep.subr.mxu0 0.0
    %3322 = vmatpush1.msra.mxu0 %v3286
    %3323 = vmatprep.subr.mxu0 0.0
    %3324 = vmatpush2.msra.mxu0 0.0
    %3325 = vmatprep.subr.mxu0 0.0
    %3326 = vmatpush2.msra.mxu0 0.0
    %3327 = vmatprep.subr.mxu0 0.0
    %3328 = vmatpush2.msra.mxu0 0.0
    %3329 = vmatprep.subr.mxu0 0.0
    %3330 = vmatpush2.msra.mxu0 0.0
    %3331 = vmatprep.subr.mxu0 0.0
    %3332 = vmatpush2.msra.mxu0 0.0
    %3333 = vmatprep.subr.mxu0 0.0
    %3334 = vmatpush2.msra.mxu0 0.0
    %3335 = vmatprep.subr.mxu0 0.0
    %3336 = vmatpush2.msra.mxu0 0.0
    %3337 = vmatprep.subr.mxu0 0.0
    %3338 = vmatpush2.msra.mxu0 0.0
    %3339 = vmatprep.subr.mxu0 0.0
    %3340 = vmatpush2.msra.mxu0 0.0
    %3341 = vmatprep.subr.mxu0 0.0
    %3342 = vmatpush2.msra.mxu0 0.0
    %3343 = vmatprep.subr.mxu0 0.0
    %3344 = vmatpush2.msra.mxu0 0.0
    %3345 = vmatprep.subr.mxu0 0.0
    %3346 = vmatpush2.msra.mxu0 0.0
    %3347 = vmatprep.subr.mxu0 0.0
    %3348 = vmatpush2.msra.mxu0 0.0
    %3349 = vmatprep.subr.mxu0 0.0
    %3350 = vmatpush2.msra.mxu0 0.0
    %3351 = vmatprep.subr.mxu0 0.0
    %3352 = vmatpush2.msra.mxu0 0.0
    %3353 = vmatprep.subr.mxu0 0.0
    %3354 = vmatpush2.msra.mxu0 0.0
    %3355 = vmatprep.mubr.f32.mxu0 0.0
    %3356 = vmatmul.mubr.f32.gmra.mxu0 %v3289
    %v3357 = vpop.f32.mrf.mxu0
    %v3358 = vadd.f32 0.0, %v3357
    %v3359 = vpop.f32.mrf.mxu0
    %3360 = vdwg.mxu0
    %3361 = vrot.lane.b32.xlu0 %v3284, 120
    %v3362 = vpop.permute.xlu0 %3361
    %3363 = vrot.lane.b32.xlu0 %v2146, 56
    %v3364 = vpop.permute.xlu0 %3363
    %v3366 = vsel %vm311, %v3362, 0
    %3368 = vmatprep.subr.mxu0 0.0
    %3369 = vmatpush1.msra.mxu0 0.0
    %3370 = vmatprep.subr.mxu0 0.0
    %3371 = vmatpush1.msra.mxu0 0.0
    %3372 = vmatprep.subr.mxu0 0.0
    %3373 = vmatpush1.msra.mxu0 0.0
    %3374 = vmatprep.subr.mxu0 0.0
    %3375 = vmatpush1.msra.mxu0 0.0
    %3376 = vmatprep.subr.mxu0 0.0
    %3377 = vmatpush1.msra.mxu0 0.0
    %3378 = vmatprep.subr.mxu0 0.0
    %3379 = vmatpush1.msra.mxu0 0.0
    %3380 = vmatprep.subr.mxu0 0.0
    %3381 = vmatpush1.msra.mxu0 0.0
    %3382 = vmatprep.subr.mxu0 0.0
    %3383 = vmatpush1.msra.mxu0 0.0
    %3384 = vmatprep.subr.mxu0 0.0
    %3385 = vmatpush1.msra.mxu0 0.0
    %3386 = vmatprep.subr.mxu0 0.0
    %3387 = vmatpush1.msra.mxu0 0.0
    %3388 = vmatprep.subr.mxu0 0.0
    %3389 = vmatpush1.msra.mxu0 0.0
    %3390 = vmatprep.subr.mxu0 0.0
    %3391 = vmatpush1.msra.mxu0 0.0
    %3392 = vmatprep.subr.mxu0 0.0
    %3393 = vmatpush1.msra.mxu0 0.0
    %3394 = vmatprep.subr.mxu0 0.0
    %3395 = vmatpush1.msra.mxu0 0.0
    %3396 = vmatprep.subr.mxu0 0.0
    %3397 = vmatpush1.msra.mxu0 0.0
    %3398 = vmatprep.subr.mxu0 0.0
    %3399 = vmatpush1.msra.mxu0 %v3364
    %3400 = vmatprep.subr.mxu0 0.0
    %3401 = vmatpush2.msra.mxu0 0.0
    %3402 = vmatprep.subr.mxu0 0.0
    %3403 = vmatpush2.msra.mxu0 0.0
    %3404 = vmatprep.subr.mxu0 0.0
    %3405 = vmatpush2.msra.mxu0 0.0
    %3406 = vmatprep.subr.mxu0 0.0
    %3407 = vmatpush2.msra.mxu0 0.0
    %3408 = vmatprep.subr.mxu0 0.0
    %3409 = vmatpush2.msra.mxu0 0.0
    %3410 = vmatprep.subr.mxu0 0.0
    %3411 = vmatpush2.msra.mxu0 0.0
    %3412 = vmatprep.subr.mxu0 0.0
    %3413 = vmatpush2.msra.mxu0 0.0
    %3414 = vmatprep.subr.mxu0 0.0
    %3415 = vmatpush2.msra.mxu0 0.0
    %3416 = vmatprep.subr.mxu0 0.0
    %3417 = vmatpush2.msra.mxu0 0.0
    %3418 = vmatprep.subr.mxu0 0.0
    %3419 = vmatpush2.msra.mxu0 0.0
    %3420 = vmatprep.subr.mxu0 0.0
    %3421 = vmatpush2.msra.mxu0 0.0
    %3422 = vmatprep.subr.mxu0 0.0
    %3423 = vmatpush2.msra.mxu0 0.0
    %3424 = vmatprep.subr.mxu0 0.0
    %3425 = vmatpush2.msra.mxu0 0.0
    %3426 = vmatprep.subr.mxu0 0.0
    %3427 = vmatpush2.msra.mxu0 0.0
    %3428 = vmatprep.subr.mxu0 0.0
    %3429 = vmatpush2.msra.mxu0 0.0
    %3430 = vmatprep.subr.mxu0 0.0
    %3431 = vmatpush2.msra.mxu0 0.0
    %3432 = vmatprep.mubr.f32.mxu0 0.0
    %3433 = vmatmul.mubr.f32.gmra.mxu0 %v3366
    %v3434 = vpop.f32.mrf.mxu0
    %v3435 = vadd.f32 0.0, %v3434
    %v3436 = vpop.f32.mrf.mxu0
    %3437 = vdwg.mxu0
    %3438 = vrot.lane.b32.xlu0 %v3284, 112
    %v3439 = vpop.permute.xlu0 %3438
    %3440 = vrot.lane.b32.xlu0 %v2146, 48
    %v3441 = vpop.permute.xlu0 %3440
    %v3443 = vsel %vm311, %v3439, 0
    %3445 = vmatprep.subr.mxu0 0.0
    %3446 = vmatpush1.msra.mxu0 0.0
    %3447 = vmatprep.subr.mxu0 0.0
    %3448 = vmatpush1.msra.mxu0 0.0
    %3449 = vmatprep.subr.mxu0 0.0
    %3450 = vmatpush1.msra.mxu0 0.0
    %3451 = vmatprep.subr.mxu0 0.0
    %3452 = vmatpush1.msra.mxu0 0.0
    %3453 = vmatprep.subr.mxu0 0.0
    %3454 = vmatpush1.msra.mxu0 0.0
    %3455 = vmatprep.subr.mxu0 0.0
    %3456 = vmatpush1.msra.mxu0 0.0
    %3457 = vmatprep.subr.mxu0 0.0
    %3458 = vmatpush1.msra.mxu0 0.0
    %3459 = vmatprep.subr.mxu0 0.0
    %3460 = vmatpush1.msra.mxu0 0.0
    %3461 = vmatprep.subr.mxu0 0.0
    %3462 = vmatpush1.msra.mxu0 0.0
    %3463 = vmatprep.subr.mxu0 0.0
    %3464 = vmatpush1.msra.mxu0 0.0
    %3465 = vmatprep.subr.mxu0 0.0
    %3466 = vmatpush1.msra.mxu0 0.0
    %3467 = vmatprep.subr.mxu0 0.0
    %3468 = vmatpush1.msra.mxu0 0.0
    %3469 = vmatprep.subr.mxu0 0.0
    %3470 = vmatpush1.msra.mxu0 0.0
    %3471 = vmatprep.subr.mxu0 0.0
    %3472 = vmatpush1.msra.mxu0 0.0
    %3473 = vmatprep.subr.mxu0 0.0
    %3474 = vmatpush1.msra.mxu0 0.0
    %3475 = vmatprep.subr.mxu0 0.0
    %3476 = vmatpush1.msra.mxu0 %v3441
    %3477 = vmatprep.subr.mxu0 0.0
    %3478 = vmatpush2.msra.mxu0 0.0
    %3479 = vmatprep.subr.mxu0 0.0
    %3480 = vmatpush2.msra.mxu0 0.0
    %3481 = vmatprep.subr.mxu0 0.0
    %3482 = vmatpush2.msra.mxu0 0.0
    %3483 = vmatprep.subr.mxu0 0.0
    %3484 = vmatpush2.msra.mxu0 0.0
    %3485 = vmatprep.subr.mxu0 0.0
    %3486 = vmatpush2.msra.mxu0 0.0
    %3487 = vmatprep.subr.mxu0 0.0
    %3488 = vmatpush2.msra.mxu0 0.0
    %3489 = vmatprep.subr.mxu0 0.0
    %3490 = vmatpush2.msra.mxu0 0.0
    %3491 = vmatprep.subr.mxu0 0.0
    %3492 = vmatpush2.msra.mxu0 0.0
    %3493 = vmatprep.subr.mxu0 0.0
    %3494 = vmatpush2.msra.mxu0 0.0
    %3495 = vmatprep.subr.mxu0 0.0
    %3496 = vmatpush2.msra.mxu0 0.0
    %3497 = vmatprep.subr.mxu0 0.0
    %3498 = vmatpush2.msra.mxu0 0.0
    %3499 = vmatprep.subr.mxu0 0.0
    %3500 = vmatpush2.msra.mxu0 0.0
    %3501 = vmatprep.subr.mxu0 0.0
    %3502 = vmatpush2.msra.mxu0 0.0
    %3503 = vmatprep.subr.mxu0 0.0
    %3504 = vmatpush2.msra.mxu0 0.0
    %3505 = vmatprep.subr.mxu0 0.0
    %3506 = vmatpush2.msra.mxu0 0.0
    %3507 = vmatprep.subr.mxu0 0.0
    %3508 = vmatpush2.msra.mxu0 0.0
    %3509 = vmatprep.mubr.f32.mxu0 0.0
    %3510 = vmatmul.mubr.f32.gmra.mxu0 %v3443
    %v3511 = vpop.f32.mrf.mxu0
    %v3512 = vadd.f32 0.0, %v3511
    %v3513 = vpop.f32.mrf.mxu0
    %3514 = vdwg.mxu0
    %3515 = vrot.lane.b32.xlu0 %v3284, 104
    %v3516 = vpop.permute.xlu0 %3515
    %3517 = vrot.lane.b32.xlu0 %v2146, 40
    %v3518 = vpop.permute.xlu0 %3517
    %v3520 = vsel %vm311, %v3516, 0
    %3522 = vmatprep.subr.mxu0 0.0
    %3523 = vmatpush1.msra.mxu0 0.0
    %3524 = vmatprep.subr.mxu0 0.0
    %3525 = vmatpush1.msra.mxu0 0.0
    %3526 = vmatprep.subr.mxu0 0.0
    %3527 = vmatpush1.msra.mxu0 0.0
    %3528 = vmatprep.subr.mxu0 0.0
    %3529 = vmatpush1.msra.mxu0 0.0
    %3530 = vmatprep.subr.mxu0 0.0
    %3531 = vmatpush1.msra.mxu0 0.0
    %3532 = vmatprep.subr.mxu0 0.0
    %3533 = vmatpush1.msra.mxu0 0.0
    %3534 = vmatprep.subr.mxu0 0.0
    %3535 = vmatpush1.msra.mxu0 0.0
    %3536 = vmatprep.subr.mxu0 0.0
    %3537 = vmatpush1.msra.mxu0 0.0
    %3538 = vmatprep.subr.mxu0 0.0
    %3539 = vmatpush1.msra.mxu0 0.0
    %3540 = vmatprep.subr.mxu0 0.0
    %3541 = vmatpush1.msra.mxu0 0.0
    %3542 = vmatprep.subr.mxu0 0.0
    %3543 = vmatpush1.msra.mxu0 0.0
    %3544 = vmatprep.subr.mxu0 0.0
    %3545 = vmatpush1.msra.mxu0 0.0
    %3546 = vmatprep.subr.mxu0 0.0
    %3547 = vmatpush1.msra.mxu0 0.0
    %3548 = vmatprep.subr.mxu0 0.0
    %3549 = vmatpush1.msra.mxu0 0.0
    %3550 = vmatprep.subr.mxu0 0.0
    %3551 = vmatpush1.msra.mxu0 0.0
    %3552 = vmatprep.subr.mxu0 0.0
    %3553 = vmatpush1.msra.mxu0 %v3518
    %3554 = vmatprep.subr.mxu0 0.0
    %3555 = vmatpush2.msra.mxu0 0.0
    %3556 = vmatprep.subr.mxu0 0.0
    %3557 = vmatpush2.msra.mxu0 0.0
    %3558 = vmatprep.subr.mxu0 0.0
    %3559 = vmatpush2.msra.mxu0 0.0
    %3560 = vmatprep.subr.mxu0 0.0
    %3561 = vmatpush2.msra.mxu0 0.0
    %3562 = vmatprep.subr.mxu0 0.0
    %3563 = vmatpush2.msra.mxu0 0.0
    %3564 = vmatprep.subr.mxu0 0.0
    %3565 = vmatpush2.msra.mxu0 0.0
    %3566 = vmatprep.subr.mxu0 0.0
    %3567 = vmatpush2.msra.mxu0 0.0
    %3568 = vmatprep.subr.mxu0 0.0
    %3569 = vmatpush2.msra.mxu0 0.0
    %3570 = vmatprep.subr.mxu0 0.0
    %3571 = vmatpush2.msra.mxu0 0.0
    %3572 = vmatprep.subr.mxu0 0.0
    %3573 = vmatpush2.msra.mxu0 0.0
    %3574 = vmatprep.subr.mxu0 0.0
    %3575 = vmatpush2.msra.mxu0 0.0
    %3576 = vmatprep.subr.mxu0 0.0
    %3577 = vmatpush2.msra.mxu0 0.0
    %3578 = vmatprep.subr.mxu0 0.0
    %3579 = vmatpush2.msra.mxu0 0.0
    %3580 = vmatprep.subr.mxu0 0.0
    %3581 = vmatpush2.msra.mxu0 0.0
    %3582 = vmatprep.subr.mxu0 0.0
    %3583 = vmatpush2.msra.mxu0 0.0
    %3584 = vmatprep.subr.mxu0 0.0
    %3585 = vmatpush2.msra.mxu0 0.0
    %3586 = vmatprep.mubr.f32.mxu0 0.0
    %3587 = vmatmul.mubr.f32.gmra.mxu0 %v3520
    %v3588 = vpop.f32.mrf.mxu0
    %v3589 = vadd.f32 0.0, %v3588
    %v3590 = vpop.f32.mrf.mxu0
    %3591 = vdwg.mxu0
    %3593 = vrot.lane.b32.xlu0 %v3435, 8
    %v3594 = vpop.permute.xlu0 %3593
    %3597 = vrot.lane.b32.xlu0 %v3512, 16
    %v3598 = vpop.permute.xlu0 %3597
    %3601 = vrot.lane.b32.xlu0 %v3589, 24
    %v3602 = vpop.permute.xlu0 %3601
    %v3604 = vsel %vm311, %v3358, %v3594
    %v3605 = vsel %vm133, %v3604, %v3598
    %v3606 = vsel %vm634, %v3605, %v3602
    %s3607 = scalar_lea.vmem %s6, 32
    %v3608 = vld [vmem:[%s3607] sm:$0xff]
    %v3609 = vld [vmem:[%s3607 + $0x8] sm:$0xff]
    %v3610 = vld [vmem:[%s3607 + $0x10] sm:$0xff]
    %v3611 = vld [vmem:[%s3607 + $0x18] sm:$0xff]
    %s3612 = scalar_lea.vmem %s7, 1
    %v3613 = vld [vmem:[%s3612] sm:$0x1]
    %v3615 = vlaneseq
    %v3616 = vshrl.u32 %v3615, 7
    %v3617 = vsub.s32 0, %v3616
    %v3618 = vrot.slane %v3613, %v3617
    %v3621 = vsel %vm226, %v2877, 0
    %v3624 = vsel %vm226, %v3606, 0
    %3626 = vmatprep.subr.mxu0 0.0
    %3627 = vmatpush1.msra.mxu0 0.0
    %3628 = vmatprep.subr.mxu0 0.0
    %3629 = vmatpush1.msra.mxu0 0.0
    %3630 = vmatprep.subr.mxu0 0.0
    %3631 = vmatpush1.msra.mxu0 0.0
    %3632 = vmatprep.subr.mxu0 0.0
    %3633 = vmatpush1.msra.mxu0 0.0
    %3634 = vmatprep.subr.mxu0 0.0
    %3635 = vmatpush1.msra.mxu0 0.0
    %3636 = vmatprep.subr.mxu0 0.0
    %3637 = vmatpush1.msra.mxu0 0.0
    %3638 = vmatprep.subr.mxu0 0.0
    %3639 = vmatpush1.msra.mxu0 0.0
    %3640 = vmatprep.subr.mxu0 0.0
    %3641 = vmatpush1.msra.mxu0 0.0
    %3642 = vmatprep.subr.mxu0 0.0
    %3643 = vmatpush1.msra.mxu0 0.0
    %3644 = vmatprep.subr.mxu0 0.0
    %3645 = vmatpush1.msra.mxu0 0.0
    %3646 = vmatprep.subr.mxu0 0.0
    %3647 = vmatpush1.msra.mxu0 0.0
    %3648 = vmatprep.subr.mxu0 0.0
    %3649 = vmatpush1.msra.mxu0 0.0
    %3650 = vmatprep.subr.mxu0 0.0
    %3651 = vmatpush1.msra.mxu0 %v3611
    %3652 = vmatprep.subr.mxu0 0.0
    %3653 = vmatpush1.msra.mxu0 %v3610
    %3654 = vmatprep.subr.mxu0 0.0
    %3655 = vmatpush1.msra.mxu0 %v3609
    %3656 = vmatprep.subr.mxu0 0.0
    %3657 = vmatpush1.msra.mxu0 %v3608
    %3658 = vmatprep.subr.mxu0 0.0
    %3659 = vmatpush2.msra.mxu0 0.0
    %3660 = vmatprep.subr.mxu0 0.0
    %3661 = vmatpush2.msra.mxu0 0.0
    %3662 = vmatprep.subr.mxu0 0.0
    %3663 = vmatpush2.msra.mxu0 0.0
    %3664 = vmatprep.subr.mxu0 0.0
    %3665 = vmatpush2.msra.mxu0 0.0
    %3666 = vmatprep.subr.mxu0 0.0
    %3667 = vmatpush2.msra.mxu0 0.0
    %3668 = vmatprep.subr.mxu0 0.0
    %3669 = vmatpush2.msra.mxu0 0.0
    %3670 = vmatprep.subr.mxu0 0.0
    %3671 = vmatpush2.msra.mxu0 0.0
    %3672 = vmatprep.subr.mxu0 0.0
    %3673 = vmatpush2.msra.mxu0 0.0
    %3674 = vmatprep.subr.mxu0 0.0
    %3675 = vmatpush2.msra.mxu0 0.0
    %3676 = vmatprep.subr.mxu0 0.0
    %3677 = vmatpush2.msra.mxu0 0.0
    %3678 = vmatprep.subr.mxu0 0.0
    %3679 = vmatpush2.msra.mxu0 0.0
    %3680 = vmatprep.subr.mxu0 0.0
    %3681 = vmatpush2.msra.mxu0 0.0
    %3682 = vmatprep.subr.mxu0 0.0
    %3683 = vmatpush2.msra.mxu0 0.0
    %3684 = vmatprep.subr.mxu0 0.0
    %3685 = vmatpush2.msra.mxu0 0.0
    %3686 = vmatprep.subr.mxu0 0.0
    %3687 = vmatpush2.msra.mxu0 0.0
    %3688 = vmatprep.subr.mxu0 0.0
    %3689 = vmatpush2.msra.mxu0 0.0
    %3690 = vmatprep.mubr.f32.mxu0 0.0
    %3691 = vmatmul.mubr.f32.gmra.mxu0 %v3621
    %v3692 = vpop.f32.mrf.mxu0
    %v3693 = vadd.f32 %v3618, %v3692
    %v3694 = vpop.f32.mrf.mxu0
    %3695 = vmatprep.mubr.f32.mxu0 0.0
    %3696 = vmatmul.mubr.f32.gmra.mxu0 %v3624
    %v3697 = vpop.f32.mrf.mxu0
    %v3698 = vadd.f32 %v3618, %v3697
    %v3699 = vpop.f32.mrf.mxu0
    %3700 = vdwg.mxu0
    %s3701 = scalar_lea.vmem %s8, 32
    %v3702 = vld [vmem:[%s3701] sm:$0xff]
    %v3703 = vld [vmem:[%s3701 + $0x8] sm:$0xff]
    %v3704 = vld [vmem:[%s3701 + $0x10] sm:$0xff]
    %v3705 = vld [vmem:[%s3701 + $0x18] sm:$0xff]
    %s3706 = scalar_lea.vmem %s9, 1
    %v3707 = vld [vmem:[%s3706] sm:$0x1]
    %v3709 = vlaneseq
    %v3710 = vshrl.u32 %v3709, 7
    %v3711 = vsub.s32 0, %v3710
    %v3712 = vrot.slane %v3707, %v3711
    %v3715 = vsel %vm226, %v3693, 0
    %v3718 = vsel %vm226, %v3698, 0
    %3720 = vmatprep.subr.mxu0 0.0
    %3721 = vmatpush1.msra.mxu0 0.0
    %3722 = vmatprep.subr.mxu0 0.0
    %3723 = vmatpush1.msra.mxu0 0.0
    %3724 = vmatprep.subr.mxu0 0.0
    %3725 = vmatpush1.msra.mxu0 0.0
    %3726 = vmatprep.subr.mxu0 0.0
    %3727 = vmatpush1.msra.mxu0 0.0
    %3728 = vmatprep.subr.mxu0 0.0
    %3729 = vmatpush1.msra.mxu0 0.0
    %3730 = vmatprep.subr.mxu0 0.0
    %3731 = vmatpush1.msra.mxu0 0.0
    %3732 = vmatprep.subr.mxu0 0.0
    %3733 = vmatpush1.msra.mxu0 0.0
    %3734 = vmatprep.subr.mxu0 0.0
    %3735 = vmatpush1.msra.mxu0 0.0
    %3736 = vmatprep.subr.mxu0 0.0
    %3737 = vmatpush1.msra.mxu0 0.0
    %3738 = vmatprep.subr.mxu0 0.0
    %3739 = vmatpush1.msra.mxu0 0.0
    %3740 = vmatprep.subr.mxu0 0.0
    %3741 = vmatpush1.msra.mxu0 0.0
    %3742 = vmatprep.subr.mxu0 0.0
    %3743 = vmatpush1.msra.mxu0 0.0
    %3744 = vmatprep.subr.mxu0 0.0
    %3745 = vmatpush1.msra.mxu0 %v3705
    %3746 = vmatprep.subr.mxu0 0.0
    %3747 = vmatpush1.msra.mxu0 %v3704
    %3748 = vmatprep.subr.mxu0 0.0
    %3749 = vmatpush1.msra.mxu0 %v3703
    %3750 = vmatprep.subr.mxu0 0.0
    %3751 = vmatpush1.msra.mxu0 %v3702
    %3752 = vmatprep.subr.mxu0 0.0
    %3753 = vmatpush2.msra.mxu0 0.0
    %3754 = vmatprep.subr.mxu0 0.0
    %3755 = vmatpush2.msra.mxu0 0.0
    %3756 = vmatprep.subr.mxu0 0.0
    %3757 = vmatpush2.msra.mxu0 0.0
    %3758 = vmatprep.subr.mxu0 0.0
    %3759 = vmatpush2.msra.mxu0 0.0
    %3760 = vmatprep.subr.mxu0 0.0
    %3761 = vmatpush2.msra.mxu0 0.0
    %3762 = vmatprep.subr.mxu0 0.0
    %3763 = vmatpush2.msra.mxu0 0.0
    %3764 = vmatprep.subr.mxu0 0.0
    %3765 = vmatpush2.msra.mxu0 0.0
    %3766 = vmatprep.subr.mxu0 0.0
    %3767 = vmatpush2.msra.mxu0 0.0
    %3768 = vmatprep.subr.mxu0 0.0
    %3769 = vmatpush2.msra.mxu0 0.0
    %3770 = vmatprep.subr.mxu0 0.0
    %3771 = vmatpush2.msra.mxu0 0.0
    %3772 = vmatprep.subr.mxu0 0.0
    %3773 = vmatpush2.msra.mxu0 0.0
    %3774 = vmatprep.subr.mxu0 0.0
    %3775 = vmatpush2.msra.mxu0 0.0
    %3776 = vmatprep.subr.mxu0 0.0
    %3777 = vmatpush2.msra.mxu0 0.0
    %3778 = vmatprep.subr.mxu0 0.0
    %3779 = vmatpush2.msra.mxu0 0.0
    %3780 = vmatprep.subr.mxu0 0.0
    %3781 = vmatpush2.msra.mxu0 0.0
    %3782 = vmatprep.subr.mxu0 0.0
    %3783 = vmatpush2.msra.mxu0 0.0
    %3784 = vmatprep.mubr.f32.mxu0 0.0
    %3785 = vmatmul.mubr.f32.gmra.mxu0 %v3715
    %v3786 = vpop.f32.mrf.mxu0
    %v3787 = vadd.f32 %v3712, %v3786
    %v3788 = vpop.f32.mrf.mxu0
    %3789 = vmatprep.mubr.f32.mxu0 0.0
    %3790 = vmatmul.mubr.f32.gmra.mxu0 %v3718
    %v3791 = vpop.f32.mrf.mxu0
    %v3792 = vadd.f32 %v3712, %v3791
    %v3793 = vpop.f32.mrf.mxu0
    %3794 = vdwg.mxu0
    %v3795 = vmax.f32 %v3787, 0.0
    %v3796 = vmax.f32 %v3792, 0.0
    %s3797 = scalar_lea.vmem %s10, 64
    %v3798 = vld [vmem:[%s3797] sm:$0xff]
    %v3799 = vld [vmem:[%s3797 + $0x8] sm:$0xff]
    %v3800 = vld [vmem:[%s3797 + $0x10] sm:$0xff]
    %v3801 = vld [vmem:[%s3797 + $0x18] sm:$0xff]
    %v3802 = vld [vmem:[%s3797 + $0x20] sm:$0xff]
    %v3803 = vld [vmem:[%s3797 + $0x28] sm:$0xff]
    %v3804 = vld [vmem:[%s3797 + $0x30] sm:$0xff]
    %v3805 = vld [vmem:[%s3797 + $0x38] sm:$0xff]
    %s3806 = scalar_lea.vmem [#allocation7], 1
    %v3807 = vld [vmem:[%s3806] sm:$0x1]
    %v3809 = vlaneseq
    %v3810 = vshrl.u32 %v3809, 7
    %v3811 = vsub.s32 0, %v3810
    %v3812 = vrot.slane %v3807, %v3811
    %v3815 = vsel %vm1973, %v3795, 0
    %v3818 = vsel %vm1973, %v3796, 0
    %3820 = vmatprep.subr.mxu0 0.0
    %3821 = vmatpush1.msra.mxu0 0.0
    %3822 = vmatprep.subr.mxu0 0.0
    %3823 = vmatpush1.msra.mxu0 0.0
    %3824 = vmatprep.subr.mxu0 0.0
    %3825 = vmatpush1.msra.mxu0 0.0
    %3826 = vmatprep.subr.mxu0 0.0
    %3827 = vmatpush1.msra.mxu0 0.0
    %3828 = vmatprep.subr.mxu0 0.0
    %3829 = vmatpush1.msra.mxu0 0.0
    %3830 = vmatprep.subr.mxu0 0.0
    %3831 = vmatpush1.msra.mxu0 0.0
    %3832 = vmatprep.subr.mxu0 0.0
    %3833 = vmatpush1.msra.mxu0 0.0
    %3834 = vmatprep.subr.mxu0 0.0
    %3835 = vmatpush1.msra.mxu0 0.0
    %3836 = vmatprep.subr.mxu0 0.0
    %3837 = vmatpush1.msra.mxu0 %v3805
    %3838 = vmatprep.subr.mxu0 0.0
    %3839 = vmatpush1.msra.mxu0 %v3804
    %3840 = vmatprep.subr.mxu0 0.0
    %3841 = vmatpush1.msra.mxu0 %v3803
    %3842 = vmatprep.subr.mxu0 0.0
    %3843 = vmatpush1.msra.mxu0 %v3802
    %3844 = vmatprep.subr.mxu0 0.0
    %3845 = vmatpush1.msra.mxu0 %v3801
    %3846 = vmatprep.subr.mxu0 0.0
    %3847 = vmatpush1.msra.mxu0 %v3800
    %3848 = vmatprep.subr.mxu0 0.0
    %3849 = vmatpush1.msra.mxu0 %v3799
    %3850 = vmatprep.subr.mxu0 0.0
    %3851 = vmatpush1.msra.mxu0 %v3798
    %3852 = vmatprep.subr.mxu0 0.0
    %3853 = vmatpush2.msra.mxu0 0.0
    %3854 = vmatprep.subr.mxu0 0.0
    %3855 = vmatpush2.msra.mxu0 0.0
    %3856 = vmatprep.subr.mxu0 0.0
    %3857 = vmatpush2.msra.mxu0 0.0
    %3858 = vmatprep.subr.mxu0 0.0
    %3859 = vmatpush2.msra.mxu0 0.0
    %3860 = vmatprep.subr.mxu0 0.0
    %3861 = vmatpush2.msra.mxu0 0.0
    %3862 = vmatprep.subr.mxu0 0.0
    %3863 = vmatpush2.msra.mxu0 0.0
    %3864 = vmatprep.subr.mxu0 0.0
    %3865 = vmatpush2.msra.mxu0 0.0
    %3866 = vmatprep.subr.mxu0 0.0
    %3867 = vmatpush2.msra.mxu0 0.0
    %3868 = vmatprep.subr.mxu0 0.0
    %3869 = vmatpush2.msra.mxu0 0.0
    %3870 = vmatprep.subr.mxu0 0.0
    %3871 = vmatpush2.msra.mxu0 0.0
    %3872 = vmatprep.subr.mxu0 0.0
    %3873 = vmatpush2.msra.mxu0 0.0
    %3874 = vmatprep.subr.mxu0 0.0
    %3875 = vmatpush2.msra.mxu0 0.0
    %3876 = vmatprep.subr.mxu0 0.0
    %3877 = vmatpush2.msra.mxu0 0.0
    %3878 = vmatprep.subr.mxu0 0.0
    %3879 = vmatpush2.msra.mxu0 0.0
    %3880 = vmatprep.subr.mxu0 0.0
    %3881 = vmatpush2.msra.mxu0 0.0
    %3882 = vmatprep.subr.mxu0 0.0
    %3883 = vmatpush2.msra.mxu0 0.0
    %3884 = vmatprep.mubr.f32.mxu0 0.0
    %3885 = vmatmul.mubr.f32.gmra.mxu0 %v3815
    %v3886 = vpop.f32.mrf.mxu0
    %v3887 = vadd.f32 %v3812, %v3886
    %v3888 = vpop.f32.mrf.mxu0
    %3889 = vmatprep.mubr.f32.mxu0 0.0
    %3890 = vmatmul.mubr.f32.gmra.mxu0 %v3818
    %v3891 = vpop.f32.mrf.mxu0
    %v3892 = vadd.f32 %v3812, %v3891
    %v3893 = vpop.f32.mrf.mxu0
    %3894 = vdwg.mxu0
    %v3895 = vld [vmem:[%s12] sm:$0xff]
    %v3896 = vld [vmem:[%s12 + $0x8] sm:$0xff]
    %v3897 = vld [vmem:[%s12 + $0x10] sm:$0xff]
    %v3898 = vld [vmem:[%s12 + $0x18] sm:$0xff]
    %v3899 = vld [vmem:[#allocation9] sm:$0x1]
    %v3901 = vlaneseq
    %v3902 = vshrl.u32 %v3901, 7
    %v3903 = vsub.s32 0, %v3902
    %v3904 = vrot.slane %v3899, %v3903
    %v3907 = vsel %vm226, %v3887, 0
    %v3910 = vsel %vm226, %v3892, 0
    %3912 = vmatprep.subr.mxu0 0.0
    %3913 = vmatpush1.msra.mxu0 0.0
    %3914 = vmatprep.subr.mxu0 0.0
    %3915 = vmatpush1.msra.mxu0 0.0
    %3916 = vmatprep.subr.mxu0 0.0
    %3917 = vmatpush1.msra.mxu0 0.0
    %3918 = vmatprep.subr.mxu0 0.0
    %3919 = vmatpush1.msra.mxu0 0.0
    %3920 = vmatprep.subr.mxu0 0.0
    %3921 = vmatpush1.msra.mxu0 0.0
    %3922 = vmatprep.subr.mxu0 0.0
    %3923 = vmatpush1.msra.mxu0 0.0
    %3924 = vmatprep.subr.mxu0 0.0
    %3925 = vmatpush1.msra.mxu0 0.0
    %3926 = vmatprep.subr.mxu0 0.0
    %3927 = vmatpush1.msra.mxu0 0.0
    %3928 = vmatprep.subr.mxu0 0.0
    %3929 = vmatpush1.msra.mxu0 0.0
    %3930 = vmatprep.subr.mxu0 0.0
    %3931 = vmatpush1.msra.mxu0 0.0
    %3932 = vmatprep.subr.mxu0 0.0
    %3933 = vmatpush1.msra.mxu0 0.0
    %3934 = vmatprep.subr.mxu0 0.0
    %3935 = vmatpush1.msra.mxu0 0.0
    %3936 = vmatprep.subr.mxu0 0.0
    %3937 = vmatpush1.msra.mxu0 %v3898
    %3938 = vmatprep.subr.mxu0 0.0
    %3939 = vmatpush1.msra.mxu0 %v3897
    %3940 = vmatprep.subr.mxu0 0.0
    %3941 = vmatpush1.msra.mxu0 %v3896
    %3942 = vmatprep.subr.mxu0 0.0
    %3943 = vmatpush1.msra.mxu0 %v3895
    %3944 = vmatprep.subr.mxu0 0.0
    %3945 = vmatpush2.msra.mxu0 0.0
    %3946 = vmatprep.subr.mxu0 0.0
    %3947 = vmatpush2.msra.mxu0 0.0
    %3948 = vmatprep.subr.mxu0 0.0
    %3949 = vmatpush2.msra.mxu0 0.0
    %3950 = vmatprep.subr.mxu0 0.0
    %3951 = vmatpush2.msra.mxu0 0.0
    %3952 = vmatprep.subr.mxu0 0.0
    %3953 = vmatpush2.msra.mxu0 0.0
    %3954 = vmatprep.subr.mxu0 0.0
    %3955 = vmatpush2.msra.mxu0 0.0
    %3956 = vmatprep.subr.mxu0 0.0
    %3957 = vmatpush2.msra.mxu0 0.0
    %3958 = vmatprep.subr.mxu0 0.0
    %3959 = vmatpush2.msra.mxu0 0.0
    %3960 = vmatprep.subr.mxu0 0.0
    %3961 = vmatpush2.msra.mxu0 0.0
    %3962 = vmatprep.subr.mxu0 0.0
    %3963 = vmatpush2.msra.mxu0 0.0
    %3964 = vmatprep.subr.mxu0 0.0
    %3965 = vmatpush2.msra.mxu0 0.0
    %3966 = vmatprep.subr.mxu0 0.0
    %3967 = vmatpush2.msra.mxu0 0.0
    %3968 = vmatprep.subr.mxu0 0.0
    %3969 = vmatpush2.msra.mxu0 0.0
    %3970 = vmatprep.subr.mxu0 0.0
    %3971 = vmatpush2.msra.mxu0 0.0
    %3972 = vmatprep.subr.mxu0 0.0
    %3973 = vmatpush2.msra.mxu0 0.0
    %3974 = vmatprep.subr.mxu0 0.0
    %3975 = vmatpush2.msra.mxu0 0.0
    %3976 = vmatprep.mubr.f32.mxu0 0.0
    %3977 = vmatmul.mubr.f32.gmra.mxu0 %v3907
    %v3978 = vpop.f32.mrf.mxu0
    %v3979 = vadd.f32 %v3904, %v3978
    %v3980 = vpop.f32.mrf.mxu0
    %3981 = vmatprep.mubr.f32.mxu0 0.0
    %3982 = vmatmul.mubr.f32.gmra.mxu0 %v3910
    %v3983 = vpop.f32.mrf.mxu0
    %v3984 = vadd.f32 %v3904, %v3983
    %v3985 = vpop.f32.mrf.mxu0
    %3986 = vdwg.mxu0
    %3988 = vrot.lane.b32.xlu0 %v3984, 10
    %v3989 = vpop.permute.xlu0 %3988
    %vm3991 = vcmask 80896
    %v3992 = vsel %vm3991, %v3979, %v3989
    %vm3993 = vcmask 162816
    %3994 = vst.msk [vmem:[%s14] sm:$0xff] %vm3993, %v3992
    // Predicated region
    $region78: #{encoder_model_forward.1} parent=1 // pred_check
      _
    $region79: #{encoder_model_forward.1} parent=1 // pred_check_branch
      %3996 = sbr.rel (0) target = $region81
    $region80: #{encoder_model_forward.1} parent=1 // pred_region
      _
    $region81: #{encoder_model_forward.1} parent=1 // pred_fallthru
      _
    // Predicated region
    $region82: #{encoder_model_forward.1} parent=1 // pred_check
      _
    $region83: #{encoder_model_forward.1} parent=1 // pred_check_branch
      %3998 = sbr.rel (0) target = $region85
    $region84: #{encoder_model_forward.1} parent=1 // pred_region
      _
    $region85: #{encoder_model_forward.1} parent=1 // pred_fallthru
      _
    %3999 = vsyncpa [#allocation3], 1
    %4000 = vsyncpa [#allocation5], 1
    %4001 = vsyncpa [#allocation8], 1

</llo_original>
